<compile_context>
chip_gen: v7x
topology: tpu7x:2x2x1
jax: 0.10.0
libtpu: 0.0.40
codegen_flags: <defaults>
</compile_context>

<pallas_src>
import functools

import jax
import jax.numpy as jnp
from jax.experimental import pallas as pl
from jax.experimental.pallas import tpu as pltpu


# ----------------------------- fused Pallas kernel -----------------------------

def _gcn_channel_kernel(xph_ref, wconv_ref, shift_ref, eye_ref, wgcn_ref,
                        interp_ref, o_ref, pmat_sc, pad_sc, *, h1, w1):
    # xph_ref   : (1, 4*c, hp, wp)  phase-split zero-padded input (phase = (r%2)*2 + (s%2))
    # wconv_ref : (c, 9*c)          conv weight * BN scale, columns ordered tap*c + i
    # shift_ref : (c, 1)            folded conv-bias + BN shift
    # eye_ref   : (n, n)            identity (hoisted out of the kernel)
    # wgcn_ref  : (3, c, c)         fc1/fc2/fc3 Conv1d weights (c_out, c_in)
    # interp_ref: (n, h*w)          Kronecker bilinear operator (align_corners=True)
    # o_ref     : (1, c, h*w)       lane-dense output block
    c = o_ref.shape[1]
    n = h1 * w1

    # ---- 1) conv(3x3, stride 2, pad 1) + folded BN + ReLU ----------------------
    # Assemble the (9*c, n) patch matrix in VMEM scratch straight from the
    # phase-split padded input (in-kernel im2col; nothing was expanded in HBM),
    # then a single MXU matmul.
    for kh in range(3):
        for kw in range(3):
            t = kh * 3 + kw
            p = (kh % 2) * 2 + (kw % 2)          # which stride-2 phase
            r0, c0 = kh // 2, kw // 2            # offset inside that phase
            for iy in range(h1):
                pmat_sc[t * c:(t + 1) * c, iy * w1:(iy + 1) * w1] = (
                    xph_ref[0, p * c:(p + 1) * c, r0 + iy, c0:c0 + w1])
    pre = jnp.dot(wconv_ref[...], pmat_sc[...],
                  preferred_element_type=jnp.float32)                 # (c, n)
    xfeat = jnp.maximum(pre + shift_ref[...], 0.0)                    # channel-major

    # ---- 2) Sobel adjacency on the (tokens, channels) image --------------------
    # zero-pad (c, n) -> (c+2, n+2) in VMEM scratch; tokens stay in the lane dim.
    pad_sc[...] = jnp.zeros_like(pad_sc)
    pad_sc[1:c + 1, 1:n + 1] = xfeat
    xp = pad_sc[...]                                                  # (c+2, n+2)

    kx = ((-1.0, 0.0, 1.0), (-2.0, 0.0, 2.0), (-1.0, 0.0, 1.0))
    ky = ((-1.0, -2.0, -1.0), (0.0, 0.0, 0.0), (1.0, 2.0, 1.0))
    sx = jnp.zeros((c, n), jnp.float32)
    sy = jnp.zeros((c, n), jnp.float32)
    for kh in range(3):                      # token-axis stencil offset (lanes)
        for kw in range(3):                  # channel-axis stencil offset (sublanes)
            win = xp[kw:kw + c, kh:kh + n]
            if kx[kh][kw] != 0.0:
                sx = sx + kx[kh][kw] * win
            if ky[kh][kw] != 0.0:
                sy = sy + ky[kh][kw] * win
    sx = jnp.abs(sx)
    sy = jnp.abs(sy)

    # A[t1, t2] = sum_ch sx[ch, t1] * sy[ch, t2]   (== sobel_x @ sobel_y^T), on the MXU
    a = jax.lax.dot_general(sx, sy, (((0,), (0,)), ((), ())),
                            preferred_element_type=jnp.float32)       # (n, n)
    # softmax over the last dim
    a = a - jnp.max(a, axis=-1, keepdims=True)
    e = jnp.exp(a)
    a = e / jnp.sum(e, axis=-1, keepdims=True)
    # normalize: D^-1/2 (A + I) D^-1/2, d = row sums of (A + I)
    a1 = a + eye_ref[...]
    ones_row = jnp.ones((1, n), jnp.float32)
    d_col = jax.lax.dot_general(a1, ones_row, (((1,), (1,)), ((), ())),
                                preferred_element_type=jnp.float32)   # (n, 1)
    d_row = jax.lax.dot_general(ones_row, a1, (((1,), (1,)), ((), ())),
                                preferred_element_type=jnp.float32)   # (1, n)
    a_n = (jax.lax.rsqrt(d_col) * a1) * jax.lax.rsqrt(d_row)          # (n, n)

    # ---- 3) three GCN layers, channel-major: H <- act(W @ (H A^T)) -------------
    h_cur = xfeat                                                     # (c, n)
    for layer in range(3):
        t_ = jax.lax.dot_general(h_cur, a_n, (((1,), (1,)), ((), ())),
                                 preferred_element_type=jnp.float32)  # (c, n) = (A X)^T
        h_cur = jnp.dot(wgcn_ref[layer], t_, preferred_element_type=jnp.float32)
        if layer < 2:
            h_cur = jnp.maximum(h_cur, 0.0)

    # ---- 4) bilinear upsample (align_corners=True) as one lane-dense matmul ----
    o_ref[0] = jnp.dot(h_cur, interp_ref[...],
                       preferred_element_type=jnp.float32)            # (c, h*w)


# ----------------------------- glue / wrapper -----------------------------

def _interp_matrix(out_size, in_size):
    """1-D interpolation matrix for bilinear resize with align_corners=True."""
    if in_size == 1:
        return jnp.ones((out_size, 1), jnp.float32)
    if out_size == 1:
        m = jnp.zeros((1, in_size), jnp.float32)
        return m.at[0, 0].set(1.0)
    src = jnp.arange(out_size, dtype=jnp.float32) * (in_size - 1) / (out_size - 1)
    p0 = jnp.clip(jnp.floor(src).astype(jnp.int32), 0, in_size - 1)
    p1 = jnp.clip(p0 + 1, 0, in_size - 1)
    frac = src - p0.astype(jnp.float32)
    rows = jnp.arange(out_size)
    m = jnp.zeros((out_size, in_size), jnp.float32)
    m = m.at[rows, p0].add(1.0 - frac)
    m = m.at[rows, p1].add(frac)
    return m


def gcn_channel_forward(x, params):
    b, c, h, w = x.shape
    h1 = (h + 2 - 3) // 2 + 1
    w1 = (w + 2 - 3) // 2 + 1
    n = h1 * w1

    # --- pad for the stride-2 conv and split into the 4 stride-2 phases ---------
    # (space-to-depth: same total bytes as the padded input -- no 9x im2col in HBM;
    #  the extra bottom/right zero row/col for odd sizes is never read.)
    hpad = h + 2 + ((h + 2) % 2)
    wpad = w + 2 + ((w + 2) % 2)
    hp, wp = hpad // 2, wpad // 2
    xp = jnp.pad(x, ((0, 0), (0, 0), (1, hpad - h - 1), (1, wpad - w - 1)))
    xph = (xp.reshape(b, c, hp, 2, wp, 2)
             .transpose(0, 3, 5, 1, 2, 4)
             .reshape(b, 4 * c, hp, wp))

    # --- fold conv bias + BatchNorm (inference) into weight scale / shift -------
    eps = 1e-5
    scale = params["bn_gamma"] / jnp.sqrt(params["bn_var"] + eps)
    shift = params["bn_beta"] + scale * (params["conv_b"] - params["bn_mean"])
    wconv = params["conv_w"] * scale[:, None, None, None]             # (c, c, 3, 3)
    wconv = wconv.transpose(0, 2, 3, 1).reshape(c, 9 * c)             # [o, tap*c + i]

    wgcn = jnp.stack([params["fc1_w"], params["fc2_w"], params["fc3_w"]], axis=0)

    eye_n = jnp.eye(n, dtype=jnp.float32)

    # bilinear (align_corners=True) as one precomputed Kronecker operator (n, h*w)
    lh = _interp_matrix(h, h1)                                        # (h, h1)
    lw = _interp_matrix(w, w1)                                        # (w, w1)
    interp = jnp.einsum("Hh,Ww->hwHW", lh, lw).reshape(n, h * w)

    kernel = functools.partial(_gcn_channel_kernel, h1=h1, w1=w1)
    out = pl.pallas_call(
        kernel,
        out_shape=jax.ShapeDtypeStruct((b, c, h * w), jnp.float32),
        grid=(b,),
        in_specs=[
            pl.BlockSpec((1, 4 * c, hp, wp), lambda i: (i, 0, 0, 0)),  # phase-split input
            pl.BlockSpec((c, 9 * c), lambda i: (0, 0)),                # folded conv weight
            pl.BlockSpec((c, 1), lambda i: (0, 0)),                    # folded BN shift
            pl.BlockSpec((n, n), lambda i: (0, 0)),                    # identity
            pl.BlockSpec((3, c, c), lambda i: (0, 0, 0)),              # fc1/fc2/fc3
            pl.BlockSpec((n, h * w), lambda i: (0, 0)),                # bilinear operator
        ],
        out_specs=pl.BlockSpec((1, c, h * w), lambda i: (i, 0, 0)),    # lane-dense output
        scratch_shapes=[pltpu.VMEM((9 * c, n), jnp.float32),           # patch matrix
                        pltpu.VMEM((c + 2, n + 2), jnp.float32)],      # padded sobel image
        compiler_params=pltpu.CompilerParams(
            dimension_semantics=("parallel",)),
    )(xph, wconv, shift.reshape(c, 1), eye_n, wgcn, interp)
    return out.reshape(b, c, h, w)


def init_params(key, channels):
    c = channels
    keys = jax.random.split(key, 9)
    return {
        "conv_w": 0.2 * jax.random.normal(keys[0], (c, c, 3, 3), jnp.float32),
        "conv_b": 0.1 * jax.random.normal(keys[1], (c,), jnp.float32),
        "bn_gamma": 1.0 + 0.1 * jax.random.normal(keys[2], (c,), jnp.float32),
        "bn_beta": 0.1 * jax.random.normal(keys[3], (c,), jnp.float32),
        "bn_mean": 0.1 * jax.random.normal(keys[4], (c,), jnp.float32),
        "bn_var": jax.random.uniform(keys[5], (c,), jnp.float32, 0.5, 1.5),
        "fc1_w": jax.random.normal(keys[6], (c, c), jnp.float32) / jnp.sqrt(c),
        "fc2_w": jax.random.normal(keys[7], (c, c), jnp.float32) / jnp.sqrt(c),
        "fc3_w": jax.random.normal(keys[8], (c, c), jnp.float32) / jnp.sqrt(c),
    }


if __name__ == "__main__":
    key = jax.random.PRNGKey(0)
    k_x, k_p = jax.random.split(key)
    # small shapes consistent with the module: batch=2, channels=4, spatial=16x16
    x = jax.random.normal(k_x, (2, 4, 16, 16), jnp.float32)
    params = init_params(k_p, 4)

    out = jax.jit(gcn_channel_forward)(x, params)
    out = jax.block_until_ready(out)

    assert out.shape == (2, 4, 16, 16), out.shape
    assert bool(jnp.all(jnp.isfinite(out)))
    print("KERNEL_OK")
</pallas_src>

<mosaic_0001>
module attributes {stable_mosaic.version = 11 : i64} {
  func.func private @main(%arg0: i32) attributes {dimension_semantics = [#tpu.dimension_semantics<core_parallel>], iteration_bounds = array<i64: 2>, tpu.core_type = #tpu.core_type<sc_scalar_subcore>, window_params = []} {
    return
  }
}

module attributes {stable_mosaic.version = 11 : i64} {
  func.func private @main(%arg0: i32) attributes {dimension_semantics = [#tpu.dimension_semantics<core_parallel>], iteration_bounds = array<i64: 2>, tpu.core_type = #tpu.core_type<sc_scalar_subcore>, window_params = []} {
    return
  }
}

module attributes {stable_mosaic.version = 11 : i64} {
  func.func @_gcn_channel_kernel(%arg0: i32, %arg1: memref<1x16x9x9xf32, #tpu.memory_space<vmem>>, %arg2: memref<4x36xf32, #tpu.memory_space<vmem>>, %arg3: memref<4x1xf32, #tpu.memory_space<vmem>>, %arg4: memref<64x64xf32, #tpu.memory_space<vmem>>, %arg5: memref<3x4x4xf32, #tpu.memory_space<vmem>>, %arg6: memref<64x256xf32, #tpu.memory_space<vmem>>, %arg7: memref<1x4x256xf32, #tpu.memory_space<vmem>>, %arg8: memref<36x64xf32, #tpu.memory_space<vmem>>, %arg9: memref<6x66xf32, #tpu.memory_space<vmem>>) attributes {dimension_semantics = [#tpu.dimension_semantics<parallel>], iteration_bounds = array<i64: 2>, scalar_prefetch = 0 : i64, scratch_operands = 2 : i64, tpu.core_type = #tpu.core_type<tc>, window_params = [{transform_indices = @transform_0, window_bounds = array<i64: 1, 16, 9, 9>}, {pipeline_mode = #tpu.pipeline_mode<synchronous>, transform_indices = @transform_1, window_bounds = array<i64: 4, 36>}, {pipeline_mode = #tpu.pipeline_mode<synchronous>, transform_indices = @transform_2, window_bounds = array<i64: 4, 1>}, {pipeline_mode = #tpu.pipeline_mode<synchronous>, transform_indices = @transform_3, window_bounds = array<i64: 64, 64>}, {pipeline_mode = #tpu.pipeline_mode<synchronous>, transform_indices = @transform_4, window_bounds = array<i64: 3, 4, 4>}, {pipeline_mode = #tpu.pipeline_mode<synchronous>, transform_indices = @transform_5, window_bounds = array<i64: 64, 256>}, {transform_indices = @transform_6, window_bounds = array<i64: 1, 4, 256>}]} {
    %c0 = arith.constant 0 : index
    %c0_0 = arith.constant 0 : index
    %c0_1 = arith.constant 0 : index
    %c0_2 = arith.constant 0 : index
    %0 = vector.load %arg1[%c0, %c0_0, %c0_1, %c0_2] : memref<1x16x9x9xf32, #tpu.memory_space<vmem>>, vector<1x4x1x8xf32>
    %1 = vector.shape_cast %0 : vector<1x4x1x8xf32> to vector<4x8xf32>
    %c0_3 = arith.constant 0 : index
    %c0_4 = arith.constant 0 : index
    %2 = vector.load %arg8[%c0_3, %c0_4] : memref<36x64xf32, #tpu.memory_space<vmem>>, vector<4x8xf32>
    tpu.vector_store %arg8[%c0_3, %c0_4], %1 {strides = array<i32>} : memref<36x64xf32, #tpu.memory_space<vmem>>, vector<4x8xf32>,
    %c0_5 = arith.constant 0 : index
    %c0_6 = arith.constant 0 : index
    %c1 = arith.constant 1 : index
    %c0_7 = arith.constant 0 : index
    %3 = vector.load %arg1[%c0_5, %c0_6, %c1, %c0_7] : memref<1x16x9x9xf32, #tpu.memory_space<vmem>>, vector<1x4x1x8xf32>
    %4 = vector.shape_cast %3 : vector<1x4x1x8xf32> to vector<4x8xf32>
    %c0_8 = arith.constant 0 : index
    %c8 = arith.constant 8 : index
    %5 = vector.load %arg8[%c0_8, %c8] : memref<36x64xf32, #tpu.memory_space<vmem>>, vector<4x8xf32>
    tpu.vector_store %arg8[%c0_8, %c8], %4 {strides = array<i32>} : memref<36x64xf32, #tpu.memory_space<vmem>>, vector<4x8xf32>,
    %c0_9 = arith.constant 0 : index
    %c0_10 = arith.constant 0 : index
    %c2 = arith.constant 2 : index
    %c0_11 = arith.constant 0 : index
    %6 = vector.load %arg1[%c0_9, %c0_10, %c2, %c0_11] : memref<1x16x9x9xf32, #tpu.memory_space<vmem>>, vector<1x4x1x8xf32>
    %7 = vector.shape_cast %6 : vector<1x4x1x8xf32> to vector<4x8xf32>
    %c0_12 = arith.constant 0 : index
    %c16 = arith.constant 16 : index
    %8 = vector.load %arg8[%c0_12, %c16] : memref<36x64xf32, #tpu.memory_space<vmem>>, vector<4x8xf32>
    tpu.vector_store %arg8[%c0_12, %c16], %7 {strides = array<i32>} : memref<36x64xf32, #tpu.memory_space<vmem>>, vector<4x8xf32>,
    %c0_13 = arith.constant 0 : index
    %c0_14 = arith.constant 0 : index
    %c3 = arith.constant 3 : index
    %c0_15 = arith.constant 0 : index
    %9 = vector.load %arg1[%c0_13, %c0_14, %c3, %c0_15] : memref<1x16x9x9xf32, #tpu.memory_space<vmem>>, vector<1x4x1x8xf32>
    %10 = vector.shape_cast %9 : vector<1x4x1x8xf32> to vector<4x8xf32>
    %c0_16 = arith.constant 0 : index
    %c24 = arith.constant 24 : index
    %11 = vector.load %arg8[%c0_16, %c24] : memref<36x64xf32, #tpu.memory_space<vmem>>, vector<4x8xf32>
    tpu.vector_store %arg8[%c0_16, %c24], %10 {strides = array<i32>} : memref<36x64xf32, #tpu.memory_space<vmem>>, vector<4x8xf32>,
    %c0_17 = arith.constant 0 : index
    %c0_18 = arith.constant 0 : index
    %c4 = arith.constant 4 : index
    %c0_19 = arith.constant 0 : index
    %12 = vector.load %arg1[%c0_17, %c0_18, %c4, %c0_19] : memref<1x16x9x9xf32, #tpu.memory_space<vmem>>, vector<1x4x1x8xf32>
    %13 = vector.shape_cast %12 : vector<1x4x1x8xf32> to vector<4x8xf32>
    %c0_20 = arith.constant 0 : index
    %c32 = arith.constant 32 : index
    %14 = vector.load %arg8[%c0_20, %c32] : memref<36x64xf32, #tpu.memory_space<vmem>>, vector<4x8xf32>
    tpu.vector_store %arg8[%c0_20, %c32], %13 {strides = array<i32>} : memref<36x64xf32, #tpu.memory_space<vmem>>, vector<4x8xf32>,
    %c0_21 = arith.constant 0 : index
    %c0_22 = arith.constant 0 : index
    %c5 = arith.constant 5 : index
    %c0_23 = arith.constant 0 : index
    %15 = vector.load %arg1[%c0_21, %c0_22, %c5, %c0_23] : memref<1x16x9x9xf32, #tpu.memory_space<vmem>>, vector<1x4x1x8xf32>
    %16 = vector.shape_cast %15 : vector<1x4x1x8xf32> to vector<4x8xf32>
    %c0_24 = arith.constant 0 : index
    %c40 = arith.constant 40 : index
    %17 = vector.load %arg8[%c0_24, %c40] : memref<36x64xf32, #tpu.memory_space<vmem>>, vector<4x8xf32>
    tpu.vector_store %arg8[%c0_24, %c40], %16 {strides = array<i32>} : memref<36x64xf32, #tpu.memory_space<vmem>>, vector<4x8xf32>,
    %c0_25 = arith.constant 0 : index
    %c0_26 = arith.constant 0 : index
    %c6 = arith.constant 6 : index
    %c0_27 = arith.constant 0 : index
    %18 = vector.load %arg1[%c0_25, %c0_26, %c6, %c0_27] : memref<1x16x9x9xf32, #tpu.memory_space<vmem>>, vector<1x4x1x8xf32>
    %19 = vector.shape_cast %18 : vector<1x4x1x8xf32> to vector<4x8xf32>
    %c0_28 = arith.constant 0 : index
    %c48 = arith.constant 48 : index
    %20 = vector.load %arg8[%c0_28, %c48] : memref<36x64xf32, #tpu.memory_space<vmem>>, vector<4x8xf32>
    tpu.vector_store %arg8[%c0_28, %c48], %19 {strides = array<i32>} : memref<36x64xf32, #tpu.memory_space<vmem>>, vector<4x8xf32>,
    %c0_29 = arith.constant 0 : index
    %c0_30 = arith.constant 0 : index
    %c7 = arith.constant 7 : index
    %c0_31 = arith.constant 0 : index
    %21 = vector.load %arg1[%c0_29, %c0_30, %c7, %c0_31] : memref<1x16x9x9xf32, #tpu.memory_space<vmem>>, vector<1x4x1x8xf32>
    %22 = vector.shape_cast %21 : vector<1x4x1x8xf32> to vector<4x8xf32>
    %c0_32 = arith.constant 0 : index
    %c56 = arith.constant 56 : index
    %23 = vector.load %arg8[%c0_32, %c56] : memref<36x64xf32, #tpu.memory_space<vmem>>, vector<4x8xf32>
    tpu.vector_store %arg8[%c0_32, %c56], %22 {strides = array<i32>} : memref<36x64xf32, #tpu.memory_space<vmem>>, vector<4x8xf32>,
    %c0_33 = arith.constant 0 : index
    %c4_34 = arith.constant 4 : index
    %c0_35 = arith.constant 0 : index
    %c0_36 = arith.constant 0 : index
    %24 = vector.load %arg1[%c0_33, %c4_34, %c0_35, %c0_36] : memref<1x16x9x9xf32, #tpu.memory_space<vmem>>, vector<1x4x1x8xf32>
    %25 = vector.shape_cast %24 : vector<1x4x1x8xf32> to vector<4x8xf32>
    %c4_37 = arith.constant 4 : index
    %c0_38 = arith.constant 0 : index
    %26 = vector.load %arg8[%c4_37, %c0_38] : memref<36x64xf32, #tpu.memory_space<vmem>>, vector<4x8xf32>
    tpu.vector_store %arg8[%c4_37, %c0_38], %25 {strides = array<i32>} : memref<36x64xf32, #tpu.memory_space<vmem>>, vector<4x8xf32>,
    %c0_39 = arith.constant 0 : index
    %c4_40 = arith.constant 4 : index
    %c1_41 = arith.constant 1 : index
    %c0_42 = arith.constant 0 : index
    %27 = vector.load %arg1[%c0_39, %c4_40, %c1_41, %c0_42] : memref<1x16x9x9xf32, #tpu.memory_space<vmem>>, vector<1x4x1x8xf32>
    %28 = vector.shape_cast %27 : vector<1x4x1x8xf32> to vector<4x8xf32>
    %c4_43 = arith.constant 4 : index
    %c8_44 = arith.constant 8 : index
    %29 = vector.load %arg8[%c4_43, %c8_44] : memref<36x64xf32, #tpu.memory_space<vmem>>, vector<4x8xf32>
    tpu.vector_store %arg8[%c4_43, %c8_44], %28 {strides = array<i32>} : memref<36x64xf32, #tpu.memory_space<vmem>>, vector<4x8xf32>,
    %c0_45 = arith.constant 0 : index
    %c4_46 = arith.constant 4 : index
    %c2_47 = arith.constant 2 : index
    %c0_48 = arith.constant 0 : index
    %30 = vector.load %arg1[%c0_45, %c4_46, %c2_47, %c0_48] : memref<1x16x9x9xf32, #tpu.memory_space<vmem>>, vector<1x4x1x8xf32>
    %31 = vector.shape_cast %30 : vector<1x4x1x8xf32> to vector<4x8xf32>
    %c4_49 = arith.constant 4 : index
    %c16_50 = arith.constant 16 : index
    %32 = vector.load %arg8[%c4_49, %c16_50] : memref<36x64xf32, #tpu.memory_space<vmem>>, vector<4x8xf32>
    tpu.vector_store %arg8[%c4_49, %c16_50], %31 {strides = array<i32>} : memref<36x64xf32, #tpu.memory_space<vmem>>, vector<4x8xf32>,
    %c0_51 = arith.constant 0 : index
    %c4_52 = arith.constant 4 : index
    %c3_53 = arith.constant 3 : index
    %c0_54 = arith.constant 0 : index
    %33 = vector.load %arg1[%c0_51, %c4_52, %c3_53, %c0_54] : memref<1x16x9x9xf32, #tpu.memory_space<vmem>>, vector<1x4x1x8xf32>
    %34 = vector.shape_cast %33 : vector<1x4x1x8xf32> to vector<4x8xf32>
    %c4_55 = arith.constant 4 : index
    %c24_56 = arith.constant 24 : index
    %35 = vector.load %arg8[%c4_55, %c24_56] : memref<36x64xf32, #tpu.memory_space<vmem>>, vector<4x8xf32>
    tpu.vector_store %arg8[%c4_55, %c24_56], %34 {strides = array<i32>} : memref<36x64xf32, #tpu.memory_space<vmem>>, vector<4x8xf32>,
    %c0_57 = arith.constant 0 : index
    %c4_58 = arith.constant 4 : index
    %c4_59 = arith.constant 4 : index
    %c0_60 = arith.constant 0 : index
    %36 = vector.load %arg1[%c0_57, %c4_58, %c4_59, %c0_60] : memref<1x16x9x9xf32, #tpu.memory_space<vmem>>, vector<1x4x1x8xf32>
    %37 = vector.shape_cast %36 : vector<1x4x1x8xf32> to vector<4x8xf32>
    %c4_61 = arith.constant 4 : index
    %c32_62 = arith.constant 32 : index
    %38 = vector.load %arg8[%c4_61, %c32_62] : memref<36x64xf32, #tpu.memory_space<vmem>>, vector<4x8xf32>
    tpu.vector_store %arg8[%c4_61, %c32_62], %37 {strides = array<i32>} : memref<36x64xf32, #tpu.memory_space<vmem>>, vector<4x8xf32>,
    %c0_63 = arith.constant 0 : index
    %c4_64 = arith.constant 4 : index
    %c5_65 = arith.constant 5 : index
    %c0_66 = arith.constant 0 : index
    %39 = vector.load %arg1[%c0_63, %c4_64, %c5_65, %c0_66] : memref<1x16x9x9xf32, #tpu.memory_space<vmem>>, vector<1x4x1x8xf32>
    %40 = vector.shape_cast %39 : vector<1x4x1x8xf32> to vector<4x8xf32>
    %c4_67 = arith.constant 4 : index
    %c40_68 = arith.constant 40 : index
    %41 = vector.load %arg8[%c4_67, %c40_68] : memref<36x64xf32, #tpu.memory_space<vmem>>, vector<4x8xf32>
    tpu.vector_store %arg8[%c4_67, %c40_68], %40 {strides = array<i32>} : memref<36x64xf32, #tpu.memory_space<vmem>>, vector<4x8xf32>,
    %c0_69 = arith.constant 0 : index
    %c4_70 = arith.constant 4 : index
    %c6_71 = arith.constant 6 : index
    %c0_72 = arith.constant 0 : index
    %42 = vector.load %arg1[%c0_69, %c4_70, %c6_71, %c0_72] : memref<1x16x9x9xf32, #tpu.memory_space<vmem>>, vector<1x4x1x8xf32>
    %43 = vector.shape_cast %42 : vector<1x4x1x8xf32> to vector<4x8xf32>
    %c4_73 = arith.constant 4 : index
    %c48_74 = arith.constant 48 : index
    %44 = vector.load %arg8[%c4_73, %c48_74] : memref<36x64xf32, #tpu.memory_space<vmem>>, vector<4x8xf32>
    tpu.vector_store %arg8[%c4_73, %c48_74], %43 {strides = array<i32>} : memref<36x64xf32, #tpu.memory_space<vmem>>, vector<4x8xf32>,
    %c0_75 = arith.constant 0 : index
    %c4_76 = arith.constant 4 : index
    %c7_77 = arith.constant 7 : index
    %c0_78 = arith.constant 0 : index
    %45 = vector.load %arg1[%c0_75, %c4_76, %c7_77, %c0_78] : memref<1x16x9x9xf32, #tpu.memory_space<vmem>>, vector<1x4x1x8xf32>
    %46 = vector.shape_cast %45 : vector<1x4x1x8xf32> to vector<4x8xf32>
    %c4_79 = arith.constant 4 : index
    %c56_80 = arith.constant 56 : index
    %47 = vector.load %arg8[%c4_79, %c56_80] : memref<36x64xf32, #tpu.memory_space<vmem>>, vector<4x8xf32>
    tpu.vector_store %arg8[%c4_79, %c56_80], %46 {strides = array<i32>} : memref<36x64xf32, #tpu.memory_space<vmem>>, vector<4x8xf32>,
    %c0_81 = arith.constant 0 : index
    %c0_82 = arith.constant 0 : index
    %c0_83 = arith.constant 0 : index
    %c1_84 = arith.constant 1 : index
    %48 = vector.load %arg1[%c0_81, %c0_82, %c0_83, %c1_84] : memref<1x16x9x9xf32, #tpu.memory_space<vmem>>, vector<1x4x1x8xf32>
    %49 = vector.shape_cast %48 : vector<1x4x1x8xf32> to vector<4x8xf32>
    %c8_85 = arith.constant 8 : index
    %c0_86 = arith.constant 0 : index
    %50 = vector.load %arg8[%c8_85, %c0_86] : memref<36x64xf32, #tpu.memory_space<vmem>>, vector<4x8xf32>
    tpu.vector_store %arg8[%c8_85, %c0_86], %49 {strides = array<i32>} : memref<36x64xf32, #tpu.memory_space<vmem>>, vector<4x8xf32>,
    %c0_87 = arith.constant 0 : index
    %c0_88 = arith.constant 0 : index
    %c1_89 = arith.constant 1 : index
    %c1_90 = arith.constant 1 : index
    %51 = vector.load %arg1[%c0_87, %c0_88, %c1_89, %c1_90] : memref<1x16x9x9xf32, #tpu.memory_space<vmem>>, vector<1x4x1x8xf32>
    %52 = vector.shape_cast %51 : vector<1x4x1x8xf32> to vector<4x8xf32>
    %c8_91 = arith.constant 8 : index
    %c8_92 = arith.constant 8 : index
    %53 = vector.load %arg8[%c8_91, %c8_92] : memref<36x64xf32, #tpu.memory_space<vmem>>, vector<4x8xf32>
    tpu.vector_store %arg8[%c8_91, %c8_92], %52 {strides = array<i32>} : memref<36x64xf32, #tpu.memory_space<vmem>>, vector<4x8xf32>,
    %c0_93 = arith.constant 0 : index
    %c0_94 = arith.constant 0 : index
    %c2_95 = arith.constant 2 : index
    %c1_96 = arith.constant 1 : index
    %54 = vector.load %arg1[%c0_93, %c0_94, %c2_95, %c1_96] : memref<1x16x9x9xf32, #tpu.memory_space<vmem>>, vector<1x4x1x8xf32>
    %55 = vector.shape_cast %54 : vector<1x4x1x8xf32> to vector<4x8xf32>
    %c8_97 = arith.constant 8 : index
    %c16_98 = arith.constant 16 : index
    %56 = vector.load %arg8[%c8_97, %c16_98] : memref<36x64xf32, #tpu.memory_space<vmem>>, vector<4x8xf32>
    tpu.vector_store %arg8[%c8_97, %c16_98], %55 {strides = array<i32>} : memref<36x64xf32, #tpu.memory_space<vmem>>, vector<4x8xf32>,
    %c0_99 = arith.constant 0 : index
    %c0_100 = arith.constant 0 : index
    %c3_101 = arith.constant 3 : index
    %c1_102 = arith.constant 1 : index
    %57 = vector.load %arg1[%c0_99, %c0_100, %c3_101, %c1_102] : memref<1x16x9x9xf32, #tpu.memory_space<vmem>>, vector<1x4x1x8xf32>
    %58 = vector.shape_cast %57 : vector<1x4x1x8xf32> to vector<4x8xf32>
    %c8_103 = arith.constant 8 : index
    %c24_104 = arith.constant 24 : index
    %59 = vector.load %arg8[%c8_103, %c24_104] : memref<36x64xf32, #tpu.memory_space<vmem>>, vector<4x8xf32>
    tpu.vector_store %arg8[%c8_103, %c24_104], %58 {strides = array<i32>} : memref<36x64xf32, #tpu.memory_space<vmem>>, vector<4x8xf32>,
    %c0_105 = arith.constant 0 : index
    %c0_106 = arith.constant 0 : index
    %c4_107 = arith.constant 4 : index
    %c1_108 = arith.constant 1 : index
    %60 = vector.load %arg1[%c0_105, %c0_106, %c4_107, %c1_108] : memref<1x16x9x9xf32, #tpu.memory_space<vmem>>, vector<1x4x1x8xf32>
    %61 = vector.shape_cast %60 : vector<1x4x1x8xf32> to vector<4x8xf32>
    %c8_109 = arith.constant 8 : index
    %c32_110 = arith.constant 32 : index
    %62 = vector.load %arg8[%c8_109, %c32_110] : memref<36x64xf32, #tpu.memory_space<vmem>>, vector<4x8xf32>
    tpu.vector_store %arg8[%c8_109, %c32_110], %61 {strides = array<i32>} : memref<36x64xf32, #tpu.memory_space<vmem>>, vector<4x8xf32>,
    %c0_111 = arith.constant 0 : index
    %c0_112 = arith.constant 0 : index
    %c5_113 = arith.constant 5 : index
    %c1_114 = arith.constant 1 : index
    %63 = vector.load %arg1[%c0_111, %c0_112, %c5_113, %c1_114] : memref<1x16x9x9xf32, #tpu.memory_space<vmem>>, vector<1x4x1x8xf32>
    %64 = vector.shape_cast %63 : vector<1x4x1x8xf32> to vector<4x8xf32>
    %c8_115 = arith.constant 8 : index
    %c40_116 = arith.constant 40 : index
    %65 = vector.load %arg8[%c8_115, %c40_116] : memref<36x64xf32, #tpu.memory_space<vmem>>, vector<4x8xf32>
    tpu.vector_store %arg8[%c8_115, %c40_116], %64 {strides = array<i32>} : memref<36x64xf32, #tpu.memory_space<vmem>>, vector<4x8xf32>,
    %c0_117 = arith.constant 0 : index
    %c0_118 = arith.constant 0 : index
    %c6_119 = arith.constant 6 : index
    %c1_120 = arith.constant 1 : index
    %66 = vector.load %arg1[%c0_117, %c0_118, %c6_119, %c1_120] : memref<1x16x9x9xf32, #tpu.memory_space<vmem>>, vector<1x4x1x8xf32>
    %67 = vector.shape_cast %66 : vector<1x4x1x8xf32> to vector<4x8xf32>
    %c8_121 = arith.constant 8 : index
    %c48_122 = arith.constant 48 : index
    %68 = vector.load %arg8[%c8_121, %c48_122] : memref<36x64xf32, #tpu.memory_space<vmem>>, vector<4x8xf32>
    tpu.vector_store %arg8[%c8_121, %c48_122], %67 {strides = array<i32>} : memref<36x64xf32, #tpu.memory_space<vmem>>, vector<4x8xf32>,
    %c0_123 = arith.constant 0 : index
    %c0_124 = arith.constant 0 : index
    %c7_125 = arith.constant 7 : index
    %c1_126 = arith.constant 1 : index
    %69 = vector.load %arg1[%c0_123, %c0_124, %c7_125, %c1_126] : memref<1x16x9x9xf32, #tpu.memory_space<vmem>>, vector<1x4x1x8xf32>
    %70 = vector.shape_cast %69 : vector<1x4x1x8xf32> to vector<4x8xf32>
    %c8_127 = arith.constant 8 : index
    %c56_128 = arith.constant 56 : index
    %71 = vector.load %arg8[%c8_127, %c56_128] : memref<36x64xf32, #tpu.memory_space<vmem>>, vector<4x8xf32>
    tpu.vector_store %arg8[%c8_127, %c56_128], %70 {strides = array<i32>} : memref<36x64xf32, #tpu.memory_space<vmem>>, vector<4x8xf32>,
    %c0_129 = arith.constant 0 : index
    %c8_130 = arith.constant 8 : index
    %c0_131 = arith.constant 0 : index
    %c0_132 = arith.constant 0 : index
    %72 = vector.load %arg1[%c0_129, %c8_130, %c0_131, %c0_132] : memref<1x16x9x9xf32, #tpu.memory_space<vmem>>, vector<1x4x1x8xf32>
    %73 = vector.shape_cast %72 : vector<1x4x1x8xf32> to vector<4x8xf32>
    %c12 = arith.constant 12 : index
    %c0_133 = arith.constant 0 : index
    %74 = vector.load %arg8[%c12, %c0_133] : memref<36x64xf32, #tpu.memory_space<vmem>>, vector<4x8xf32>
    tpu.vector_store %arg8[%c12, %c0_133], %73 {strides = array<i32>} : memref<36x64xf32, #tpu.memory_space<vmem>>, vector<4x8xf32>,
    %c0_134 = arith.constant 0 : index
    %c8_135 = arith.constant 8 : index
    %c1_136 = arith.constant 1 : index
    %c0_137 = arith.constant 0 : index
    %75 = vector.load %arg1[%c0_134, %c8_135, %c1_136, %c0_137] : memref<1x16x9x9xf32, #tpu.memory_space<vmem>>, vector<1x4x1x8xf32>
    %76 = vector.shape_cast %75 : vector<1x4x1x8xf32> to vector<4x8xf32>
    %c12_138 = arith.constant 12 : index
    %c8_139 = arith.constant 8 : index
    %77 = vector.load %arg8[%c12_138, %c8_139] : memref<36x64xf32, #tpu.memory_space<vmem>>, vector<4x8xf32>
    tpu.vector_store %arg8[%c12_138, %c8_139], %76 {strides = array<i32>} : memref<36x64xf32, #tpu.memory_space<vmem>>, vector<4x8xf32>,
    %c0_140 = arith.constant 0 : index
    %c8_141 = arith.constant 8 : index
    %c2_142 = arith.constant 2 : index
    %c0_143 = arith.constant 0 : index
    %78 = vector.load %arg1[%c0_140, %c8_141, %c2_142, %c0_143] : memref<1x16x9x9xf32, #tpu.memory_space<vmem>>, vector<1x4x1x8xf32>
    %79 = vector.shape_cast %78 : vector<1x4x1x8xf32> to vector<4x8xf32>
    %c12_144 = arith.constant 12 : index
    %c16_145 = arith.constant 16 : index
    %80 = vector.load %arg8[%c12_144, %c16_145] : memref<36x64xf32, #tpu.memory_space<vmem>>, vector<4x8xf32>
    tpu.vector_store %arg8[%c12_144, %c16_145], %79 {strides = array<i32>} : memref<36x64xf32, #tpu.memory_space<vmem>>, vector<4x8xf32>,
    %c0_146 = arith.constant 0 : index
    %c8_147 = arith.constant 8 : index
    %c3_148 = arith.constant 3 : index
    %c0_149 = arith.constant 0 : index
    %81 = vector.load %arg1[%c0_146, %c8_147, %c3_148, %c0_149] : memref<1x16x9x9xf32, #tpu.memory_space<vmem>>, vector<1x4x1x8xf32>
    %82 = vector.shape_cast %81 : vector<1x4x1x8xf32> to vector<4x8xf32>
    %c12_150 = arith.constant 12 : index
    %c24_151 = arith.constant 24 : index
    %83 = vector.load %arg8[%c12_150, %c24_151] : memref<36x64xf32, #tpu.memory_space<vmem>>, vector<4x8xf32>
    tpu.vector_store %arg8[%c12_150, %c24_151], %82 {strides = array<i32>} : memref<36x64xf32, #tpu.memory_space<vmem>>, vector<4x8xf32>,
    %c0_152 = arith.constant 0 : index
    %c8_153 = arith.constant 8 : index
    %c4_154 = arith.constant 4 : index
    %c0_155 = arith.constant 0 : index
    %84 = vector.load %arg1[%c0_152, %c8_153, %c4_154, %c0_155] : memref<1x16x9x9xf32, #tpu.memory_space<vmem>>, vector<1x4x1x8xf32>
    %85 = vector.shape_cast %84 : vector<1x4x1x8xf32> to vector<4x8xf32>
    %c12_156 = arith.constant 12 : index
    %c32_157 = arith.constant 32 : index
    %86 = vector.load %arg8[%c12_156, %c32_157] : memref<36x64xf32, #tpu.memory_space<vmem>>, vector<4x8xf32>
    tpu.vector_store %arg8[%c12_156, %c32_157], %85 {strides = array<i32>} : memref<36x64xf32, #tpu.memory_space<vmem>>, vector<4x8xf32>,
    %c0_158 = arith.constant 0 : index
    %c8_159 = arith.constant 8 : index
    %c5_160 = arith.constant 5 : index
    %c0_161 = arith.constant 0 : index
    %87 = vector.load %arg1[%c0_158, %c8_159, %c5_160, %c0_161] : memref<1x16x9x9xf32, #tpu.memory_space<vmem>>, vector<1x4x1x8xf32>
    %88 = vector.shape_cast %87 : vector<1x4x1x8xf32> to vector<4x8xf32>
    %c12_162 = arith.constant 12 : index
    %c40_163 = arith.constant 40 : index
    %89 = vector.load %arg8[%c12_162, %c40_163] : memref<36x64xf32, #tpu.memory_space<vmem>>, vector<4x8xf32>
    tpu.vector_store %arg8[%c12_162, %c40_163], %88 {strides = array<i32>} : memref<36x64xf32, #tpu.memory_space<vmem>>, vector<4x8xf32>,
    %c0_164 = arith.constant 0 : index
    %c8_165 = arith.constant 8 : index
    %c6_166 = arith.constant 6 : index
    %c0_167 = arith.constant 0 : index
    %90 = vector.load %arg1[%c0_164, %c8_165, %c6_166, %c0_167] : memref<1x16x9x9xf32, #tpu.memory_space<vmem>>, vector<1x4x1x8xf32>
    %91 = vector.shape_cast %90 : vector<1x4x1x8xf32> to vector<4x8xf32>
    %c12_168 = arith.constant 12 : index
    %c48_169 = arith.constant 48 : index
    %92 = vector.load %arg8[%c12_168, %c48_169] : memref<36x64xf32, #tpu.memory_space<vmem>>, vector<4x8xf32>
    tpu.vector_store %arg8[%c12_168, %c48_169], %91 {strides = array<i32>} : memref<36x64xf32, #tpu.memory_space<vmem>>, vector<4x8xf32>,
    %c0_170 = arith.constant 0 : index
    %c8_171 = arith.constant 8 : index
    %c7_172 = arith.constant 7 : index
    %c0_173 = arith.constant 0 : index
    %93 = vector.load %arg1[%c0_170, %c8_171, %c7_172, %c0_173] : memref<1x16x9x9xf32, #tpu.memory_space<vmem>>, vector<1x4x1x8xf32>
    %94 = vector.shape_cast %93 : vector<1x4x1x8xf32> to vector<4x8xf32>
    %c12_174 = arith.constant 12 : index
    %c56_175 = arith.constant 56 : index
    %95 = vector.load %arg8[%c12_174, %c56_175] : memref<36x64xf32, #tpu.memory_space<vmem>>, vector<4x8xf32>
    tpu.vector_store %arg8[%c12_174, %c56_175], %94 {strides = array<i32>} : memref<36x64xf32, #tpu.memory_space<vmem>>, vector<4x8xf32>,
    %c0_176 = arith.constant 0 : index
    %c12_177 = arith.constant 12 : index
    %c0_178 = arith.constant 0 : index
    %c0_179 = arith.constant 0 : index
    %96 = vector.load %arg1[%c0_176, %c12_177, %c0_178, %c0_179] : memref<1x16x9x9xf32, #tpu.memory_space<vmem>>, vector<1x4x1x8xf32>
    %97 = vector.shape_cast %96 : vector<1x4x1x8xf32> to vector<4x8xf32>
    %c16_180 = arith.constant 16 : index
    %c0_181 = arith.constant 0 : index
    %98 = vector.load %arg8[%c16_180, %c0_181] : memref<36x64xf32, #tpu.memory_space<vmem>>, vector<4x8xf32>
    tpu.vector_store %arg8[%c16_180, %c0_181], %97 {strides = array<i32>} : memref<36x64xf32, #tpu.memory_space<vmem>>, vector<4x8xf32>,
    %c0_182 = arith.constant 0 : index
    %c12_183 = arith.constant 12 : index
    %c1_184 = arith.constant 1 : index
    %c0_185 = arith.constant 0 : index
    %99 = vector.load %arg1[%c0_182, %c12_183, %c1_184, %c0_185] : memref<1x16x9x9xf32, #tpu.memory_space<vmem>>, vector<1x4x1x8xf32>
    %100 = vector.shape_cast %99 : vector<1x4x1x8xf32> to vector<4x8xf32>
    %c16_186 = arith.constant 16 : index
    %c8_187 = arith.constant 8 : index
    %101 = vector.load %arg8[%c16_186, %c8_187] : memref<36x64xf32, #tpu.memory_space<vmem>>, vector<4x8xf32>
    tpu.vector_store %arg8[%c16_186, %c8_187], %100 {strides = array<i32>} : memref<36x64xf32, #tpu.memory_space<vmem>>, vector<4x8xf32>,
    %c0_188 = arith.constant 0 : index
    %c12_189 = arith.constant 12 : index
    %c2_190 = arith.constant 2 : index
    %c0_191 = arith.constant 0 : index
    %102 = vector.load %arg1[%c0_188, %c12_189, %c2_190, %c0_191] : memref<1x16x9x9xf32, #tpu.memory_space<vmem>>, vector<1x4x1x8xf32>
    %103 = vector.shape_cast %102 : vector<1x4x1x8xf32> to vector<4x8xf32>
    %c16_192 = arith.constant 16 : index
    %c16_193 = arith.constant 16 : index
    %104 = vector.load %arg8[%c16_192, %c16_193] : memref<36x64xf32, #tpu.memory_space<vmem>>, vector<4x8xf32>
    tpu.vector_store %arg8[%c16_192, %c16_193], %103 {strides = array<i32>} : memref<36x64xf32, #tpu.memory_space<vmem>>, vector<4x8xf32>,
    %c0_194 = arith.constant 0 : index
    %c12_195 = arith.constant 12 : index
    %c3_196 = arith.constant 3 : index
    %c0_197 = arith.constant 0 : index
    %105 = vector.load %arg1[%c0_194, %c12_195, %c3_196, %c0_197] : memref<1x16x9x9xf32, #tpu.memory_space<vmem>>, vector<1x4x1x8xf32>
    %106 = vector.shape_cast %105 : vector<1x4x1x8xf32> to vector<4x8xf32>
    %c16_198 = arith.constant 16 : index
    %c24_199 = arith.constant 24 : index
    %107 = vector.load %arg8[%c16_198, %c24_199] : memref<36x64xf32, #tpu.memory_space<vmem>>, vector<4x8xf32>
    tpu.vector_store %arg8[%c16_198, %c24_199], %106 {strides = array<i32>} : memref<36x64xf32, #tpu.memory_space<vmem>>, vector<4x8xf32>,
    %c0_200 = arith.constant 0 : index
    %c12_201 = arith.constant 12 : index
    %c4_202 = arith.constant 4 : index
    %c0_203 = arith.constant 0 : index
    %108 = vector.load %arg1[%c0_200, %c12_201, %c4_202, %c0_203] : memref<1x16x9x9xf32, #tpu.memory_space<vmem>>, vector<1x4x1x8xf32>
    %109 = vector.shape_cast %108 : vector<1x4x1x8xf32> to vector<4x8xf32>
    %c16_204 = arith.constant 16 : index
    %c32_205 = arith.constant 32 : index
    %110 = vector.load %arg8[%c16_204, %c32_205] : memref<36x64xf32, #tpu.memory_space<vmem>>, vector<4x8xf32>
    tpu.vector_store %arg8[%c16_204, %c32_205], %109 {strides = array<i32>} : memref<36x64xf32, #tpu.memory_space<vmem>>, vector<4x8xf32>,
    %c0_206 = arith.constant 0 : index
    %c12_207 = arith.constant 12 : index
    %c5_208 = arith.constant 5 : index
    %c0_209 = arith.constant 0 : index
    %111 = vector.load %arg1[%c0_206, %c12_207, %c5_208, %c0_209] : memref<1x16x9x9xf32, #tpu.memory_space<vmem>>, vector<1x4x1x8xf32>
    %112 = vector.shape_cast %111 : vector<1x4x1x8xf32> to vector<4x8xf32>
    %c16_210 = arith.constant 16 : index
    %c40_211 = arith.constant 40 : index
    %113 = vector.load %arg8[%c16_210, %c40_211] : memref<36x64xf32, #tpu.memory_space<vmem>>, vector<4x8xf32>
    tpu.vector_store %arg8[%c16_210, %c40_211], %112 {strides = array<i32>} : memref<36x64xf32, #tpu.memory_space<vmem>>, vector<4x8xf32>,
    %c0_212 = arith.constant 0 : index
    %c12_213 = arith.constant 12 : index
    %c6_214 = arith.constant 6 : index
    %c0_215 = arith.constant 0 : index
    %114 = vector.load %arg1[%c0_212, %c12_213, %c6_214, %c0_215] : memref<1x16x9x9xf32, #tpu.memory_space<vmem>>, vector<1x4x1x8xf32>
    %115 = vector.shape_cast %114 : vector<1x4x1x8xf32> to vector<4x8xf32>
    %c16_216 = arith.constant 16 : index
    %c48_217 = arith.constant 48 : index
    %116 = vector.load %arg8[%c16_216, %c48_217] : memref<36x64xf32, #tpu.memory_space<vmem>>, vector<4x8xf32>
    tpu.vector_store %arg8[%c16_216, %c48_217], %115 {strides = array<i32>} : memref<36x64xf32, #tpu.memory_space<vmem>>, vector<4x8xf32>,
    %c0_218 = arith.constant 0 : index
    %c12_219 = arith.constant 12 : index
    %c7_220 = arith.constant 7 : index
    %c0_221 = arith.constant 0 : index
    %117 = vector.load %arg1[%c0_218, %c12_219, %c7_220, %c0_221] : memref<1x16x9x9xf32, #tpu.memory_space<vmem>>, vector<1x4x1x8xf32>
    %118 = vector.shape_cast %117 : vector<1x4x1x8xf32> to vector<4x8xf32>
    %c16_222 = arith.constant 16 : index
    %c56_223 = arith.constant 56 : index
    %119 = vector.load %arg8[%c16_222, %c56_223] : memref<36x64xf32, #tpu.memory_space<vmem>>, vector<4x8xf32>
    tpu.vector_store %arg8[%c16_222, %c56_223], %118 {strides = array<i32>} : memref<36x64xf32, #tpu.memory_space<vmem>>, vector<4x8xf32>,
    %c0_224 = arith.constant 0 : index
    %c8_225 = arith.constant 8 : index
    %c0_226 = arith.constant 0 : index
    %c1_227 = arith.constant 1 : index
    %120 = vector.load %arg1[%c0_224, %c8_225, %c0_226, %c1_227] : memref<1x16x9x9xf32, #tpu.memory_space<vmem>>, vector<1x4x1x8xf32>
    %121 = vector.shape_cast %120 : vector<1x4x1x8xf32> to vector<4x8xf32>
    %c20 = arith.constant 20 : index
    %c0_228 = arith.constant 0 : index
    %122 = vector.load %arg8[%c20, %c0_228] : memref<36x64xf32, #tpu.memory_space<vmem>>, vector<4x8xf32>
    tpu.vector_store %arg8[%c20, %c0_228], %121 {strides = array<i32>} : memref<36x64xf32, #tpu.memory_space<vmem>>, vector<4x8xf32>,
    %c0_229 = arith.constant 0 : index
    %c8_230 = arith.constant 8 : index
    %c1_231 = arith.constant 1 : index
    %c1_232 = arith.constant 1 : index
    %123 = vector.load %arg1[%c0_229, %c8_230, %c1_231, %c1_232] : memref<1x16x9x9xf32, #tpu.memory_space<vmem>>, vector<1x4x1x8xf32>
    %124 = vector.shape_cast %123 : vector<1x4x1x8xf32> to vector<4x8xf32>
    %c20_233 = arith.constant 20 : index
    %c8_234 = arith.constant 8 : index
    %125 = vector.load %arg8[%c20_233, %c8_234] : memref<36x64xf32, #tpu.memory_space<vmem>>, vector<4x8xf32>
    tpu.vector_store %arg8[%c20_233, %c8_234], %124 {strides = array<i32>} : memref<36x64xf32, #tpu.memory_space<vmem>>, vector<4x8xf32>,
    %c0_235 = arith.constant 0 : index
    %c8_236 = arith.constant 8 : index
    %c2_237 = arith.constant 2 : index
    %c1_238 = arith.constant 1 : index
    %126 = vector.load %arg1[%c0_235, %c8_236, %c2_237, %c1_238] : memref<1x16x9x9xf32, #tpu.memory_space<vmem>>, vector<1x4x1x8xf32>
    %127 = vector.shape_cast %126 : vector<1x4x1x8xf32> to vector<4x8xf32>
    %c20_239 = arith.constant 20 : index
    %c16_240 = arith.constant 16 : index
    %128 = vector.load %arg8[%c20_239, %c16_240] : memref<36x64xf32, #tpu.memory_space<vmem>>, vector<4x8xf32>
    tpu.vector_store %arg8[%c20_239, %c16_240], %127 {strides = array<i32>} : memref<36x64xf32, #tpu.memory_space<vmem>>, vector<4x8xf32>,
    %c0_241 = arith.constant 0 : index
    %c8_242 = arith.constant 8 : index
    %c3_243 = arith.constant 3 : index
    %c1_244 = arith.constant 1 : index
    %129 = vector.load %arg1[%c0_241, %c8_242, %c3_243, %c1_244] : memref<1x16x9x9xf32, #tpu.memory_space<vmem>>, vector<1x4x1x8xf32>
    %130 = vector.shape_cast %129 : vector<1x4x1x8xf32> to vector<4x8xf32>
    %c20_245 = arith.constant 20 : index
    %c24_246 = arith.constant 24 : index
    %131 = vector.load %arg8[%c20_245, %c24_246] : memref<36x64xf32, #tpu.memory_space<vmem>>, vector<4x8xf32>
    tpu.vector_store %arg8[%c20_245, %c24_246], %130 {strides = array<i32>} : memref<36x64xf32, #tpu.memory_space<vmem>>, vector<4x8xf32>,
    %c0_247 = arith.constant 0 : index
    %c8_248 = arith.constant 8 : index
    %c4_249 = arith.constant 4 : index
    %c1_250 = arith.constant 1 : index
    %132 = vector.load %arg1[%c0_247, %c8_248, %c4_249, %c1_250] : memref<1x16x9x9xf32, #tpu.memory_space<vmem>>, vector<1x4x1x8xf32>
    %133 = vector.shape_cast %132 : vector<1x4x1x8xf32> to vector<4x8xf32>
    %c20_251 = arith.constant 20 : index
    %c32_252 = arith.constant 32 : index
    %134 = vector.load %arg8[%c20_251, %c32_252] : memref<36x64xf32, #tpu.memory_space<vmem>>, vector<4x8xf32>
    tpu.vector_store %arg8[%c20_251, %c32_252], %133 {strides = array<i32>} : memref<36x64xf32, #tpu.memory_space<vmem>>, vector<4x8xf32>,
    %c0_253 = arith.constant 0 : index
    %c8_254 = arith.constant 8 : index
    %c5_255 = arith.constant 5 : index
    %c1_256 = arith.constant 1 : index
    %135 = vector.load %arg1[%c0_253, %c8_254, %c5_255, %c1_256] : memref<1x16x9x9xf32, #tpu.memory_space<vmem>>, vector<1x4x1x8xf32>
    %136 = vector.shape_cast %135 : vector<1x4x1x8xf32> to vector<4x8xf32>
    %c20_257 = arith.constant 20 : index
    %c40_258 = arith.constant 40 : index
    %137 = vector.load %arg8[%c20_257, %c40_258] : memref<36x64xf32, #tpu.memory_space<vmem>>, vector<4x8xf32>
    tpu.vector_store %arg8[%c20_257, %c40_258], %136 {strides = array<i32>} : memref<36x64xf32, #tpu.memory_space<vmem>>, vector<4x8xf32>,
    %c0_259 = arith.constant 0 : index
    %c8_260 = arith.constant 8 : index
    %c6_261 = arith.constant 6 : index
    %c1_262 = arith.constant 1 : index
    %138 = vector.load %arg1[%c0_259, %c8_260, %c6_261, %c1_262] : memref<1x16x9x9xf32, #tpu.memory_space<vmem>>, vector<1x4x1x8xf32>
    %139 = vector.shape_cast %138 : vector<1x4x1x8xf32> to vector<4x8xf32>
    %c20_263 = arith.constant 20 : index
    %c48_264 = arith.constant 48 : index
    %140 = vector.load %arg8[%c20_263, %c48_264] : memref<36x64xf32, #tpu.memory_space<vmem>>, vector<4x8xf32>
    tpu.vector_store %arg8[%c20_263, %c48_264], %139 {strides = array<i32>} : memref<36x64xf32, #tpu.memory_space<vmem>>, vector<4x8xf32>,
    %c0_265 = arith.constant 0 : index
    %c8_266 = arith.constant 8 : index
    %c7_267 = arith.constant 7 : index
    %c1_268 = arith.constant 1 : index
    %141 = vector.load %arg1[%c0_265, %c8_266, %c7_267, %c1_268] : memref<1x16x9x9xf32, #tpu.memory_space<vmem>>, vector<1x4x1x8xf32>
    %142 = vector.shape_cast %141 : vector<1x4x1x8xf32> to vector<4x8xf32>
    %c20_269 = arith.constant 20 : index
    %c56_270 = arith.constant 56 : index
    %143 = vector.load %arg8[%c20_269, %c56_270] : memref<36x64xf32, #tpu.memory_space<vmem>>, vector<4x8xf32>
    tpu.vector_store %arg8[%c20_269, %c56_270], %142 {strides = array<i32>} : memref<36x64xf32, #tpu.memory_space<vmem>>, vector<4x8xf32>,
    %c0_271 = arith.constant 0 : index
    %c0_272 = arith.constant 0 : index
    %c1_273 = arith.constant 1 : index
    %c0_274 = arith.constant 0 : index
    %144 = vector.load %arg1[%c0_271, %c0_272, %c1_273, %c0_274] : memref<1x16x9x9xf32, #tpu.memory_space<vmem>>, vector<1x4x1x8xf32>
    %145 = vector.shape_cast %144 : vector<1x4x1x8xf32> to vector<4x8xf32>
    %c24_275 = arith.constant 24 : index
    %c0_276 = arith.constant 0 : index
    %146 = vector.load %arg8[%c24_275, %c0_276] : memref<36x64xf32, #tpu.memory_space<vmem>>, vector<4x8xf32>
    tpu.vector_store %arg8[%c24_275, %c0_276], %145 {strides = array<i32>} : memref<36x64xf32, #tpu.memory_space<vmem>>, vector<4x8xf32>,
    %c0_277 = arith.constant 0 : index
    %c0_278 = arith.constant 0 : index
    %c2_279 = arith.constant 2 : index
    %c0_280 = arith.constant 0 : index
    %147 = vector.load %arg1[%c0_277, %c0_278, %c2_279, %c0_280] : memref<1x16x9x9xf32, #tpu.memory_space<vmem>>, vector<1x4x1x8xf32>
    %148 = vector.shape_cast %147 : vector<1x4x1x8xf32> to vector<4x8xf32>
    %c24_281 = arith.constant 24 : index
    %c8_282 = arith.constant 8 : index
    %149 = vector.load %arg8[%c24_281, %c8_282] : memref<36x64xf32, #tpu.memory_space<vmem>>, vector<4x8xf32>
    tpu.vector_store %arg8[%c24_281, %c8_282], %148 {strides = array<i32>} : memref<36x64xf32, #tpu.memory_space<vmem>>, vector<4x8xf32>,
    %c0_283 = arith.constant 0 : index
    %c0_284 = arith.constant 0 : index
    %c3_285 = arith.constant 3 : index
    %c0_286 = arith.constant 0 : index
    %150 = vector.load %arg1[%c0_283, %c0_284, %c3_285, %c0_286] : memref<1x16x9x9xf32, #tpu.memory_space<vmem>>, vector<1x4x1x8xf32>
    %151 = vector.shape_cast %150 : vector<1x4x1x8xf32> to vector<4x8xf32>
    %c24_287 = arith.constant 24 : index
    %c16_288 = arith.constant 16 : index
    %152 = vector.load %arg8[%c24_287, %c16_288] : memref<36x64xf32, #tpu.memory_space<vmem>>, vector<4x8xf32>
    tpu.vector_store %arg8[%c24_287, %c16_288], %151 {strides = array<i32>} : memref<36x64xf32, #tpu.memory_space<vmem>>, vector<4x8xf32>,
    %c0_289 = arith.constant 0 : index
    %c0_290 = arith.constant 0 : index
    %c4_291 = arith.constant 4 : index
    %c0_292 = arith.constant 0 : index
    %153 = vector.load %arg1[%c0_289, %c0_290, %c4_291, %c0_292] : memref<1x16x9x9xf32, #tpu.memory_space<vmem>>, vector<1x4x1x8xf32>
    %154 = vector.shape_cast %153 : vector<1x4x1x8xf32> to vector<4x8xf32>
    %c24_293 = arith.constant 24 : index
    %c24_294 = arith.constant 24 : index
    %155 = vector.load %arg8[%c24_293, %c24_294] : memref<36x64xf32, #tpu.memory_space<vmem>>, vector<4x8xf32>
    tpu.vector_store %arg8[%c24_293, %c24_294], %154 {strides = array<i32>} : memref<36x64xf32, #tpu.memory_space<vmem>>, vector<4x8xf32>,
    %c0_295 = arith.constant 0 : index
    %c0_296 = arith.constant 0 : index
    %c5_297 = arith.constant 5 : index
    %c0_298 = arith.constant 0 : index
    %156 = vector.load %arg1[%c0_295, %c0_296, %c5_297, %c0_298] : memref<1x16x9x9xf32, #tpu.memory_space<vmem>>, vector<1x4x1x8xf32>
    %157 = vector.shape_cast %156 : vector<1x4x1x8xf32> to vector<4x8xf32>
    %c24_299 = arith.constant 24 : index
    %c32_300 = arith.constant 32 : index
    %158 = vector.load %arg8[%c24_299, %c32_300] : memref<36x64xf32, #tpu.memory_space<vmem>>, vector<4x8xf32>
    tpu.vector_store %arg8[%c24_299, %c32_300], %157 {strides = array<i32>} : memref<36x64xf32, #tpu.memory_space<vmem>>, vector<4x8xf32>,
    %c0_301 = arith.constant 0 : index
    %c0_302 = arith.constant 0 : index
    %c6_303 = arith.constant 6 : index
    %c0_304 = arith.constant 0 : index
    %159 = vector.load %arg1[%c0_301, %c0_302, %c6_303, %c0_304] : memref<1x16x9x9xf32, #tpu.memory_space<vmem>>, vector<1x4x1x8xf32>
    %160 = vector.shape_cast %159 : vector<1x4x1x8xf32> to vector<4x8xf32>
    %c24_305 = arith.constant 24 : index
    %c40_306 = arith.constant 40 : index
    %161 = vector.load %arg8[%c24_305, %c40_306] : memref<36x64xf32, #tpu.memory_space<vmem>>, vector<4x8xf32>
    tpu.vector_store %arg8[%c24_305, %c40_306], %160 {strides = array<i32>} : memref<36x64xf32, #tpu.memory_space<vmem>>, vector<4x8xf32>,
    %c0_307 = arith.constant 0 : index
    %c0_308 = arith.constant 0 : index
    %c7_309 = arith.constant 7 : index
    %c0_310 = arith.constant 0 : index
    %162 = vector.load %arg1[%c0_307, %c0_308, %c7_309, %c0_310] : memref<1x16x9x9xf32, #tpu.memory_space<vmem>>, vector<1x4x1x8xf32>
    %163 = vector.shape_cast %162 : vector<1x4x1x8xf32> to vector<4x8xf32>
    %c24_311 = arith.constant 24 : index
    %c48_312 = arith.constant 48 : index
    %164 = vector.load %arg8[%c24_311, %c48_312] : memref<36x64xf32, #tpu.memory_space<vmem>>, vector<4x8xf32>
    tpu.vector_store %arg8[%c24_311, %c48_312], %163 {strides = array<i32>} : memref<36x64xf32, #tpu.memory_space<vmem>>, vector<4x8xf32>,
    %c0_313 = arith.constant 0 : index
    %c0_314 = arith.constant 0 : index
    %c8_315 = arith.constant 8 : index
    %c0_316 = arith.constant 0 : index
    %165 = vector.load %arg1[%c0_313, %c0_314, %c8_315, %c0_316] : memref<1x16x9x9xf32, #tpu.memory_space<vmem>>, vector<1x4x1x8xf32>
    %166 = vector.shape_cast %165 : vector<1x4x1x8xf32> to vector<4x8xf32>
    %c24_317 = arith.constant 24 : index
    %c56_318 = arith.constant 56 : index
    %167 = vector.load %arg8[%c24_317, %c56_318] : memref<36x64xf32, #tpu.memory_space<vmem>>, vector<4x8xf32>
    tpu.vector_store %arg8[%c24_317, %c56_318], %166 {strides = array<i32>} : memref<36x64xf32, #tpu.memory_space<vmem>>, vector<4x8xf32>,
    %c0_319 = arith.constant 0 : index
    %c4_320 = arith.constant 4 : index
    %c1_321 = arith.constant 1 : index
    %c0_322 = arith.constant 0 : index
    %168 = vector.load %arg1[%c0_319, %c4_320, %c1_321, %c0_322] : memref<1x16x9x9xf32, #tpu.memory_space<vmem>>, vector<1x4x1x8xf32>
    %169 = vector.shape_cast %168 : vector<1x4x1x8xf32> to vector<4x8xf32>
    %c28 = arith.constant 28 : index
    %c0_323 = arith.constant 0 : index
    %170 = vector.load %arg8[%c28, %c0_323] : memref<36x64xf32, #tpu.memory_space<vmem>>, vector<4x8xf32>
    tpu.vector_store %arg8[%c28, %c0_323], %169 {strides = array<i32>} : memref<36x64xf32, #tpu.memory_space<vmem>>, vector<4x8xf32>,
    %c0_324 = arith.constant 0 : index
    %c4_325 = arith.constant 4 : index
    %c2_326 = arith.constant 2 : index
    %c0_327 = arith.constant 0 : index
    %171 = vector.load %arg1[%c0_324, %c4_325, %c2_326, %c0_327] : memref<1x16x9x9xf32, #tpu.memory_space<vmem>>, vector<1x4x1x8xf32>
    %172 = vector.shape_cast %171 : vector<1x4x1x8xf32> to vector<4x8xf32>
    %c28_328 = arith.constant 28 : index
    %c8_329 = arith.constant 8 : index
    %173 = vector.load %arg8[%c28_328, %c8_329] : memref<36x64xf32, #tpu.memory_space<vmem>>, vector<4x8xf32>
    tpu.vector_store %arg8[%c28_328, %c8_329], %172 {strides = array<i32>} : memref<36x64xf32, #tpu.memory_space<vmem>>, vector<4x8xf32>,
    %c0_330 = arith.constant 0 : index
    %c4_331 = arith.constant 4 : index
    %c3_332 = arith.constant 3 : index
    %c0_333 = arith.constant 0 : index
    %174 = vector.load %arg1[%c0_330, %c4_331, %c3_332, %c0_333] : memref<1x16x9x9xf32, #tpu.memory_space<vmem>>, vector<1x4x1x8xf32>
    %175 = vector.shape_cast %174 : vector<1x4x1x8xf32> to vector<4x8xf32>
    %c28_334 = arith.constant 28 : index
    %c16_335 = arith.constant 16 : index
    %176 = vector.load %arg8[%c28_334, %c16_335] : memref<36x64xf32, #tpu.memory_space<vmem>>, vector<4x8xf32>
    tpu.vector_store %arg8[%c28_334, %c16_335], %175 {strides = array<i32>} : memref<36x64xf32, #tpu.memory_space<vmem>>, vector<4x8xf32>,
    %c0_336 = arith.constant 0 : index
    %c4_337 = arith.constant 4 : index
    %c4_338 = arith.constant 4 : index
    %c0_339 = arith.constant 0 : index
    %177 = vector.load %arg1[%c0_336, %c4_337, %c4_338, %c0_339] : memref<1x16x9x9xf32, #tpu.memory_space<vmem>>, vector<1x4x1x8xf32>
    %178 = vector.shape_cast %177 : vector<1x4x1x8xf32> to vector<4x8xf32>
    %c28_340 = arith.constant 28 : index
    %c24_341 = arith.constant 24 : index
    %179 = vector.load %arg8[%c28_340, %c24_341] : memref<36x64xf32, #tpu.memory_space<vmem>>, vector<4x8xf32>
    tpu.vector_store %arg8[%c28_340, %c24_341], %178 {strides = array<i32>} : memref<36x64xf32, #tpu.memory_space<vmem>>, vector<4x8xf32>,
    %c0_342 = arith.constant 0 : index
    %c4_343 = arith.constant 4 : index
    %c5_344 = arith.constant 5 : index
    %c0_345 = arith.constant 0 : index
    %180 = vector.load %arg1[%c0_342, %c4_343, %c5_344, %c0_345] : memref<1x16x9x9xf32, #tpu.memory_space<vmem>>, vector<1x4x1x8xf32>
    %181 = vector.shape_cast %180 : vector<1x4x1x8xf32> to vector<4x8xf32>
    %c28_346 = arith.constant 28 : index
    %c32_347 = arith.constant 32 : index
    %182 = vector.load %arg8[%c28_346, %c32_347] : memref<36x64xf32, #tpu.memory_space<vmem>>, vector<4x8xf32>
    tpu.vector_store %arg8[%c28_346, %c32_347], %181 {strides = array<i32>} : memref<36x64xf32, #tpu.memory_space<vmem>>, vector<4x8xf32>,
    %c0_348 = arith.constant 0 : index
    %c4_349 = arith.constant 4 : index
    %c6_350 = arith.constant 6 : index
    %c0_351 = arith.constant 0 : index
    %183 = vector.load %arg1[%c0_348, %c4_349, %c6_350, %c0_351] : memref<1x16x9x9xf32, #tpu.memory_space<vmem>>, vector<1x4x1x8xf32>
    %184 = vector.shape_cast %183 : vector<1x4x1x8xf32> to vector<4x8xf32>
    %c28_352 = arith.constant 28 : index
    %c40_353 = arith.constant 40 : index
    %185 = vector.load %arg8[%c28_352, %c40_353] : memref<36x64xf32, #tpu.memory_space<vmem>>, vector<4x8xf32>
    tpu.vector_store %arg8[%c28_352, %c40_353], %184 {strides = array<i32>} : memref<36x64xf32, #tpu.memory_space<vmem>>, vector<4x8xf32>,
    %c0_354 = arith.constant 0 : index
    %c4_355 = arith.constant 4 : index
    %c7_356 = arith.constant 7 : index
    %c0_357 = arith.constant 0 : index
    %186 = vector.load %arg1[%c0_354, %c4_355, %c7_356, %c0_357] : memref<1x16x9x9xf32, #tpu.memory_space<vmem>>, vector<1x4x1x8xf32>
    %187 = vector.shape_cast %186 : vector<1x4x1x8xf32> to vector<4x8xf32>
    %c28_358 = arith.constant 28 : index
    %c48_359 = arith.constant 48 : index
    %188 = vector.load %arg8[%c28_358, %c48_359] : memref<36x64xf32, #tpu.memory_space<vmem>>, vector<4x8xf32>
    tpu.vector_store %arg8[%c28_358, %c48_359], %187 {strides = array<i32>} : memref<36x64xf32, #tpu.memory_space<vmem>>, vector<4x8xf32>,
    %c0_360 = arith.constant 0 : index
    %c4_361 = arith.constant 4 : index
    %c8_362 = arith.constant 8 : index
    %c0_363 = arith.constant 0 : index
    %189 = vector.load %arg1[%c0_360, %c4_361, %c8_362, %c0_363] : memref<1x16x9x9xf32, #tpu.memory_space<vmem>>, vector<1x4x1x8xf32>
    %190 = vector.shape_cast %189 : vector<1x4x1x8xf32> to vector<4x8xf32>
    %c28_364 = arith.constant 28 : index
    %c56_365 = arith.constant 56 : index
    %191 = vector.load %arg8[%c28_364, %c56_365] : memref<36x64xf32, #tpu.memory_space<vmem>>, vector<4x8xf32>
    tpu.vector_store %arg8[%c28_364, %c56_365], %190 {strides = array<i32>} : memref<36x64xf32, #tpu.memory_space<vmem>>, vector<4x8xf32>,
    %c0_366 = arith.constant 0 : index
    %c0_367 = arith.constant 0 : index
    %c1_368 = arith.constant 1 : index
    %c1_369 = arith.constant 1 : index
    %192 = vector.load %arg1[%c0_366, %c0_367, %c1_368, %c1_369] : memref<1x16x9x9xf32, #tpu.memory_space<vmem>>, vector<1x4x1x8xf32>
    %193 = vector.shape_cast %192 : vector<1x4x1x8xf32> to vector<4x8xf32>
    %c32_370 = arith.constant 32 : index
    %c0_371 = arith.constant 0 : index
    %194 = vector.load %arg8[%c32_370, %c0_371] : memref<36x64xf32, #tpu.memory_space<vmem>>, vector<4x8xf32>
    tpu.vector_store %arg8[%c32_370, %c0_371], %193 {strides = array<i32>} : memref<36x64xf32, #tpu.memory_space<vmem>>, vector<4x8xf32>,
    %c0_372 = arith.constant 0 : index
    %c0_373 = arith.constant 0 : index
    %c2_374 = arith.constant 2 : index
    %c1_375 = arith.constant 1 : index
    %195 = vector.load %arg1[%c0_372, %c0_373, %c2_374, %c1_375] : memref<1x16x9x9xf32, #tpu.memory_space<vmem>>, vector<1x4x1x8xf32>
    %196 = vector.shape_cast %195 : vector<1x4x1x8xf32> to vector<4x8xf32>
    %c32_376 = arith.constant 32 : index
    %c8_377 = arith.constant 8 : index
    %197 = vector.load %arg8[%c32_376, %c8_377] : memref<36x64xf32, #tpu.memory_space<vmem>>, vector<4x8xf32>
    tpu.vector_store %arg8[%c32_376, %c8_377], %196 {strides = array<i32>} : memref<36x64xf32, #tpu.memory_space<vmem>>, vector<4x8xf32>,
    %c0_378 = arith.constant 0 : index
    %c0_379 = arith.constant 0 : index
    %c3_380 = arith.constant 3 : index
    %c1_381 = arith.constant 1 : index
    %198 = vector.load %arg1[%c0_378, %c0_379, %c3_380, %c1_381] : memref<1x16x9x9xf32, #tpu.memory_space<vmem>>, vector<1x4x1x8xf32>
    %199 = vector.shape_cast %198 : vector<1x4x1x8xf32> to vector<4x8xf32>
    %c32_382 = arith.constant 32 : index
    %c16_383 = arith.constant 16 : index
    %200 = vector.load %arg8[%c32_382, %c16_383] : memref<36x64xf32, #tpu.memory_space<vmem>>, vector<4x8xf32>
    tpu.vector_store %arg8[%c32_382, %c16_383], %199 {strides = array<i32>} : memref<36x64xf32, #tpu.memory_space<vmem>>, vector<4x8xf32>,
    %c0_384 = arith.constant 0 : index
    %c0_385 = arith.constant 0 : index
    %c4_386 = arith.constant 4 : index
    %c1_387 = arith.constant 1 : index
    %201 = vector.load %arg1[%c0_384, %c0_385, %c4_386, %c1_387] : memref<1x16x9x9xf32, #tpu.memory_space<vmem>>, vector<1x4x1x8xf32>
    %202 = vector.shape_cast %201 : vector<1x4x1x8xf32> to vector<4x8xf32>
    %c32_388 = arith.constant 32 : index
    %c24_389 = arith.constant 24 : index
    %203 = vector.load %arg8[%c32_388, %c24_389] : memref<36x64xf32, #tpu.memory_space<vmem>>, vector<4x8xf32>
    tpu.vector_store %arg8[%c32_388, %c24_389], %202 {strides = array<i32>} : memref<36x64xf32, #tpu.memory_space<vmem>>, vector<4x8xf32>,
    %c0_390 = arith.constant 0 : index
    %c0_391 = arith.constant 0 : index
    %c5_392 = arith.constant 5 : index
    %c1_393 = arith.constant 1 : index
    %204 = vector.load %arg1[%c0_390, %c0_391, %c5_392, %c1_393] : memref<1x16x9x9xf32, #tpu.memory_space<vmem>>, vector<1x4x1x8xf32>
    %205 = vector.shape_cast %204 : vector<1x4x1x8xf32> to vector<4x8xf32>
    %c32_394 = arith.constant 32 : index
    %c32_395 = arith.constant 32 : index
    %206 = vector.load %arg8[%c32_394, %c32_395] : memref<36x64xf32, #tpu.memory_space<vmem>>, vector<4x8xf32>
    tpu.vector_store %arg8[%c32_394, %c32_395], %205 {strides = array<i32>} : memref<36x64xf32, #tpu.memory_space<vmem>>, vector<4x8xf32>,
    %c0_396 = arith.constant 0 : index
    %c0_397 = arith.constant 0 : index
    %c6_398 = arith.constant 6 : index
    %c1_399 = arith.constant 1 : index
    %207 = vector.load %arg1[%c0_396, %c0_397, %c6_398, %c1_399] : memref<1x16x9x9xf32, #tpu.memory_space<vmem>>, vector<1x4x1x8xf32>
    %208 = vector.shape_cast %207 : vector<1x4x1x8xf32> to vector<4x8xf32>
    %c32_400 = arith.constant 32 : index
    %c40_401 = arith.constant 40 : index
    %209 = vector.load %arg8[%c32_400, %c40_401] : memref<36x64xf32, #tpu.memory_space<vmem>>, vector<4x8xf32>
    tpu.vector_store %arg8[%c32_400, %c40_401], %208 {strides = array<i32>} : memref<36x64xf32, #tpu.memory_space<vmem>>, vector<4x8xf32>,
    %c0_402 = arith.constant 0 : index
    %c0_403 = arith.constant 0 : index
    %c7_404 = arith.constant 7 : index
    %c1_405 = arith.constant 1 : index
    %210 = vector.load %arg1[%c0_402, %c0_403, %c7_404, %c1_405] : memref<1x16x9x9xf32, #tpu.memory_space<vmem>>, vector<1x4x1x8xf32>
    %211 = vector.shape_cast %210 : vector<1x4x1x8xf32> to vector<4x8xf32>
    %c32_406 = arith.constant 32 : index
    %c48_407 = arith.constant 48 : index
    %212 = vector.load %arg8[%c32_406, %c48_407] : memref<36x64xf32, #tpu.memory_space<vmem>>, vector<4x8xf32>
    tpu.vector_store %arg8[%c32_406, %c48_407], %211 {strides = array<i32>} : memref<36x64xf32, #tpu.memory_space<vmem>>, vector<4x8xf32>,
    %c0_408 = arith.constant 0 : index
    %c0_409 = arith.constant 0 : index
    %c8_410 = arith.constant 8 : index
    %c1_411 = arith.constant 1 : index
    %213 = vector.load %arg1[%c0_408, %c0_409, %c8_410, %c1_411] : memref<1x16x9x9xf32, #tpu.memory_space<vmem>>, vector<1x4x1x8xf32>
    %214 = vector.shape_cast %213 : vector<1x4x1x8xf32> to vector<4x8xf32>
    %c32_412 = arith.constant 32 : index
    %c56_413 = arith.constant 56 : index
    %215 = vector.load %arg8[%c32_412, %c56_413] : memref<36x64xf32, #tpu.memory_space<vmem>>, vector<4x8xf32>
    tpu.vector_store %arg8[%c32_412, %c56_413], %214 {strides = array<i32>} : memref<36x64xf32, #tpu.memory_space<vmem>>, vector<4x8xf32>,
    %c0_414 = arith.constant 0 : index
    %c0_415 = arith.constant 0 : index
    %216 = vector.load %arg2[%c0_414, %c0_415] : memref<4x36xf32, #tpu.memory_space<vmem>>, vector<4x36xf32>
    %c0_416 = arith.constant 0 : index
    %c0_417 = arith.constant 0 : index
    %217 = vector.load %arg8[%c0_416, %c0_417] : memref<36x64xf32, #tpu.memory_space<vmem>>, vector<36x64xf32>
    %cst = arith.constant dense<0.000000e+00> : vector<4x64xf32>
    %218 = tpu.matmul %216, %217, %cst {dimension_numbers = #tpu.dot_dimension_numbers<[1], [0], [0], [1], [0, 0, 1, 1], [], []>} : vector<4x36xf32>, vector<36x64xf32>, vector<4x64xf32> -> vector<4x64xf32>
    %c0_418 = arith.constant 0 : index
    %c0_419 = arith.constant 0 : index
    %219 = vector.load %arg3[%c0_418, %c0_419] : memref<4x1xf32, #tpu.memory_space<vmem>>, vector<4x1xf32>
    %220 = vector.broadcast %219 : vector<4x1xf32> to vector<4x64xf32>
    %221 = arith.addf %218, %220 : vector<4x64xf32>
    %cst_420 = arith.constant 0.000000e+00 : f32
    %222 = vector.broadcast %cst_420 : f32 to vector<4x64xf32>
    %223 = arith.maximumf %221, %222 : vector<4x64xf32>
    %cst_421 = arith.constant 0.000000e+00 : f32
    %224 = vector.broadcast %cst_421 : f32 to vector<6x66xf32>
    %c0_422 = arith.constant 0 : index
    %c0_423 = arith.constant 0 : index
    %225 = vector.load %arg9[%c0_422, %c0_423] : memref<6x66xf32, #tpu.memory_space<vmem>>, vector<6x66xf32>
    tpu.vector_store %arg9[%c0_422, %c0_423], %224 {strides = array<i32>} : memref<6x66xf32, #tpu.memory_space<vmem>>, vector<6x66xf32>,
    %c1_424 = arith.constant 1 : index
    %c1_425 = arith.constant 1 : index
    %226 = vector.load %arg9[%c1_424, %c1_425] : memref<6x66xf32, #tpu.memory_space<vmem>>, vector<4x64xf32>
    tpu.vector_store %arg9[%c1_424, %c1_425], %223 {strides = array<i32>} : memref<6x66xf32, #tpu.memory_space<vmem>>, vector<4x64xf32>,
    %c0_426 = arith.constant 0 : index
    %c0_427 = arith.constant 0 : index
    %227 = vector.load %arg9[%c0_426, %c0_427] : memref<6x66xf32, #tpu.memory_space<vmem>>, vector<6x66xf32>
    %cst_428 = arith.constant 0.000000e+00 : f32
    %228 = vector.broadcast %cst_428 : f32 to vector<4x64xf32>
    %cst_429 = arith.constant 0.000000e+00 : f32
    %229 = vector.broadcast %cst_429 : f32 to vector<4x64xf32>
    %230 = vector.extract_strided_slice %227 {offsets = [0, 0], sizes = [4, 64], strides = [1, 1]} : vector<6x66xf32> to vector<4x64xf32>
    %cst_430 = arith.constant -1.000000e+00 : f32
    %231 = vector.broadcast %cst_430 : f32 to vector<4x64xf32>
    %232 = arith.mulf %231, %230 : vector<4x64xf32>
    %233 = arith.addf %228, %232 : vector<4x64xf32>
    %cst_431 = arith.constant -1.000000e+00 : f32
    %234 = vector.broadcast %cst_431 : f32 to vector<4x64xf32>
    %235 = arith.mulf %234, %230 : vector<4x64xf32>
    %236 = arith.addf %229, %235 : vector<4x64xf32>
    %237 = vector.extract_strided_slice %227 {offsets = [1, 0], sizes = [4, 64], strides = [1, 1]} : vector<6x66xf32> to vector<4x64xf32>
    %cst_432 = arith.constant -2.000000e+00 : f32
    %238 = vector.broadcast %cst_432 : f32 to vector<4x64xf32>
    %239 = arith.mulf %238, %237 : vector<4x64xf32>
    %240 = arith.addf %236, %239 : vector<4x64xf32>
    %241 = vector.extract_strided_slice %227 {offsets = [2, 0], sizes = [4, 64], strides = [1, 1]} : vector<6x66xf32> to vector<4x64xf32>
    %cst_433 = arith.constant 1.000000e+00 : f32
    %242 = vector.broadcast %cst_433 : f32 to vector<4x64xf32>
    %243 = arith.mulf %242, %241 : vector<4x64xf32>
    %244 = arith.addf %233, %243 : vector<4x64xf32>
    %cst_434 = arith.constant -1.000000e+00 : f32
    %245 = vector.broadcast %cst_434 : f32 to vector<4x64xf32>
    %246 = arith.mulf %245, %241 : vector<4x64xf32>
    %247 = arith.addf %240, %246 : vector<4x64xf32>
    %248 = vector.extract_strided_slice %227 {offsets = [0, 1], sizes = [4, 64], strides = [1, 1]} : vector<6x66xf32> to vector<4x64xf32>
    %cst_435 = arith.constant -2.000000e+00 : f32
    %249 = vector.broadcast %cst_435 : f32 to vector<4x64xf32>
    %250 = arith.mulf %249, %248 : vector<4x64xf32>
    %251 = arith.addf %244, %250 : vector<4x64xf32>
    %252 = vector.extract_strided_slice %227 {offsets = [2, 1], sizes = [4, 64], strides = [1, 1]} : vector<6x66xf32> to vector<4x64xf32>
    %cst_436 = arith.constant 2.000000e+00 : f32
    %253 = vector.broadcast %cst_436 : f32 to vector<4x64xf32>
    %254 = arith.mulf %253, %252 : vector<4x64xf32>
    %255 = arith.addf %251, %254 : vector<4x64xf32>
    %256 = vector.extract_strided_slice %227 {offsets = [0, 2], sizes = [4, 64], strides = [1, 1]} : vector<6x66xf32> to vector<4x64xf32>
    %cst_437 = arith.constant -1.000000e+00 : f32
    %257 = vector.broadcast %cst_437 : f32 to vector<4x64xf32>
    %258 = arith.mulf %257, %256 : vector<4x64xf32>
    %259 = arith.addf %255, %258 : vector<4x64xf32>
    %cst_438 = arith.constant 1.000000e+00 : f32
    %260 = vector.broadcast %cst_438 : f32 to vector<4x64xf32>
    %261 = arith.mulf %260, %256 : vector<4x64xf32>
    %262 = arith.addf %247, %261 : vector<4x64xf32>
    %263 = vector.extract_strided_slice %227 {offsets = [1, 2], sizes = [4, 64], strides = [1, 1]} : vector<6x66xf32> to vector<4x64xf32>
    %cst_439 = arith.constant 2.000000e+00 : f32
    %264 = vector.broadcast %cst_439 : f32 to vector<4x64xf32>
    %265 = arith.mulf %264, %263 : vector<4x64xf32>
    %266 = arith.addf %262, %265 : vector<4x64xf32>
    %267 = vector.extract_strided_slice %227 {offsets = [2, 2], sizes = [4, 64], strides = [1, 1]} : vector<6x66xf32> to vector<4x64xf32>
    %cst_440 = arith.constant 1.000000e+00 : f32
    %268 = vector.broadcast %cst_440 : f32 to vector<4x64xf32>
    %269 = arith.mulf %268, %267 : vector<4x64xf32>
    %270 = arith.addf %259, %269 : vector<4x64xf32>
    %cst_441 = arith.constant 1.000000e+00 : f32
    %271 = vector.broadcast %cst_441 : f32 to vector<4x64xf32>
    %272 = arith.mulf %271, %267 : vector<4x64xf32>
    %273 = arith.addf %266, %272 : vector<4x64xf32>
    %274 = math.absf %270 : vector<4x64xf32>
    %275 = math.absf %273 : vector<4x64xf32>
    %cst_442 = arith.constant dense<0.000000e+00> : vector<64x64xf32>
    %276 = tpu.matmul %274, %275, %cst_442 {dimension_numbers = #tpu.dot_dimension_numbers<[0], [0], [1], [1], [0, 1, 1, 1], [], []>} : vector<4x64xf32>, vector<4x64xf32>, vector<64x64xf32> -> vector<64x64xf32>
    %cst_443 = arith.constant dense<0xFF800000> : vector<64xf32>
    %277 = vector.multi_reduction <maximumf>, %276, %cst_443 [1] : vector<64x64xf32> to vector<64xf32>
    %278 = vector.shape_cast %277 : vector<64xf32> to vector<64x1xf32>
    %279 = vector.broadcast %278 : vector<64x1xf32> to vector<64x64xf32>
    %280 = arith.subf %276, %279 : vector<64x64xf32>
    %281 = math.exp %280 : vector<64x64xf32>
    %cst_444 = arith.constant dense<0.000000e+00> : vector<64xf32>
    %282 = vector.multi_reduction <add>, %281, %cst_444 [1] : vector<64x64xf32> to vector<64xf32>
    %283 = vector.shape_cast %282 : vector<64xf32> to vector<64x1xf32>
    %284 = vector.broadcast %283 : vector<64x1xf32> to vector<64x64xf32>
    %285 = arith.divf %281, %284 : vector<64x64xf32>
    %c0_445 = arith.constant 0 : index
    %c0_446 = arith.constant 0 : index
    %286 = vector.load %arg4[%c0_445, %c0_446] : memref<64x64xf32, #tpu.memory_space<vmem>>, vector<64x64xf32>
    %287 = arith.addf %285, %286 : vector<64x64xf32>
    %cst_447 = arith.constant 1.000000e+00 : f32
    %288 = vector.broadcast %cst_447 : f32 to vector<1x64xf32>
    %cst_448 = arith.constant dense<0.000000e+00> : vector<64x1xf32>
    %289 = tpu.matmul %287, %288, %cst_448 {dimension_numbers = #tpu.dot_dimension_numbers<[1], [1], [0], [0], [0, 0, 1, 0], [], []>} : vector<64x64xf32>, vector<1x64xf32>, vector<64x1xf32> -> vector<64x1xf32>
    %cst_449 = arith.constant dense<0.000000e+00> : vector<1x64xf32>
    %290 = tpu.matmul %288, %287, %cst_449 {dimension_numbers = #tpu.dot_dimension_numbers<[1], [1], [0], [0], [0, 0, 1, 0], [], []>} : vector<1x64xf32>, vector<64x64xf32>, vector<1x64xf32> -> vector<1x64xf32>
    %291 = math.rsqrt %289 : vector<64x1xf32>
    %292 = vector.broadcast %291 : vector<64x1xf32> to vector<64x64xf32>
    %293 = arith.mulf %292, %287 : vector<64x64xf32>
    %294 = math.rsqrt %290 : vector<1x64xf32>
    %295 = vector.broadcast %294 : vector<1x64xf32> to vector<64x64xf32>
    %296 = arith.mulf %293, %295 : vector<64x64xf32>
    %cst_450 = arith.constant dense<0.000000e+00> : vector<4x64xf32>
    %297 = tpu.matmul %223, %296, %cst_450 {dimension_numbers = #tpu.dot_dimension_numbers<[1], [1], [0], [0], [0, 0, 1, 0], [], []>} : vector<4x64xf32>, vector<64x64xf32>, vector<4x64xf32> -> vector<4x64xf32>
    %c0_451 = arith.constant 0 : index
    %c0_452 = arith.constant 0 : index
    %c0_453 = arith.constant 0 : index
    %298 = vector.load %arg5[%c0_451, %c0_452, %c0_453] : memref<3x4x4xf32, #tpu.memory_space<vmem>>, vector<1x4x4xf32>
    %299 = vector.shape_cast %298 : vector<1x4x4xf32> to vector<4x4xf32>
    %cst_454 = arith.constant dense<0.000000e+00> : vector<4x64xf32>
    %300 = tpu.matmul %299, %297, %cst_454 {dimension_numbers = #tpu.dot_dimension_numbers<[1], [0], [0], [1], [0, 0, 1, 1], [], []>} : vector<4x4xf32>, vector<4x64xf32>, vector<4x64xf32> -> vector<4x64xf32>
    %cst_455 = arith.constant 0.000000e+00 : f32
    %301 = vector.broadcast %cst_455 : f32 to vector<4x64xf32>
    %302 = arith.maximumf %300, %301 : vector<4x64xf32>
    %cst_456 = arith.constant dense<0.000000e+00> : vector<4x64xf32>
    %303 = tpu.matmul %302, %296, %cst_456 {dimension_numbers = #tpu.dot_dimension_numbers<[1], [1], [0], [0], [0, 0, 1, 0], [], []>} : vector<4x64xf32>, vector<64x64xf32>, vector<4x64xf32> -> vector<4x64xf32>
    %c1_457 = arith.constant 1 : index
    %c0_458 = arith.constant 0 : index
    %c0_459 = arith.constant 0 : index
    %304 = vector.load %arg5[%c1_457, %c0_458, %c0_459] : memref<3x4x4xf32, #tpu.memory_space<vmem>>, vector<1x4x4xf32>
    %305 = vector.shape_cast %304 : vector<1x4x4xf32> to vector<4x4xf32>
    %cst_460 = arith.constant dense<0.000000e+00> : vector<4x64xf32>
    %306 = tpu.matmul %305, %303, %cst_460 {dimension_numbers = #tpu.dot_dimension_numbers<[1], [0], [0], [1], [0, 0, 1, 1], [], []>} : vector<4x4xf32>, vector<4x64xf32>, vector<4x64xf32> -> vector<4x64xf32>
    %cst_461 = arith.constant 0.000000e+00 : f32
    %307 = vector.broadcast %cst_461 : f32 to vector<4x64xf32>
    %308 = arith.maximumf %306, %307 : vector<4x64xf32>
    %cst_462 = arith.constant dense<0.000000e+00> : vector<4x64xf32>
    %309 = tpu.matmul %308, %296, %cst_462 {dimension_numbers = #tpu.dot_dimension_numbers<[1], [1], [0], [0], [0, 0, 1, 0], [], []>} : vector<4x64xf32>, vector<64x64xf32>, vector<4x64xf32> -> vector<4x64xf32>
    %c2_463 = arith.constant 2 : index
    %c0_464 = arith.constant 0 : index
    %c0_465 = arith.constant 0 : index
    %310 = vector.load %arg5[%c2_463, %c0_464, %c0_465] : memref<3x4x4xf32, #tpu.memory_space<vmem>>, vector<1x4x4xf32>
    %311 = vector.shape_cast %310 : vector<1x4x4xf32> to vector<4x4xf32>
    %cst_466 = arith.constant dense<0.000000e+00> : vector<4x64xf32>
    %312 = tpu.matmul %311, %309, %cst_466 {dimension_numbers = #tpu.dot_dimension_numbers<[1], [0], [0], [1], [0, 0, 1, 1], [], []>} : vector<4x4xf32>, vector<4x64xf32>, vector<4x64xf32> -> vector<4x64xf32>
    %c0_467 = arith.constant 0 : index
    %c0_468 = arith.constant 0 : index
    %313 = vector.load %arg6[%c0_467, %c0_468] : memref<64x256xf32, #tpu.memory_space<vmem>>, vector<64x256xf32>
    %cst_469 = arith.constant dense<0.000000e+00> : vector<4x256xf32>
    %314 = tpu.matmul %312, %313, %cst_469 {dimension_numbers = #tpu.dot_dimension_numbers<[1], [0], [0], [1], [0, 0, 1, 1], [], []>} : vector<4x64xf32>, vector<64x256xf32>, vector<4x256xf32> -> vector<4x256xf32>
    %c0_470 = arith.constant 0 : index
    %c0_471 = arith.constant 0 : index
    %c0_472 = arith.constant 0 : index
    %315 = vector.load %arg7[%c0_470, %c0_471, %c0_472] : memref<1x4x256xf32, #tpu.memory_space<vmem>>, vector<1x4x256xf32>
    %316 = vector.shape_cast %315 : vector<1x4x256xf32> to vector<4x256xf32>
    %317 = vector.shape_cast %314 : vector<4x256xf32> to vector<1x4x256xf32>
    tpu.vector_store %arg7[%c0_470, %c0_471, %c0_472], %317 {strides = array<i32>} : memref<1x4x256xf32, #tpu.memory_space<vmem>>, vector<1x4x256xf32>,
    return
  }
  func.func @transform_0(%arg0: i32) -> (i32, i32, i32, i32) {
    %c0_i32 = arith.constant 0 : i32
    %c0_i32_0 = arith.constant 0 : i32
    %c0_i32_1 = arith.constant 0 : i32
    %c0_i32_2 = arith.constant 0 : i32
    return %arg0, %c0_i32, %c0_i32_0, %c0_i32_1 : i32, i32, i32, i32
  }
  func.func @transform_1(%arg0: i32) -> (i32, i32) {
    %c0_i32 = arith.constant 0 : i32
    %c0_i32_0 = arith.constant 0 : i32
    %c0_i32_1 = arith.constant 0 : i32
    return %c0_i32, %c0_i32_0 : i32, i32
  }
  func.func @transform_2(%arg0: i32) -> (i32, i32) {
    %c0_i32 = arith.constant 0 : i32
    %c0_i32_0 = arith.constant 0 : i32
    %c0_i32_1 = arith.constant 0 : i32
    return %c0_i32, %c0_i32_0 : i32, i32
  }
  func.func @transform_3(%arg0: i32) -> (i32, i32) {
    %c0_i32 = arith.constant 0 : i32
    %c0_i32_0 = arith.constant 0 : i32
    %c0_i32_1 = arith.constant 0 : i32
    return %c0_i32, %c0_i32_0 : i32, i32
  }
  func.func @transform_4(%arg0: i32) -> (i32, i32, i32) {
    %c0_i32 = arith.constant 0 : i32
    %c0_i32_0 = arith.constant 0 : i32
    %c0_i32_1 = arith.constant 0 : i32
    %c0_i32_2 = arith.constant 0 : i32
    return %c0_i32, %c0_i32_0, %c0_i32_1 : i32, i32, i32
  }
  func.func @transform_5(%arg0: i32) -> (i32, i32) {
    %c0_i32 = arith.constant 0 : i32
    %c0_i32_0 = arith.constant 0 : i32
    %c0_i32_1 = arith.constant 0 : i32
    return %c0_i32, %c0_i32_0 : i32, i32
  }
  func.func @transform_6(%arg0: i32) -> (i32, i32, i32) {
    %c0_i32 = arith.constant 0 : i32
    %c0_i32_0 = arith.constant 0 : i32
    %c0_i32_1 = arith.constant 0 : i32
    return %arg0, %c0_i32, %c0_i32_0 : i32, i32, i32
  }
}

</mosaic_0001>

<llo_original>
// kernel: gcn_channel_forward.1
$region0: #{gcn_channel_forward.1}
  #allocation0 [shape = 'u32[]', space=smem, size = 0x4, offset = 0x4, fixed_abs, tag = 'smem constant byte address 0x4 - core index']
  #allocation1 [shape = 'u32[144,128]{1,0:T(1,128)}', space=vmem, size = 0x12000, scoped, tag = 'internal scratch']
  #allocation2 [shape = 'f32[36,64]{1,0:T(8,128)}', space=vmem, size = 0x5000, scoped, tag = 'scratch operand']
  #allocation3 [shape = 'f32[6,66]{1,0:T(8,128)}', space=vmem, size = 0x1000, scoped, tag = 'scratch operand']
  %s0 = inlined_call_operand.vmem [shape: f32[2,16,9,9], index: 0, kind: input, shape index: {}]
  %s1 = inlined_call_operand.vmem [shape: f32[4,36], index: 1, kind: input, shape index: {}]
  %s2 = inlined_call_operand.vmem [shape: f32[4,1], index: 2, kind: input, shape index: {}]
  %s3 = inlined_call_operand.vmem [shape: f32[64,64], index: 3, kind: input, shape index: {}]
  %s4 = inlined_call_operand.vmem [shape: f32[3,4,4], index: 4, kind: input, shape index: {}]
  %s5 = inlined_call_operand.vmem [shape: f32[64,256], index: 5, kind: input, shape index: {}]
  %s6 = inlined_call_operand.vmem [shape: f32[2,4,256], index: 6, kind: output, shape index: {}]
  %s7 = sld [smem:[#allocation0]]
  $region57: #{gcn_channel_forward.1} parent=0
    _
  %s9 = ssub.s32 1, %s7
  %s10 = scalar_select 0, %s9, %s7
  loop: start=0, step=1, limit=4
  $region2: #{gcn_channel_forward.1} parent=0 // loop_pre_header
    _
  $region3: #{gcn_channel_forward.1} parent=0 // loop_header
    %s12 = sphi 0, %s16
    %p13 = scmp.ge.s32.totalorder %s12, 4
    %s22 = sphi 0, %s24
    %s25 = sphi 0, %s22
    %s26 = sphi 0, %s25
    %s42 = sphi 0, %s26
    %s46 = sphi 0, %s46
    %s48 = sphi 0, %s46
    %s49 = sphi 0, %s48
    %s63 = sphi 0, %s49
    %s67 = sphi 0, %s67
    %s69 = sphi 0, %s67
    %s70 = sphi 0, %s69
    %s84 = sphi 0, %s70
    %s88 = sphi 0, %s88
    %s90 = sphi 0, %s88
    %s91 = sphi 0, %s90
    %s105 = sphi 0, %s91
    %s109 = sphi 0, %s109
    %s111 = sphi 0, %s109
    %s112 = sphi 0, %s111
    %s126 = sphi 0, %s112
    %s130 = sphi 0, %s130
    %s132 = sphi 0, %s130
    %s133 = sphi 0, %s132
    %s147 = sphi 0, %s133
    %s153 = sphi 0, %s155
    %s156 = sphi 0, %s153
    %s157 = sphi 0, %s156
    %s173 = sphi 0, %s157
  $region4: #{gcn_channel_forward.1} parent=0 // loop_header_branch
    %15 = sbr.rel (%p13) target = $region8
  $region5: #{gcn_channel_forward.1} parent=0 // loop_body
    %s17 = ssub.s32 %s12, 1
    %s18 = ssub.s32 %s12, 2
    %s19 = sadd.s32 %s12, 1
    %s20 = ssub.s32 %s12, %s19
    %p21 = scmp.eq.s32.totalorder %s20, 0
    %s23 = sadd.s32 %s22, 1
    %s24 = scalar_select %p21, %s22, %s23
    %p27 = pneg %p21
    %p28 = scmp.eq.s32.totalorder %s12, 1
    %p29 = por %p27, %p28
    %p30 = scmp.ne.s32.totalorder %s22, %s25
    %p31 = scmp.eq.s32.totalorder %s12, 0
    %p32 = por %p30, %p31
    %p33 = scmp.ne.s32.totalorder %s22, %s25
    %p34 = scmp.eq.s32.totalorder %s17, 1
    %p35 = por %p33, %p34
    %p36 = scmp.ne.s32.totalorder %s25, %s26
    %p37 = scmp.eq.s32.totalorder %s17, 0
    %p38 = por %p36, %p37
    %p39 = scmp.ne.s32.totalorder %s25, %s26
    %p40 = scmp.eq.s32.totalorder %s18, 1
    %p41 = por %p39, %p40
    %p43 = scmp.ne.s32.totalorder %s26, %s42
    %p44 = scmp.eq.s32.totalorder %s18, 0
    %p45 = por %p43, %p44
    %s47 = sadd.s32 %s46, 1
    %p50 = scmp.eq.s32.totalorder %s12, 1
    %p51 = scmp.ne.s32.totalorder %s46, %s48
    %p52 = scmp.eq.s32.totalorder %s12, 0
    %p53 = por %p51, %p52
    %p54 = scmp.ne.s32.totalorder %s46, %s48
    %p55 = scmp.eq.s32.totalorder %s17, 1
    %p56 = por %p54, %p55
    %p57 = scmp.ne.s32.totalorder %s48, %s49
    %p58 = scmp.eq.s32.totalorder %s17, 0
    %p59 = por %p57, %p58
    %p60 = scmp.ne.s32.totalorder %s48, %s49
    %p61 = scmp.eq.s32.totalorder %s18, 1
    %p62 = por %p60, %p61
    %p64 = scmp.ne.s32.totalorder %s49, %s63
    %p65 = scmp.eq.s32.totalorder %s18, 0
    %p66 = por %p64, %p65
    %s68 = sadd.s32 %s67, 1
    %p71 = scmp.eq.s32.totalorder %s12, 1
    %p72 = scmp.ne.s32.totalorder %s67, %s69
    %p73 = scmp.eq.s32.totalorder %s12, 0
    %p74 = por %p72, %p73
    %p75 = scmp.ne.s32.totalorder %s67, %s69
    %p76 = scmp.eq.s32.totalorder %s17, 1
    %p77 = por %p75, %p76
    %p78 = scmp.ne.s32.totalorder %s69, %s70
    %p79 = scmp.eq.s32.totalorder %s17, 0
    %p80 = por %p78, %p79
    %p81 = scmp.ne.s32.totalorder %s69, %s70
    %p82 = scmp.eq.s32.totalorder %s18, 1
    %p83 = por %p81, %p82
    %p85 = scmp.ne.s32.totalorder %s70, %s84
    %p86 = scmp.eq.s32.totalorder %s18, 0
    %p87 = por %p85, %p86
    %s89 = sadd.s32 %s88, 1
    %p92 = scmp.eq.s32.totalorder %s12, 1
    %p93 = scmp.ne.s32.totalorder %s88, %s90
    %p94 = scmp.eq.s32.totalorder %s12, 0
    %p95 = por %p93, %p94
    %p96 = scmp.ne.s32.totalorder %s88, %s90
    %p97 = scmp.eq.s32.totalorder %s17, 1
    %p98 = por %p96, %p97
    %p99 = scmp.ne.s32.totalorder %s90, %s91
    %p100 = scmp.eq.s32.totalorder %s17, 0
    %p101 = por %p99, %p100
    %p102 = scmp.ne.s32.totalorder %s90, %s91
    %p103 = scmp.eq.s32.totalorder %s18, 1
    %p104 = por %p102, %p103
    %p106 = scmp.ne.s32.totalorder %s91, %s105
    %p107 = scmp.eq.s32.totalorder %s18, 0
    %p108 = por %p106, %p107
    %s110 = sadd.s32 %s109, 1
    %p113 = scmp.eq.s32.totalorder %s12, 1
    %p114 = scmp.ne.s32.totalorder %s109, %s111
    %p115 = scmp.eq.s32.totalorder %s12, 0
    %p116 = por %p114, %p115
    %p117 = scmp.ne.s32.totalorder %s109, %s111
    %p118 = scmp.eq.s32.totalorder %s17, 1
    %p119 = por %p117, %p118
    %p120 = scmp.ne.s32.totalorder %s111, %s112
    %p121 = scmp.eq.s32.totalorder %s17, 0
    %p122 = por %p120, %p121
    %p123 = scmp.ne.s32.totalorder %s111, %s112
    %p124 = scmp.eq.s32.totalorder %s18, 1
    %p125 = por %p123, %p124
    %p127 = scmp.ne.s32.totalorder %s112, %s126
    %p128 = scmp.eq.s32.totalorder %s18, 0
    %p129 = por %p127, %p128
    %s131 = sadd.s32 %s130, 1
    %p134 = scmp.eq.s32.totalorder %s12, 1
    %p135 = scmp.ne.s32.totalorder %s130, %s132
    %p136 = scmp.eq.s32.totalorder %s12, 0
    %p137 = por %p135, %p136
    %p138 = scmp.ne.s32.totalorder %s130, %s132
    %p139 = scmp.eq.s32.totalorder %s17, 1
    %p140 = por %p138, %p139
    %p141 = scmp.ne.s32.totalorder %s132, %s133
    %p142 = scmp.eq.s32.totalorder %s17, 0
    %p143 = por %p141, %p142
    %p144 = scmp.ne.s32.totalorder %s132, %s133
    %p145 = scmp.eq.s32.totalorder %s18, 1
    %p146 = por %p144, %p145
    %p148 = scmp.ne.s32.totalorder %s133, %s147
    %p149 = scmp.eq.s32.totalorder %s18, 0
    %p150 = por %p148, %p149
    %s151 = ssub.s32 %s12, %s19
    %p152 = scmp.eq.s32.totalorder %s151, 0
    %s154 = sadd.s32 %s153, 1
    %s155 = scalar_select %p152, %s153, %s154
    %p158 = pneg %p152
    %p159 = scmp.eq.s32.totalorder %s12, 1
    %p160 = por %p158, %p159
    %p161 = scmp.ne.s32.totalorder %s153, %s156
    %p162 = scmp.eq.s32.totalorder %s12, 0
    %p163 = por %p161, %p162
    %p164 = scmp.ne.s32.totalorder %s153, %s156
    %p165 = scmp.eq.s32.totalorder %s17, 1
    %p166 = por %p164, %p165
    %p167 = scmp.ne.s32.totalorder %s156, %s157
    %p168 = scmp.eq.s32.totalorder %s17, 0
    %p169 = por %p167, %p168
    %p170 = scmp.ne.s32.totalorder %s156, %s157
    %p171 = scmp.eq.s32.totalorder %s18, 1
    %p172 = por %p170, %p171
    %p174 = scmp.ne.s32.totalorder %s157, %s173
    %p175 = scmp.eq.s32.totalorder %s18, 0
    %p176 = por %p174, %p175
    %p177 = scmp.le.s32.totalorder 1, %s12
    %p178 = scmp.lt.s32.totalorder %s12, 3
    %p179 = pnand %p177, %p178
    %p180 = pneg %p179
    // Predicated region
    $region9: #{gcn_channel_forward.1} parent=5 // pred_check
      _
    $region10: #{gcn_channel_forward.1} parent=5 // pred_check_branch
      %182 = sbr.rel (%p179) target = $region12
    $region11: #{gcn_channel_forward.1} parent=5 // pred_region
      %s183 = ssub.s32 %s12, 1
      // Predicated region
      $region13: #{gcn_channel_forward.1} parent=11 // pred_check
        %p184 = pneg %p59
      $region14: #{gcn_channel_forward.1} parent=11 // pred_check_branch
        %186 = sbr.rel (%p184) target = $region16
      $region15: #{gcn_channel_forward.1} parent=11 // pred_region
        _
      $region16: #{gcn_channel_forward.1} parent=11 // pred_fallthru
        _
      // Predicated region
      $region17: #{gcn_channel_forward.1} parent=11 // pred_check
        %p187 = pneg %p80
      $region18: #{gcn_channel_forward.1} parent=11 // pred_check_branch
        %189 = sbr.rel (%p187) target = $region20
      $region19: #{gcn_channel_forward.1} parent=11 // pred_region
        _
      $region20: #{gcn_channel_forward.1} parent=11 // pred_fallthru
        _
      // Predicated region
      $region21: #{gcn_channel_forward.1} parent=11 // pred_check
        %p190 = pneg %p101
      $region22: #{gcn_channel_forward.1} parent=11 // pred_check_branch
        %192 = sbr.rel (%p190) target = $region24
      $region23: #{gcn_channel_forward.1} parent=11 // pred_region
        _
      $region24: #{gcn_channel_forward.1} parent=11 // pred_fallthru
        _
      // Predicated region
      $region25: #{gcn_channel_forward.1} parent=11 // pred_check
        %p193 = pneg %p122
      $region26: #{gcn_channel_forward.1} parent=11 // pred_check_branch
        %195 = sbr.rel (%p193) target = $region28
      $region27: #{gcn_channel_forward.1} parent=11 // pred_region
        _
      $region28: #{gcn_channel_forward.1} parent=11 // pred_fallthru
        _
      // Predicated region
      $region29: #{gcn_channel_forward.1} parent=11 // pred_check
        %p196 = pneg %p143
      $region30: #{gcn_channel_forward.1} parent=11 // pred_check_branch
        %198 = sbr.rel (%p196) target = $region32
      $region31: #{gcn_channel_forward.1} parent=11 // pred_region
        _
      $region32: #{gcn_channel_forward.1} parent=11 // pred_fallthru
        _
    $region12: #{gcn_channel_forward.1} parent=5 // pred_fallthru
      _
    %p199 = scmp.lt.s32.totalorder %s12, 2
    // Predicated region
    $region33: #{gcn_channel_forward.1} parent=5 // pred_check
      %p200 = pneg %p199
    $region34: #{gcn_channel_forward.1} parent=5 // pred_check_branch
      %202 = sbr.rel (%p200) target = $region36
    $region35: #{gcn_channel_forward.1} parent=5 // pred_region
      // Predicated region
      $region37: #{gcn_channel_forward.1} parent=35 // pred_check
        %p203 = pneg %p32
      $region38: #{gcn_channel_forward.1} parent=35 // pred_check_branch
        %205 = sbr.rel (%p203) target = $region40
      $region39: #{gcn_channel_forward.1} parent=35 // pred_region
        %p206 = scmp.lt.s32.totalorder %s12, 1
        %s207 = scalar_select %p206, %s12, 1
        %s208 = smul.addr %s207, 32
        %s209 = smul.addr %s208, 8
        %s210 = scalar_lea.vmem %s0, %s209
      $region40: #{gcn_channel_forward.1} parent=35 // pred_fallthru
        _
    $region36: #{gcn_channel_forward.1} parent=5 // pred_fallthru
      _
    %p211 = scmp.le.s32.totalorder 1, %s12
    %p212 = scmp.lt.s32.totalorder %s12, 3
    %p213 = pnand %p211, %p212
    %p214 = pneg %p213
    // Predicated region
    $region41: #{gcn_channel_forward.1} parent=5 // pred_check
      _
    $region42: #{gcn_channel_forward.1} parent=5 // pred_check_branch
      %216 = sbr.rel (%p213) target = $region44
    $region43: #{gcn_channel_forward.1} parent=5 // pred_region
      %s217 = ssub.s32 %s12, 1
      %p218 = scmp.lt.s32.totalorder %s17, 1
      %s219 = scalar_select %p218, %s17, 1
      %s220 = smul.addr %s219, 32
      %s221 = smul.addr %s220, 8
      %s222 = scalar_lea.vmem %s0, %s221
      %p223 = pneg %p38
      %p224 = pneg %p35
      %p225 = pneg %p59
      %p226 = pneg %p56
      %p227 = pneg %p80
      %p228 = pneg %p77
      %p229 = pneg %p101
      %p230 = pneg %p98
      %p231 = pneg %p122
      %p232 = pneg %p119
      %p233 = pneg %p143
      %p234 = pneg %p140
      %p235 = pneg %p169
      %p236 = pneg %p166
      %p237 = scmp.lt.s32.totalorder %s17, 1
      %s238 = scalar_select %p237, %s17, 1
      %s239 = smul.addr %s238, 2
      %s240 = smul.addr %s239, 4
      %s241 = scalar_lea.vmem %s6, %s240
      %p242 = scmp.lt.s32.totalorder %s17, 1
      %s243 = scalar_select %p242, %s17, 1
      %s244 = smul.addr %s243, 32
      %s245 = smul.addr %s244, 8
      %s246 = scalar_lea.vmem %s0, %s245
      %p247 = scmp.lt.s32.totalorder %s17, 1
      %s248 = scalar_select %p247, %s17, 1
      %s249 = smul.addr %s248, 2
      %s250 = smul.addr %s249, 4
      %s251 = scalar_lea.vmem %s6, %s250
      %v252 = vld [vmem:[%s246] sm:$0x1]
      %v253 = vld [vmem:[%s246 + $0x10] sm:$0x1]
      %v254 = vld [vmem:[%s246 + $0x20] sm:$0x1]
      %v255 = vld [vmem:[%s246 + $0x30] sm:$0x1]
      %v260 = vrot.slane %v253, 7
      %vm261 = vcmask 1041409
      %v262 = vsel %vm261, %v260, %v252
      %v263 = vrot.slane %v254, 6
      %vm264 = vcmask 1042434
      %v265 = vsel %vm264, %v263, %v262
      %v266 = vrot.slane %v255, 5
      %vm267 = vcmask 1043459
      %v268 = vsel %vm267, %v266, %v265
      %vm270 = vcmask 60416
      %271 = vst.msk [vmem:[#allocation2] sm:$0xf] %vm270, %v268
      %v272 = vld [vmem:[%s246 + $0x1] sm:$0x1]
      %v273 = vld [vmem:[%s246 + $0x11] sm:$0x1]
      %v274 = vld [vmem:[%s246 + $0x21] sm:$0x1]
      %v275 = vld [vmem:[%s246 + $0x31] sm:$0x1]
      %v280 = vrot.slane %v273, 7
      %v281 = vsel %vm261, %v280, %v272
      %v282 = vrot.slane %v274, 6
      %v283 = vsel %vm264, %v282, %v281
      %v284 = vrot.slane %v275, 5
      %v285 = vsel %vm267, %v284, %v283
      %286 = vrot.lane.b32.xlu0 %v285, 8
      %v287 = vpop.permute.xlu0 %286
      %vm289 = vcmask 126016
      %290 = vst.msk [vmem:[#allocation2] sm:$0xf] %vm289, %v287
      %v291 = vld [vmem:[%s246 + $0x2] sm:$0x1]
      %v292 = vld [vmem:[%s246 + $0x12] sm:$0x1]
      %v293 = vld [vmem:[%s246 + $0x22] sm:$0x1]
      %v294 = vld [vmem:[%s246 + $0x32] sm:$0x1]
      %v299 = vrot.slane %v292, 7
      %v300 = vsel %vm261, %v299, %v291
      %v301 = vrot.slane %v293, 6
      %v302 = vsel %vm264, %v301, %v300
      %v303 = vrot.slane %v294, 5
      %v304 = vsel %vm267, %v303, %v302
      %305 = vrot.lane.b32.xlu0 %v304, 16
      %v306 = vpop.permute.xlu0 %305
      %vm308 = vcmask 191616
      %309 = vst.msk [vmem:[#allocation2] sm:$0xf] %vm308, %v306
      %v310 = vld [vmem:[%s246 + $0x3] sm:$0x1]
      %v311 = vld [vmem:[%s246 + $0x13] sm:$0x1]
      %v312 = vld [vmem:[%s246 + $0x23] sm:$0x1]
      %v313 = vld [vmem:[%s246 + $0x33] sm:$0x1]
      %v318 = vrot.slane %v311, 7
      %v319 = vsel %vm261, %v318, %v310
      %v320 = vrot.slane %v312, 6
      %v321 = vsel %vm264, %v320, %v319
      %v322 = vrot.slane %v313, 5
      %v323 = vsel %vm267, %v322, %v321
      %324 = vrot.lane.b32.xlu0 %v323, 24
      %v325 = vpop.permute.xlu0 %324
      %vm327 = vcmask 257216
      %328 = vst.msk [vmem:[#allocation2] sm:$0xf] %vm327, %v325
      %v329 = vld [vmem:[%s246 + $0x4] sm:$0x1]
      %v330 = vld [vmem:[%s246 + $0x14] sm:$0x1]
      %v331 = vld [vmem:[%s246 + $0x24] sm:$0x1]
      %v332 = vld [vmem:[%s246 + $0x34] sm:$0x1]
      %v337 = vrot.slane %v330, 7
      %v338 = vsel %vm261, %v337, %v329
      %v339 = vrot.slane %v331, 6
      %v340 = vsel %vm264, %v339, %v338
      %v341 = vrot.slane %v332, 5
      %v342 = vsel %vm267, %v341, %v340
      %343 = vrot.lane.b32.xlu0 %v342, 32
      %v344 = vpop.permute.xlu0 %343
      %vm346 = vcmask 322816
      %347 = vst.msk [vmem:[#allocation2] sm:$0xf] %vm346, %v344
      %v348 = vld [vmem:[%s246 + $0x5] sm:$0x1]
      %v349 = vld [vmem:[%s246 + $0x15] sm:$0x1]
      %v350 = vld [vmem:[%s246 + $0x25] sm:$0x1]
      %v351 = vld [vmem:[%s246 + $0x35] sm:$0x1]
      %v356 = vrot.slane %v349, 7
      %v357 = vsel %vm261, %v356, %v348
      %v358 = vrot.slane %v350, 6
      %v359 = vsel %vm264, %v358, %v357
      %v360 = vrot.slane %v351, 5
      %v361 = vsel %vm267, %v360, %v359
      %362 = vrot.lane.b32.xlu0 %v361, 40
      %v363 = vpop.permute.xlu0 %362
      %vm365 = vcmask 388416
      %366 = vst.msk [vmem:[#allocation2] sm:$0xf] %vm365, %v363
      %v367 = vld [vmem:[%s246 + $0x6] sm:$0x1]
      %v368 = vld [vmem:[%s246 + $0x16] sm:$0x1]
      %v369 = vld [vmem:[%s246 + $0x26] sm:$0x1]
      %v370 = vld [vmem:[%s246 + $0x36] sm:$0x1]
      %v375 = vrot.slane %v368, 7
      %v376 = vsel %vm261, %v375, %v367
      %v377 = vrot.slane %v369, 6
      %v378 = vsel %vm264, %v377, %v376
      %v379 = vrot.slane %v370, 5
      %v380 = vsel %vm267, %v379, %v378
      %381 = vrot.lane.b32.xlu0 %v380, 48
      %v382 = vpop.permute.xlu0 %381
      %vm384 = vcmask 454016
      %385 = vst.msk [vmem:[#allocation2] sm:$0xf] %vm384, %v382
      %v386 = vld [vmem:[%s246 + $0x7] sm:$0x1]
      %v387 = vld [vmem:[%s246 + $0x17] sm:$0x1]
      %v388 = vld [vmem:[%s246 + $0x27] sm:$0x1]
      %v389 = vld [vmem:[%s246 + $0x37] sm:$0x1]
      %v394 = vrot.slane %v387, 7
      %v395 = vsel %vm261, %v394, %v386
      %v396 = vrot.slane %v388, 6
      %v397 = vsel %vm264, %v396, %v395
      %v398 = vrot.slane %v389, 5
      %v399 = vsel %vm267, %v398, %v397
      %400 = vrot.lane.b32.xlu0 %v399, 56
      %v401 = vpop.permute.xlu0 %400
      %vm403 = vcmask 519616
      %404 = vst.msk [vmem:[#allocation2] sm:$0xf] %vm403, %v401
      %s405 = scalar_lea.vmem %s246, 64
      %v406 = vld [vmem:[%s405] sm:$0x1]
      %v407 = vld [vmem:[%s405 + $0x10] sm:$0x1]
      %v408 = vld [vmem:[%s405 + $0x20] sm:$0x1]
      %v409 = vld [vmem:[%s405 + $0x30] sm:$0x1]
      %v414 = vrot.slane %v407, 7
      %v415 = vsel %vm261, %v414, %v406
      %v416 = vrot.slane %v408, 6
      %v417 = vsel %vm264, %v416, %v415
      %v418 = vrot.slane %v409, 5
      %v419 = vsel %vm267, %v418, %v417
      %421 = vst.msk [vmem:[#allocation2 + $0x4] sm:$0xf] %vm270, %v419
      %v422 = vld [vmem:[%s405 + $0x1] sm:$0x1]
      %v423 = vld [vmem:[%s405 + $0x11] sm:$0x1]
      %v424 = vld [vmem:[%s405 + $0x21] sm:$0x1]
      %v425 = vld [vmem:[%s405 + $0x31] sm:$0x1]
      %v430 = vrot.slane %v423, 7
      %v431 = vsel %vm261, %v430, %v422
      %v432 = vrot.slane %v424, 6
      %v433 = vsel %vm264, %v432, %v431
      %v434 = vrot.slane %v425, 5
      %v435 = vsel %vm267, %v434, %v433
      %436 = vrot.lane.b32.xlu0 %v435, 8
      %v437 = vpop.permute.xlu0 %436
      %439 = vst.msk [vmem:[#allocation2 + $0x4] sm:$0xf] %vm289, %v437
      %v440 = vld [vmem:[%s405 + $0x2] sm:$0x1]
      %v441 = vld [vmem:[%s405 + $0x12] sm:$0x1]
      %v442 = vld [vmem:[%s405 + $0x22] sm:$0x1]
      %v443 = vld [vmem:[%s405 + $0x32] sm:$0x1]
      %v448 = vrot.slane %v441, 7
      %v449 = vsel %vm261, %v448, %v440
      %v450 = vrot.slane %v442, 6
      %v451 = vsel %vm264, %v450, %v449
      %v452 = vrot.slane %v443, 5
      %v453 = vsel %vm267, %v452, %v451
      %454 = vrot.lane.b32.xlu0 %v453, 16
      %v455 = vpop.permute.xlu0 %454
      %457 = vst.msk [vmem:[#allocation2 + $0x4] sm:$0xf] %vm308, %v455
      %v458 = vld [vmem:[%s405 + $0x3] sm:$0x1]
      %v459 = vld [vmem:[%s405 + $0x13] sm:$0x1]
      %v460 = vld [vmem:[%s405 + $0x23] sm:$0x1]
      %v461 = vld [vmem:[%s405 + $0x33] sm:$0x1]
      %v466 = vrot.slane %v459, 7
      %v467 = vsel %vm261, %v466, %v458
      %v468 = vrot.slane %v460, 6
      %v469 = vsel %vm264, %v468, %v467
      %v470 = vrot.slane %v461, 5
      %v471 = vsel %vm267, %v470, %v469
      %472 = vrot.lane.b32.xlu0 %v471, 24
      %v473 = vpop.permute.xlu0 %472
      %475 = vst.msk [vmem:[#allocation2 + $0x4] sm:$0xf] %vm327, %v473
      %v476 = vld [vmem:[%s405 + $0x4] sm:$0x1]
      %v477 = vld [vmem:[%s405 + $0x14] sm:$0x1]
      %v478 = vld [vmem:[%s405 + $0x24] sm:$0x1]
      %v479 = vld [vmem:[%s405 + $0x34] sm:$0x1]
      %v484 = vrot.slane %v477, 7
      %v485 = vsel %vm261, %v484, %v476
      %v486 = vrot.slane %v478, 6
      %v487 = vsel %vm264, %v486, %v485
      %v488 = vrot.slane %v479, 5
      %v489 = vsel %vm267, %v488, %v487
      %490 = vrot.lane.b32.xlu0 %v489, 32
      %v491 = vpop.permute.xlu0 %490
      %493 = vst.msk [vmem:[#allocation2 + $0x4] sm:$0xf] %vm346, %v491
      %v494 = vld [vmem:[%s405 + $0x5] sm:$0x1]
      %v495 = vld [vmem:[%s405 + $0x15] sm:$0x1]
      %v496 = vld [vmem:[%s405 + $0x25] sm:$0x1]
      %v497 = vld [vmem:[%s405 + $0x35] sm:$0x1]
      %v502 = vrot.slane %v495, 7
      %v503 = vsel %vm261, %v502, %v494
      %v504 = vrot.slane %v496, 6
      %v505 = vsel %vm264, %v504, %v503
      %v506 = vrot.slane %v497, 5
      %v507 = vsel %vm267, %v506, %v505
      %508 = vrot.lane.b32.xlu0 %v507, 40
      %v509 = vpop.permute.xlu0 %508
      %511 = vst.msk [vmem:[#allocation2 + $0x4] sm:$0xf] %vm365, %v509
      %v512 = vld [vmem:[%s405 + $0x6] sm:$0x1]
      %v513 = vld [vmem:[%s405 + $0x16] sm:$0x1]
      %v514 = vld [vmem:[%s405 + $0x26] sm:$0x1]
      %v515 = vld [vmem:[%s405 + $0x36] sm:$0x1]
      %v520 = vrot.slane %v513, 7
      %v521 = vsel %vm261, %v520, %v512
      %v522 = vrot.slane %v514, 6
      %v523 = vsel %vm264, %v522, %v521
      %v524 = vrot.slane %v515, 5
      %v525 = vsel %vm267, %v524, %v523
      %526 = vrot.lane.b32.xlu0 %v525, 48
      %v527 = vpop.permute.xlu0 %526
      %529 = vst.msk [vmem:[#allocation2 + $0x4] sm:$0xf] %vm384, %v527
      %v530 = vld [vmem:[%s405 + $0x7] sm:$0x1]
      %v531 = vld [vmem:[%s405 + $0x17] sm:$0x1]
      %v532 = vld [vmem:[%s405 + $0x27] sm:$0x1]
      %v533 = vld [vmem:[%s405 + $0x37] sm:$0x1]
      %v538 = vrot.slane %v531, 7
      %v539 = vsel %vm261, %v538, %v530
      %v540 = vrot.slane %v532, 6
      %v541 = vsel %vm264, %v540, %v539
      %v542 = vrot.slane %v533, 5
      %v543 = vsel %vm267, %v542, %v541
      %544 = vrot.lane.b32.xlu0 %v543, 56
      %v545 = vpop.permute.xlu0 %544
      %547 = vst.msk [vmem:[#allocation2 + $0x4] sm:$0xf] %vm403, %v545
      %v548 = vld [vmem:[%s246] sm:$0x1]
      %v549 = vld [vmem:[%s246 + $0x10] sm:$0x1]
      %v550 = vld [vmem:[%s246 + $0x20] sm:$0x1]
      %v551 = vld [vmem:[%s246 + $0x30] sm:$0x1]
      %v556 = vrot.slane %v549, 7
      %v557 = vsel %vm261, %v556, %v548
      %v558 = vrot.slane %v550, 6
      %v559 = vsel %vm264, %v558, %v557
      %v560 = vrot.slane %v551, 5
      %v561 = vsel %vm267, %v560, %v559
      %562 = vrot.lane.b32.xlu0 %v561, 127
      %v563 = vpop.permute.xlu0 %562
      %565 = vst.msk [vmem:[#allocation2 + $0x8] sm:$0xf] %vm270, %v563
      %v566 = vld [vmem:[%s246 + $0x1] sm:$0x1]
      %v567 = vld [vmem:[%s246 + $0x11] sm:$0x1]
      %v568 = vld [vmem:[%s246 + $0x21] sm:$0x1]
      %v569 = vld [vmem:[%s246 + $0x31] sm:$0x1]
      %v574 = vrot.slane %v567, 7
      %v575 = vsel %vm261, %v574, %v566
      %v576 = vrot.slane %v568, 6
      %v577 = vsel %vm264, %v576, %v575
      %v578 = vrot.slane %v569, 5
      %v579 = vsel %vm267, %v578, %v577
      %580 = vrot.lane.b32.xlu0 %v579, 7
      %v581 = vpop.permute.xlu0 %580
      %583 = vst.msk [vmem:[#allocation2 + $0x8] sm:$0xf] %vm289, %v581
      %v584 = vld [vmem:[%s246 + $0x2] sm:$0x1]
      %v585 = vld [vmem:[%s246 + $0x12] sm:$0x1]
      %v586 = vld [vmem:[%s246 + $0x22] sm:$0x1]
      %v587 = vld [vmem:[%s246 + $0x32] sm:$0x1]
      %v592 = vrot.slane %v585, 7
      %v593 = vsel %vm261, %v592, %v584
      %v594 = vrot.slane %v586, 6
      %v595 = vsel %vm264, %v594, %v593
      %v596 = vrot.slane %v587, 5
      %v597 = vsel %vm267, %v596, %v595
      %598 = vrot.lane.b32.xlu0 %v597, 15
      %v599 = vpop.permute.xlu0 %598
      %601 = vst.msk [vmem:[#allocation2 + $0x8] sm:$0xf] %vm308, %v599
      %v602 = vld [vmem:[%s246 + $0x3] sm:$0x1]
      %v603 = vld [vmem:[%s246 + $0x13] sm:$0x1]
      %v604 = vld [vmem:[%s246 + $0x23] sm:$0x1]
      %v605 = vld [vmem:[%s246 + $0x33] sm:$0x1]
      %v610 = vrot.slane %v603, 7
      %v611 = vsel %vm261, %v610, %v602
      %v612 = vrot.slane %v604, 6
      %v613 = vsel %vm264, %v612, %v611
      %v614 = vrot.slane %v605, 5
      %v615 = vsel %vm267, %v614, %v613
      %616 = vrot.lane.b32.xlu0 %v615, 23
      %v617 = vpop.permute.xlu0 %616
      %619 = vst.msk [vmem:[#allocation2 + $0x8] sm:$0xf] %vm327, %v617
      %v620 = vld [vmem:[%s246 + $0x4] sm:$0x1]
      %v621 = vld [vmem:[%s246 + $0x14] sm:$0x1]
      %v622 = vld [vmem:[%s246 + $0x24] sm:$0x1]
      %v623 = vld [vmem:[%s246 + $0x34] sm:$0x1]
      %v628 = vrot.slane %v621, 7
      %v629 = vsel %vm261, %v628, %v620
      %v630 = vrot.slane %v622, 6
      %v631 = vsel %vm264, %v630, %v629
      %v632 = vrot.slane %v623, 5
      %v633 = vsel %vm267, %v632, %v631
      %634 = vrot.lane.b32.xlu0 %v633, 31
      %v635 = vpop.permute.xlu0 %634
      %637 = vst.msk [vmem:[#allocation2 + $0x8] sm:$0xf] %vm346, %v635
      %v638 = vld [vmem:[%s246 + $0x5] sm:$0x1]
      %v639 = vld [vmem:[%s246 + $0x15] sm:$0x1]
      %v640 = vld [vmem:[%s246 + $0x25] sm:$0x1]
      %v641 = vld [vmem:[%s246 + $0x35] sm:$0x1]
      %v646 = vrot.slane %v639, 7
      %v647 = vsel %vm261, %v646, %v638
      %v648 = vrot.slane %v640, 6
      %v649 = vsel %vm264, %v648, %v647
      %v650 = vrot.slane %v641, 5
      %v651 = vsel %vm267, %v650, %v649
      %652 = vrot.lane.b32.xlu0 %v651, 39
      %v653 = vpop.permute.xlu0 %652
      %655 = vst.msk [vmem:[#allocation2 + $0x8] sm:$0xf] %vm365, %v653
      %v656 = vld [vmem:[%s246 + $0x6] sm:$0x1]
      %v657 = vld [vmem:[%s246 + $0x16] sm:$0x1]
      %v658 = vld [vmem:[%s246 + $0x26] sm:$0x1]
      %v659 = vld [vmem:[%s246 + $0x36] sm:$0x1]
      %v664 = vrot.slane %v657, 7
      %v665 = vsel %vm261, %v664, %v656
      %v666 = vrot.slane %v658, 6
      %v667 = vsel %vm264, %v666, %v665
      %v668 = vrot.slane %v659, 5
      %v669 = vsel %vm267, %v668, %v667
      %670 = vrot.lane.b32.xlu0 %v669, 47
      %v671 = vpop.permute.xlu0 %670
      %673 = vst.msk [vmem:[#allocation2 + $0x8] sm:$0xf] %vm384, %v671
      %v674 = vld [vmem:[%s246 + $0x7] sm:$0x1]
      %v675 = vld [vmem:[%s246 + $0x17] sm:$0x1]
      %v676 = vld [vmem:[%s246 + $0x27] sm:$0x1]
      %v677 = vld [vmem:[%s246 + $0x37] sm:$0x1]
      %v682 = vrot.slane %v675, 7
      %v683 = vsel %vm261, %v682, %v674
      %v684 = vrot.slane %v676, 6
      %v685 = vsel %vm264, %v684, %v683
      %v686 = vrot.slane %v677, 5
      %v687 = vsel %vm267, %v686, %v685
      %688 = vrot.lane.b32.xlu0 %v687, 55
      %v689 = vpop.permute.xlu0 %688
      %691 = vst.msk [vmem:[#allocation2 + $0x8] sm:$0xf] %vm403, %v689
      %s692 = scalar_lea.vmem %s246, 128
      %v693 = vld [vmem:[%s692] sm:$0x1]
      %v694 = vld [vmem:[%s692 + $0x10] sm:$0x1]
      %v695 = vld [vmem:[%s692 + $0x20] sm:$0x1]
      %v696 = vld [vmem:[%s692 + $0x30] sm:$0x1]
      %v701 = vrot.slane %v694, 7
      %v702 = vsel %vm261, %v701, %v693
      %v703 = vrot.slane %v695, 6
      %v704 = vsel %vm264, %v703, %v702
      %v705 = vrot.slane %v696, 5
      %v706 = vsel %vm267, %v705, %v704
      %708 = vst.msk [vmem:[#allocation2 + $0xc] sm:$0xf] %vm270, %v706
      %v709 = vld [vmem:[%s692 + $0x1] sm:$0x1]
      %v710 = vld [vmem:[%s692 + $0x11] sm:$0x1]
      %v711 = vld [vmem:[%s692 + $0x21] sm:$0x1]
      %v712 = vld [vmem:[%s692 + $0x31] sm:$0x1]
      %v717 = vrot.slane %v710, 7
      %v718 = vsel %vm261, %v717, %v709
      %v719 = vrot.slane %v711, 6
      %v720 = vsel %vm264, %v719, %v718
      %v721 = vrot.slane %v712, 5
      %v722 = vsel %vm267, %v721, %v720
      %723 = vrot.lane.b32.xlu0 %v722, 8
      %v724 = vpop.permute.xlu0 %723
      %726 = vst.msk [vmem:[#allocation2 + $0xc] sm:$0xf] %vm289, %v724
      %v727 = vld [vmem:[%s692 + $0x2] sm:$0x1]
      %v728 = vld [vmem:[%s692 + $0x12] sm:$0x1]
      %v729 = vld [vmem:[%s692 + $0x22] sm:$0x1]
      %v730 = vld [vmem:[%s692 + $0x32] sm:$0x1]
      %v735 = vrot.slane %v728, 7
      %v736 = vsel %vm261, %v735, %v727
      %v737 = vrot.slane %v729, 6
      %v738 = vsel %vm264, %v737, %v736
      %v739 = vrot.slane %v730, 5
      %v740 = vsel %vm267, %v739, %v738
      %741 = vrot.lane.b32.xlu0 %v740, 16
      %v742 = vpop.permute.xlu0 %741
      %744 = vst.msk [vmem:[#allocation2 + $0xc] sm:$0xf] %vm308, %v742
      %v745 = vld [vmem:[%s692 + $0x3] sm:$0x1]
      %v746 = vld [vmem:[%s692 + $0x13] sm:$0x1]
      %v747 = vld [vmem:[%s692 + $0x23] sm:$0x1]
      %v748 = vld [vmem:[%s692 + $0x33] sm:$0x1]
      %v753 = vrot.slane %v746, 7
      %v754 = vsel %vm261, %v753, %v745
      %v755 = vrot.slane %v747, 6
      %v756 = vsel %vm264, %v755, %v754
      %v757 = vrot.slane %v748, 5
      %v758 = vsel %vm267, %v757, %v756
      %759 = vrot.lane.b32.xlu0 %v758, 24
      %v760 = vpop.permute.xlu0 %759
      %762 = vst.msk [vmem:[#allocation2 + $0xc] sm:$0xf] %vm327, %v760
      %v763 = vld [vmem:[%s692 + $0x4] sm:$0x1]
      %v764 = vld [vmem:[%s692 + $0x14] sm:$0x1]
      %v765 = vld [vmem:[%s692 + $0x24] sm:$0x1]
      %v766 = vld [vmem:[%s692 + $0x34] sm:$0x1]
      %v771 = vrot.slane %v764, 7
      %v772 = vsel %vm261, %v771, %v763
      %v773 = vrot.slane %v765, 6
      %v774 = vsel %vm264, %v773, %v772
      %v775 = vrot.slane %v766, 5
      %v776 = vsel %vm267, %v775, %v774
      %777 = vrot.lane.b32.xlu0 %v776, 32
      %v778 = vpop.permute.xlu0 %777
      %780 = vst.msk [vmem:[#allocation2 + $0xc] sm:$0xf] %vm346, %v778
      %v781 = vld [vmem:[%s692 + $0x5] sm:$0x1]
      %v782 = vld [vmem:[%s692 + $0x15] sm:$0x1]
      %v783 = vld [vmem:[%s692 + $0x25] sm:$0x1]
      %v784 = vld [vmem:[%s692 + $0x35] sm:$0x1]
      %v789 = vrot.slane %v782, 7
      %v790 = vsel %vm261, %v789, %v781
      %v791 = vrot.slane %v783, 6
      %v792 = vsel %vm264, %v791, %v790
      %v793 = vrot.slane %v784, 5
      %v794 = vsel %vm267, %v793, %v792
      %795 = vrot.lane.b32.xlu0 %v794, 40
      %v796 = vpop.permute.xlu0 %795
      %798 = vst.msk [vmem:[#allocation2 + $0xc] sm:$0xf] %vm365, %v796
      %v799 = vld [vmem:[%s692 + $0x6] sm:$0x1]
      %v800 = vld [vmem:[%s692 + $0x16] sm:$0x1]
      %v801 = vld [vmem:[%s692 + $0x26] sm:$0x1]
      %v802 = vld [vmem:[%s692 + $0x36] sm:$0x1]
      %v807 = vrot.slane %v800, 7
      %v808 = vsel %vm261, %v807, %v799
      %v809 = vrot.slane %v801, 6
      %v810 = vsel %vm264, %v809, %v808
      %v811 = vrot.slane %v802, 5
      %v812 = vsel %vm267, %v811, %v810
      %813 = vrot.lane.b32.xlu0 %v812, 48
      %v814 = vpop.permute.xlu0 %813
      %816 = vst.msk [vmem:[#allocation2 + $0xc] sm:$0xf] %vm384, %v814
      %v817 = vld [vmem:[%s692 + $0x7] sm:$0x1]
      %v818 = vld [vmem:[%s692 + $0x17] sm:$0x1]
      %v819 = vld [vmem:[%s692 + $0x27] sm:$0x1]
      %v820 = vld [vmem:[%s692 + $0x37] sm:$0x1]
      %v825 = vrot.slane %v818, 7
      %v826 = vsel %vm261, %v825, %v817
      %v827 = vrot.slane %v819, 6
      %v828 = vsel %vm264, %v827, %v826
      %v829 = vrot.slane %v820, 5
      %v830 = vsel %vm267, %v829, %v828
      %831 = vrot.lane.b32.xlu0 %v830, 56
      %v832 = vpop.permute.xlu0 %831
      %834 = vst.msk [vmem:[#allocation2 + $0xc] sm:$0xf] %vm403, %v832
      %s835 = scalar_lea.vmem %s246, 192
      %v836 = vld [vmem:[%s835] sm:$0x1]
      %v837 = vld [vmem:[%s835 + $0x10] sm:$0x1]
      %v838 = vld [vmem:[%s835 + $0x20] sm:$0x1]
      %v839 = vld [vmem:[%s835 + $0x30] sm:$0x1]
      %v844 = vrot.slane %v837, 7
      %v845 = vsel %vm261, %v844, %v836
      %v846 = vrot.slane %v838, 6
      %v847 = vsel %vm264, %v846, %v845
      %v848 = vrot.slane %v839, 5
      %v849 = vsel %vm267, %v848, %v847
      %851 = vst.msk [vmem:[#allocation2 + $0x10] sm:$0xf] %vm270, %v849
      %v852 = vld [vmem:[%s835 + $0x1] sm:$0x1]
      %v853 = vld [vmem:[%s835 + $0x11] sm:$0x1]
      %v854 = vld [vmem:[%s835 + $0x21] sm:$0x1]
      %v855 = vld [vmem:[%s835 + $0x31] sm:$0x1]
      %v860 = vrot.slane %v853, 7
      %v861 = vsel %vm261, %v860, %v852
      %v862 = vrot.slane %v854, 6
      %v863 = vsel %vm264, %v862, %v861
      %v864 = vrot.slane %v855, 5
      %v865 = vsel %vm267, %v864, %v863
      %866 = vrot.lane.b32.xlu0 %v865, 8
      %v867 = vpop.permute.xlu0 %866
      %869 = vst.msk [vmem:[#allocation2 + $0x10] sm:$0xf] %vm289, %v867
      %v870 = vld [vmem:[%s835 + $0x2] sm:$0x1]
      %v871 = vld [vmem:[%s835 + $0x12] sm:$0x1]
      %v872 = vld [vmem:[%s835 + $0x22] sm:$0x1]
      %v873 = vld [vmem:[%s835 + $0x32] sm:$0x1]
      %v878 = vrot.slane %v871, 7
      %v879 = vsel %vm261, %v878, %v870
      %v880 = vrot.slane %v872, 6
      %v881 = vsel %vm264, %v880, %v879
      %v882 = vrot.slane %v873, 5
      %v883 = vsel %vm267, %v882, %v881
      %884 = vrot.lane.b32.xlu0 %v883, 16
      %v885 = vpop.permute.xlu0 %884
      %887 = vst.msk [vmem:[#allocation2 + $0x10] sm:$0xf] %vm308, %v885
      %v888 = vld [vmem:[%s835 + $0x3] sm:$0x1]
      %v889 = vld [vmem:[%s835 + $0x13] sm:$0x1]
      %v890 = vld [vmem:[%s835 + $0x23] sm:$0x1]
      %v891 = vld [vmem:[%s835 + $0x33] sm:$0x1]
      %v896 = vrot.slane %v889, 7
      %v897 = vsel %vm261, %v896, %v888
      %v898 = vrot.slane %v890, 6
      %v899 = vsel %vm264, %v898, %v897
      %v900 = vrot.slane %v891, 5
      %v901 = vsel %vm267, %v900, %v899
      %902 = vrot.lane.b32.xlu0 %v901, 24
      %v903 = vpop.permute.xlu0 %902
      %905 = vst.msk [vmem:[#allocation2 + $0x10] sm:$0xf] %vm327, %v903
      %v906 = vld [vmem:[%s835 + $0x4] sm:$0x1]
      %v907 = vld [vmem:[%s835 + $0x14] sm:$0x1]
      %v908 = vld [vmem:[%s835 + $0x24] sm:$0x1]
      %v909 = vld [vmem:[%s835 + $0x34] sm:$0x1]
      %v914 = vrot.slane %v907, 7
      %v915 = vsel %vm261, %v914, %v906
      %v916 = vrot.slane %v908, 6
      %v917 = vsel %vm264, %v916, %v915
      %v918 = vrot.slane %v909, 5
      %v919 = vsel %vm267, %v918, %v917
      %920 = vrot.lane.b32.xlu0 %v919, 32
      %v921 = vpop.permute.xlu0 %920
      %923 = vst.msk [vmem:[#allocation2 + $0x10] sm:$0xf] %vm346, %v921
      %v924 = vld [vmem:[%s835 + $0x5] sm:$0x1]
      %v925 = vld [vmem:[%s835 + $0x15] sm:$0x1]
      %v926 = vld [vmem:[%s835 + $0x25] sm:$0x1]
      %v927 = vld [vmem:[%s835 + $0x35] sm:$0x1]
      %v932 = vrot.slane %v925, 7
      %v933 = vsel %vm261, %v932, %v924
      %v934 = vrot.slane %v926, 6
      %v935 = vsel %vm264, %v934, %v933
      %v936 = vrot.slane %v927, 5
      %v937 = vsel %vm267, %v936, %v935
      %938 = vrot.lane.b32.xlu0 %v937, 40
      %v939 = vpop.permute.xlu0 %938
      %941 = vst.msk [vmem:[#allocation2 + $0x10] sm:$0xf] %vm365, %v939
      %v942 = vld [vmem:[%s835 + $0x6] sm:$0x1]
      %v943 = vld [vmem:[%s835 + $0x16] sm:$0x1]
      %v944 = vld [vmem:[%s835 + $0x26] sm:$0x1]
      %v945 = vld [vmem:[%s835 + $0x36] sm:$0x1]
      %v950 = vrot.slane %v943, 7
      %v951 = vsel %vm261, %v950, %v942
      %v952 = vrot.slane %v944, 6
      %v953 = vsel %vm264, %v952, %v951
      %v954 = vrot.slane %v945, 5
      %v955 = vsel %vm267, %v954, %v953
      %956 = vrot.lane.b32.xlu0 %v955, 48
      %v957 = vpop.permute.xlu0 %956
      %959 = vst.msk [vmem:[#allocation2 + $0x10] sm:$0xf] %vm384, %v957
      %v960 = vld [vmem:[%s835 + $0x7] sm:$0x1]
      %v961 = vld [vmem:[%s835 + $0x17] sm:$0x1]
      %v962 = vld [vmem:[%s835 + $0x27] sm:$0x1]
      %v963 = vld [vmem:[%s835 + $0x37] sm:$0x1]
      %v968 = vrot.slane %v961, 7
      %v969 = vsel %vm261, %v968, %v960
      %v970 = vrot.slane %v962, 6
      %v971 = vsel %vm264, %v970, %v969
      %v972 = vrot.slane %v963, 5
      %v973 = vsel %vm267, %v972, %v971
      %974 = vrot.lane.b32.xlu0 %v973, 56
      %v975 = vpop.permute.xlu0 %974
      %977 = vst.msk [vmem:[#allocation2 + $0x10] sm:$0xf] %vm403, %v975
      %v978 = vld [vmem:[%s692] sm:$0x1]
      %v979 = vld [vmem:[%s692 + $0x10] sm:$0x1]
      %v980 = vld [vmem:[%s692 + $0x20] sm:$0x1]
      %v981 = vld [vmem:[%s692 + $0x30] sm:$0x1]
      %v986 = vrot.slane %v979, 7
      %v987 = vsel %vm261, %v986, %v978
      %v988 = vrot.slane %v980, 6
      %v989 = vsel %vm264, %v988, %v987
      %v990 = vrot.slane %v981, 5
      %v991 = vsel %vm267, %v990, %v989
      %992 = vrot.lane.b32.xlu0 %v991, 127
      %v993 = vpop.permute.xlu0 %992
      %995 = vst.msk [vmem:[#allocation2 + $0x14] sm:$0xf] %vm270, %v993
      %v996 = vld [vmem:[%s692 + $0x1] sm:$0x1]
      %v997 = vld [vmem:[%s692 + $0x11] sm:$0x1]
      %v998 = vld [vmem:[%s692 + $0x21] sm:$0x1]
      %v999 = vld [vmem:[%s692 + $0x31] sm:$0x1]
      %v1004 = vrot.slane %v997, 7
      %v1005 = vsel %vm261, %v1004, %v996
      %v1006 = vrot.slane %v998, 6
      %v1007 = vsel %vm264, %v1006, %v1005
      %v1008 = vrot.slane %v999, 5
      %v1009 = vsel %vm267, %v1008, %v1007
      %1010 = vrot.lane.b32.xlu0 %v1009, 7
      %v1011 = vpop.permute.xlu0 %1010
      %1013 = vst.msk [vmem:[#allocation2 + $0x14] sm:$0xf] %vm289, %v1011
      %v1014 = vld [vmem:[%s692 + $0x2] sm:$0x1]
      %v1015 = vld [vmem:[%s692 + $0x12] sm:$0x1]
      %v1016 = vld [vmem:[%s692 + $0x22] sm:$0x1]
      %v1017 = vld [vmem:[%s692 + $0x32] sm:$0x1]
      %v1022 = vrot.slane %v1015, 7
      %v1023 = vsel %vm261, %v1022, %v1014
      %v1024 = vrot.slane %v1016, 6
      %v1025 = vsel %vm264, %v1024, %v1023
      %v1026 = vrot.slane %v1017, 5
      %v1027 = vsel %vm267, %v1026, %v1025
      %1028 = vrot.lane.b32.xlu0 %v1027, 15
      %v1029 = vpop.permute.xlu0 %1028
      %1031 = vst.msk [vmem:[#allocation2 + $0x14] sm:$0xf] %vm308, %v1029
      %v1032 = vld [vmem:[%s692 + $0x3] sm:$0x1]
      %v1033 = vld [vmem:[%s692 + $0x13] sm:$0x1]
      %v1034 = vld [vmem:[%s692 + $0x23] sm:$0x1]
      %v1035 = vld [vmem:[%s692 + $0x33] sm:$0x1]
      %v1040 = vrot.slane %v1033, 7
      %v1041 = vsel %vm261, %v1040, %v1032
      %v1042 = vrot.slane %v1034, 6
      %v1043 = vsel %vm264, %v1042, %v1041
      %v1044 = vrot.slane %v1035, 5
      %v1045 = vsel %vm267, %v1044, %v1043
      %1046 = vrot.lane.b32.xlu0 %v1045, 23
      %v1047 = vpop.permute.xlu0 %1046
      %1049 = vst.msk [vmem:[#allocation2 + $0x14] sm:$0xf] %vm327, %v1047
      %v1050 = vld [vmem:[%s692 + $0x4] sm:$0x1]
      %v1051 = vld [vmem:[%s692 + $0x14] sm:$0x1]
      %v1052 = vld [vmem:[%s692 + $0x24] sm:$0x1]
      %v1053 = vld [vmem:[%s692 + $0x34] sm:$0x1]
      %v1058 = vrot.slane %v1051, 7
      %v1059 = vsel %vm261, %v1058, %v1050
      %v1060 = vrot.slane %v1052, 6
      %v1061 = vsel %vm264, %v1060, %v1059
      %v1062 = vrot.slane %v1053, 5
      %v1063 = vsel %vm267, %v1062, %v1061
      %1064 = vrot.lane.b32.xlu0 %v1063, 31
      %v1065 = vpop.permute.xlu0 %1064
      %1067 = vst.msk [vmem:[#allocation2 + $0x14] sm:$0xf] %vm346, %v1065
      %v1068 = vld [vmem:[%s692 + $0x5] sm:$0x1]
      %v1069 = vld [vmem:[%s692 + $0x15] sm:$0x1]
      %v1070 = vld [vmem:[%s692 + $0x25] sm:$0x1]
      %v1071 = vld [vmem:[%s692 + $0x35] sm:$0x1]
      %v1076 = vrot.slane %v1069, 7
      %v1077 = vsel %vm261, %v1076, %v1068
      %v1078 = vrot.slane %v1070, 6
      %v1079 = vsel %vm264, %v1078, %v1077
      %v1080 = vrot.slane %v1071, 5
      %v1081 = vsel %vm267, %v1080, %v1079
      %1082 = vrot.lane.b32.xlu0 %v1081, 39
      %v1083 = vpop.permute.xlu0 %1082
      %1085 = vst.msk [vmem:[#allocation2 + $0x14] sm:$0xf] %vm365, %v1083
      %v1086 = vld [vmem:[%s692 + $0x6] sm:$0x1]
      %v1087 = vld [vmem:[%s692 + $0x16] sm:$0x1]
      %v1088 = vld [vmem:[%s692 + $0x26] sm:$0x1]
      %v1089 = vld [vmem:[%s692 + $0x36] sm:$0x1]
      %v1094 = vrot.slane %v1087, 7
      %v1095 = vsel %vm261, %v1094, %v1086
      %v1096 = vrot.slane %v1088, 6
      %v1097 = vsel %vm264, %v1096, %v1095
      %v1098 = vrot.slane %v1089, 5
      %v1099 = vsel %vm267, %v1098, %v1097
      %1100 = vrot.lane.b32.xlu0 %v1099, 47
      %v1101 = vpop.permute.xlu0 %1100
      %1103 = vst.msk [vmem:[#allocation2 + $0x14] sm:$0xf] %vm384, %v1101
      %v1104 = vld [vmem:[%s692 + $0x7] sm:$0x1]
      %v1105 = vld [vmem:[%s692 + $0x17] sm:$0x1]
      %v1106 = vld [vmem:[%s692 + $0x27] sm:$0x1]
      %v1107 = vld [vmem:[%s692 + $0x37] sm:$0x1]
      %v1112 = vrot.slane %v1105, 7
      %v1113 = vsel %vm261, %v1112, %v1104
      %v1114 = vrot.slane %v1106, 6
      %v1115 = vsel %vm264, %v1114, %v1113
      %v1116 = vrot.slane %v1107, 5
      %v1117 = vsel %vm267, %v1116, %v1115
      %1118 = vrot.lane.b32.xlu0 %v1117, 55
      %v1119 = vpop.permute.xlu0 %1118
      %1121 = vst.msk [vmem:[#allocation2 + $0x14] sm:$0xf] %vm403, %v1119
      %v1122 = vld [vmem:[%s246 + $0x1] sm:$0x1]
      %v1123 = vld [vmem:[%s246 + $0x11] sm:$0x1]
      %v1124 = vld [vmem:[%s246 + $0x21] sm:$0x1]
      %v1125 = vld [vmem:[%s246 + $0x31] sm:$0x1]
      %v1130 = vrot.slane %v1123, 7
      %v1131 = vsel %vm261, %v1130, %v1122
      %v1132 = vrot.slane %v1124, 6
      %v1133 = vsel %vm264, %v1132, %v1131
      %v1134 = vrot.slane %v1125, 5
      %v1135 = vsel %vm267, %v1134, %v1133
      %1137 = vst.msk [vmem:[#allocation2 + $0x18] sm:$0xf] %vm270, %v1135
      %v1138 = vld [vmem:[%s246 + $0x2] sm:$0x1]
      %v1139 = vld [vmem:[%s246 + $0x12] sm:$0x1]
      %v1140 = vld [vmem:[%s246 + $0x22] sm:$0x1]
      %v1141 = vld [vmem:[%s246 + $0x32] sm:$0x1]
      %v1146 = vrot.slane %v1139, 7
      %v1147 = vsel %vm261, %v1146, %v1138
      %v1148 = vrot.slane %v1140, 6
      %v1149 = vsel %vm264, %v1148, %v1147
      %v1150 = vrot.slane %v1141, 5
      %v1151 = vsel %vm267, %v1150, %v1149
      %1152 = vrot.lane.b32.xlu0 %v1151, 8
      %v1153 = vpop.permute.xlu0 %1152
      %1155 = vst.msk [vmem:[#allocation2 + $0x18] sm:$0xf] %vm289, %v1153
      %v1156 = vld [vmem:[%s246 + $0x3] sm:$0x1]
      %v1157 = vld [vmem:[%s246 + $0x13] sm:$0x1]
      %v1158 = vld [vmem:[%s246 + $0x23] sm:$0x1]
      %v1159 = vld [vmem:[%s246 + $0x33] sm:$0x1]
      %v1164 = vrot.slane %v1157, 7
      %v1165 = vsel %vm261, %v1164, %v1156
      %v1166 = vrot.slane %v1158, 6
      %v1167 = vsel %vm264, %v1166, %v1165
      %v1168 = vrot.slane %v1159, 5
      %v1169 = vsel %vm267, %v1168, %v1167
      %1170 = vrot.lane.b32.xlu0 %v1169, 16
      %v1171 = vpop.permute.xlu0 %1170
      %1173 = vst.msk [vmem:[#allocation2 + $0x18] sm:$0xf] %vm308, %v1171
      %v1174 = vld [vmem:[%s246 + $0x4] sm:$0x1]
      %v1175 = vld [vmem:[%s246 + $0x14] sm:$0x1]
      %v1176 = vld [vmem:[%s246 + $0x24] sm:$0x1]
      %v1177 = vld [vmem:[%s246 + $0x34] sm:$0x1]
      %v1182 = vrot.slane %v1175, 7
      %v1183 = vsel %vm261, %v1182, %v1174
      %v1184 = vrot.slane %v1176, 6
      %v1185 = vsel %vm264, %v1184, %v1183
      %v1186 = vrot.slane %v1177, 5
      %v1187 = vsel %vm267, %v1186, %v1185
      %1188 = vrot.lane.b32.xlu0 %v1187, 24
      %v1189 = vpop.permute.xlu0 %1188
      %1191 = vst.msk [vmem:[#allocation2 + $0x18] sm:$0xf] %vm327, %v1189
      %v1192 = vld [vmem:[%s246 + $0x5] sm:$0x1]
      %v1193 = vld [vmem:[%s246 + $0x15] sm:$0x1]
      %v1194 = vld [vmem:[%s246 + $0x25] sm:$0x1]
      %v1195 = vld [vmem:[%s246 + $0x35] sm:$0x1]
      %v1200 = vrot.slane %v1193, 7
      %v1201 = vsel %vm261, %v1200, %v1192
      %v1202 = vrot.slane %v1194, 6
      %v1203 = vsel %vm264, %v1202, %v1201
      %v1204 = vrot.slane %v1195, 5
      %v1205 = vsel %vm267, %v1204, %v1203
      %1206 = vrot.lane.b32.xlu0 %v1205, 32
      %v1207 = vpop.permute.xlu0 %1206
      %1209 = vst.msk [vmem:[#allocation2 + $0x18] sm:$0xf] %vm346, %v1207
      %v1210 = vld [vmem:[%s246 + $0x6] sm:$0x1]
      %v1211 = vld [vmem:[%s246 + $0x16] sm:$0x1]
      %v1212 = vld [vmem:[%s246 + $0x26] sm:$0x1]
      %v1213 = vld [vmem:[%s246 + $0x36] sm:$0x1]
      %v1218 = vrot.slane %v1211, 7
      %v1219 = vsel %vm261, %v1218, %v1210
      %v1220 = vrot.slane %v1212, 6
      %v1221 = vsel %vm264, %v1220, %v1219
      %v1222 = vrot.slane %v1213, 5
      %v1223 = vsel %vm267, %v1222, %v1221
      %1224 = vrot.lane.b32.xlu0 %v1223, 40
      %v1225 = vpop.permute.xlu0 %1224
      %1227 = vst.msk [vmem:[#allocation2 + $0x18] sm:$0xf] %vm365, %v1225
      %v1228 = vld [vmem:[%s246 + $0x7] sm:$0x1]
      %v1229 = vld [vmem:[%s246 + $0x17] sm:$0x1]
      %v1230 = vld [vmem:[%s246 + $0x27] sm:$0x1]
      %v1231 = vld [vmem:[%s246 + $0x37] sm:$0x1]
      %v1236 = vrot.slane %v1229, 7
      %v1237 = vsel %vm261, %v1236, %v1228
      %v1238 = vrot.slane %v1230, 6
      %v1239 = vsel %vm264, %v1238, %v1237
      %v1240 = vrot.slane %v1231, 5
      %v1241 = vsel %vm267, %v1240, %v1239
      %1242 = vrot.lane.b32.xlu0 %v1241, 48
      %v1243 = vpop.permute.xlu0 %1242
      %1245 = vst.msk [vmem:[#allocation2 + $0x18] sm:$0xf] %vm384, %v1243
      %v1246 = vld [vmem:[%s246 + $0x8] sm:$0x1]
      %v1247 = vld [vmem:[%s246 + $0x18] sm:$0x1]
      %v1248 = vld [vmem:[%s246 + $0x28] sm:$0x1]
      %v1249 = vld [vmem:[%s246 + $0x38] sm:$0x1]
      %v1254 = vrot.slane %v1247, 7
      %v1255 = vsel %vm261, %v1254, %v1246
      %v1256 = vrot.slane %v1248, 6
      %v1257 = vsel %vm264, %v1256, %v1255
      %v1258 = vrot.slane %v1249, 5
      %v1259 = vsel %vm267, %v1258, %v1257
      %1260 = vrot.lane.b32.xlu0 %v1259, 56
      %v1261 = vpop.permute.xlu0 %1260
      %1263 = vst.msk [vmem:[#allocation2 + $0x18] sm:$0xf] %vm403, %v1261
      %v1264 = vld [vmem:[%s405 + $0x1] sm:$0x1]
      %v1265 = vld [vmem:[%s405 + $0x11] sm:$0x1]
      %v1266 = vld [vmem:[%s405 + $0x21] sm:$0x1]
      %v1267 = vld [vmem:[%s405 + $0x31] sm:$0x1]
      %v1272 = vrot.slane %v1265, 7
      %v1273 = vsel %vm261, %v1272, %v1264
      %v1274 = vrot.slane %v1266, 6
      %v1275 = vsel %vm264, %v1274, %v1273
      %v1276 = vrot.slane %v1267, 5
      %v1277 = vsel %vm267, %v1276, %v1275
      %1279 = vst.msk [vmem:[#allocation2 + $0x1c] sm:$0xf] %vm270, %v1277
      %v1280 = vld [vmem:[%s405 + $0x2] sm:$0x1]
      %v1281 = vld [vmem:[%s405 + $0x12] sm:$0x1]
      %v1282 = vld [vmem:[%s405 + $0x22] sm:$0x1]
      %v1283 = vld [vmem:[%s405 + $0x32] sm:$0x1]
      %v1288 = vrot.slane %v1281, 7
      %v1289 = vsel %vm261, %v1288, %v1280
      %v1290 = vrot.slane %v1282, 6
      %v1291 = vsel %vm264, %v1290, %v1289
      %v1292 = vrot.slane %v1283, 5
      %v1293 = vsel %vm267, %v1292, %v1291
      %1294 = vrot.lane.b32.xlu0 %v1293, 8
      %v1295 = vpop.permute.xlu0 %1294
      %1297 = vst.msk [vmem:[#allocation2 + $0x1c] sm:$0xf] %vm289, %v1295
      %v1298 = vld [vmem:[%s405 + $0x3] sm:$0x1]
      %v1299 = vld [vmem:[%s405 + $0x13] sm:$0x1]
      %v1300 = vld [vmem:[%s405 + $0x23] sm:$0x1]
      %v1301 = vld [vmem:[%s405 + $0x33] sm:$0x1]
      %v1306 = vrot.slane %v1299, 7
      %v1307 = vsel %vm261, %v1306, %v1298
      %v1308 = vrot.slane %v1300, 6
      %v1309 = vsel %vm264, %v1308, %v1307
      %v1310 = vrot.slane %v1301, 5
      %v1311 = vsel %vm267, %v1310, %v1309
      %1312 = vrot.lane.b32.xlu0 %v1311, 16
      %v1313 = vpop.permute.xlu0 %1312
      %1315 = vst.msk [vmem:[#allocation2 + $0x1c] sm:$0xf] %vm308, %v1313
      %v1316 = vld [vmem:[%s405 + $0x4] sm:$0x1]
      %v1317 = vld [vmem:[%s405 + $0x14] sm:$0x1]
      %v1318 = vld [vmem:[%s405 + $0x24] sm:$0x1]
      %v1319 = vld [vmem:[%s405 + $0x34] sm:$0x1]
      %v1324 = vrot.slane %v1317, 7
      %v1325 = vsel %vm261, %v1324, %v1316
      %v1326 = vrot.slane %v1318, 6
      %v1327 = vsel %vm264, %v1326, %v1325
      %v1328 = vrot.slane %v1319, 5
      %v1329 = vsel %vm267, %v1328, %v1327
      %1330 = vrot.lane.b32.xlu0 %v1329, 24
      %v1331 = vpop.permute.xlu0 %1330
      %1333 = vst.msk [vmem:[#allocation2 + $0x1c] sm:$0xf] %vm327, %v1331
      %v1334 = vld [vmem:[%s405 + $0x5] sm:$0x1]
      %v1335 = vld [vmem:[%s405 + $0x15] sm:$0x1]
      %v1336 = vld [vmem:[%s405 + $0x25] sm:$0x1]
      %v1337 = vld [vmem:[%s405 + $0x35] sm:$0x1]
      %v1342 = vrot.slane %v1335, 7
      %v1343 = vsel %vm261, %v1342, %v1334
      %v1344 = vrot.slane %v1336, 6
      %v1345 = vsel %vm264, %v1344, %v1343
      %v1346 = vrot.slane %v1337, 5
      %v1347 = vsel %vm267, %v1346, %v1345
      %1348 = vrot.lane.b32.xlu0 %v1347, 32
      %v1349 = vpop.permute.xlu0 %1348
      %1351 = vst.msk [vmem:[#allocation2 + $0x1c] sm:$0xf] %vm346, %v1349
      %v1352 = vld [vmem:[%s405 + $0x6] sm:$0x1]
      %v1353 = vld [vmem:[%s405 + $0x16] sm:$0x1]
      %v1354 = vld [vmem:[%s405 + $0x26] sm:$0x1]
      %v1355 = vld [vmem:[%s405 + $0x36] sm:$0x1]
      %v1360 = vrot.slane %v1353, 7
      %v1361 = vsel %vm261, %v1360, %v1352
      %v1362 = vrot.slane %v1354, 6
      %v1363 = vsel %vm264, %v1362, %v1361
      %v1364 = vrot.slane %v1355, 5
      %v1365 = vsel %vm267, %v1364, %v1363
      %1366 = vrot.lane.b32.xlu0 %v1365, 40
      %v1367 = vpop.permute.xlu0 %1366
      %1369 = vst.msk [vmem:[#allocation2 + $0x1c] sm:$0xf] %vm365, %v1367
      %v1370 = vld [vmem:[%s405 + $0x7] sm:$0x1]
      %v1371 = vld [vmem:[%s405 + $0x17] sm:$0x1]
      %v1372 = vld [vmem:[%s405 + $0x27] sm:$0x1]
      %v1373 = vld [vmem:[%s405 + $0x37] sm:$0x1]
      %v1378 = vrot.slane %v1371, 7
      %v1379 = vsel %vm261, %v1378, %v1370
      %v1380 = vrot.slane %v1372, 6
      %v1381 = vsel %vm264, %v1380, %v1379
      %v1382 = vrot.slane %v1373, 5
      %v1383 = vsel %vm267, %v1382, %v1381
      %1384 = vrot.lane.b32.xlu0 %v1383, 48
      %v1385 = vpop.permute.xlu0 %1384
      %1387 = vst.msk [vmem:[#allocation2 + $0x1c] sm:$0xf] %vm384, %v1385
      %v1388 = vld [vmem:[%s405 + $0x8] sm:$0x1]
      %v1389 = vld [vmem:[%s405 + $0x18] sm:$0x1]
      %v1390 = vld [vmem:[%s405 + $0x28] sm:$0x1]
      %v1391 = vld [vmem:[%s405 + $0x38] sm:$0x1]
      %v1396 = vrot.slane %v1389, 7
      %v1397 = vsel %vm261, %v1396, %v1388
      %v1398 = vrot.slane %v1390, 6
      %v1399 = vsel %vm264, %v1398, %v1397
      %v1400 = vrot.slane %v1391, 5
      %v1401 = vsel %vm267, %v1400, %v1399
      %1402 = vrot.lane.b32.xlu0 %v1401, 56
      %v1403 = vpop.permute.xlu0 %1402
      %1405 = vst.msk [vmem:[#allocation2 + $0x1c] sm:$0xf] %vm403, %v1403
      %v1406 = vld [vmem:[%s246 + $0x1] sm:$0x1]
      %v1407 = vld [vmem:[%s246 + $0x11] sm:$0x1]
      %v1408 = vld [vmem:[%s246 + $0x21] sm:$0x1]
      %v1409 = vld [vmem:[%s246 + $0x31] sm:$0x1]
      %v1414 = vrot.slane %v1407, 7
      %v1415 = vsel %vm261, %v1414, %v1406
      %v1416 = vrot.slane %v1408, 6
      %v1417 = vsel %vm264, %v1416, %v1415
      %v1418 = vrot.slane %v1409, 5
      %v1419 = vsel %vm267, %v1418, %v1417
      %1420 = vrot.lane.b32.xlu0 %v1419, 127
      %v1421 = vpop.permute.xlu0 %1420
      %1423 = vst.msk [vmem:[#allocation2 + $0x20] sm:$0xf] %vm270, %v1421
      %v1424 = vld [vmem:[%s246 + $0x2] sm:$0x1]
      %v1425 = vld [vmem:[%s246 + $0x12] sm:$0x1]
      %v1426 = vld [vmem:[%s246 + $0x22] sm:$0x1]
      %v1427 = vld [vmem:[%s246 + $0x32] sm:$0x1]
      %v1432 = vrot.slane %v1425, 7
      %v1433 = vsel %vm261, %v1432, %v1424
      %v1434 = vrot.slane %v1426, 6
      %v1435 = vsel %vm264, %v1434, %v1433
      %v1436 = vrot.slane %v1427, 5
      %v1437 = vsel %vm267, %v1436, %v1435
      %1438 = vrot.lane.b32.xlu0 %v1437, 7
      %v1439 = vpop.permute.xlu0 %1438
      %1441 = vst.msk [vmem:[#allocation2 + $0x20] sm:$0xf] %vm289, %v1439
      %v1442 = vld [vmem:[%s246 + $0x3] sm:$0x1]
      %v1443 = vld [vmem:[%s246 + $0x13] sm:$0x1]
      %v1444 = vld [vmem:[%s246 + $0x23] sm:$0x1]
      %v1445 = vld [vmem:[%s246 + $0x33] sm:$0x1]
      %v1450 = vrot.slane %v1443, 7
      %v1451 = vsel %vm261, %v1450, %v1442
      %v1452 = vrot.slane %v1444, 6
      %v1453 = vsel %vm264, %v1452, %v1451
      %v1454 = vrot.slane %v1445, 5
      %v1455 = vsel %vm267, %v1454, %v1453
      %1456 = vrot.lane.b32.xlu0 %v1455, 15
      %v1457 = vpop.permute.xlu0 %1456
      %1459 = vst.msk [vmem:[#allocation2 + $0x20] sm:$0xf] %vm308, %v1457
      %v1460 = vld [vmem:[%s246 + $0x4] sm:$0x1]
      %v1461 = vld [vmem:[%s246 + $0x14] sm:$0x1]
      %v1462 = vld [vmem:[%s246 + $0x24] sm:$0x1]
      %v1463 = vld [vmem:[%s246 + $0x34] sm:$0x1]
      %v1468 = vrot.slane %v1461, 7
      %v1469 = vsel %vm261, %v1468, %v1460
      %v1470 = vrot.slane %v1462, 6
      %v1471 = vsel %vm264, %v1470, %v1469
      %v1472 = vrot.slane %v1463, 5
      %v1473 = vsel %vm267, %v1472, %v1471
      %1474 = vrot.lane.b32.xlu0 %v1473, 23
      %v1475 = vpop.permute.xlu0 %1474
      %1477 = vst.msk [vmem:[#allocation2 + $0x20] sm:$0xf] %vm327, %v1475
      %v1478 = vld [vmem:[%s246 + $0x5] sm:$0x1]
      %v1479 = vld [vmem:[%s246 + $0x15] sm:$0x1]
      %v1480 = vld [vmem:[%s246 + $0x25] sm:$0x1]
      %v1481 = vld [vmem:[%s246 + $0x35] sm:$0x1]
      %v1486 = vrot.slane %v1479, 7
      %v1487 = vsel %vm261, %v1486, %v1478
      %v1488 = vrot.slane %v1480, 6
      %v1489 = vsel %vm264, %v1488, %v1487
      %v1490 = vrot.slane %v1481, 5
      %v1491 = vsel %vm267, %v1490, %v1489
      %1492 = vrot.lane.b32.xlu0 %v1491, 31
      %v1493 = vpop.permute.xlu0 %1492
      %1495 = vst.msk [vmem:[#allocation2 + $0x20] sm:$0xf] %vm346, %v1493
      %v1496 = vld [vmem:[%s246 + $0x6] sm:$0x1]
      %v1497 = vld [vmem:[%s246 + $0x16] sm:$0x1]
      %v1498 = vld [vmem:[%s246 + $0x26] sm:$0x1]
      %v1499 = vld [vmem:[%s246 + $0x36] sm:$0x1]
      %v1504 = vrot.slane %v1497, 7
      %v1505 = vsel %vm261, %v1504, %v1496
      %v1506 = vrot.slane %v1498, 6
      %v1507 = vsel %vm264, %v1506, %v1505
      %v1508 = vrot.slane %v1499, 5
      %v1509 = vsel %vm267, %v1508, %v1507
      %1510 = vrot.lane.b32.xlu0 %v1509, 39
      %v1511 = vpop.permute.xlu0 %1510
      %1513 = vst.msk [vmem:[#allocation2 + $0x20] sm:$0xf] %vm365, %v1511
      %v1514 = vld [vmem:[%s246 + $0x7] sm:$0x1]
      %v1515 = vld [vmem:[%s246 + $0x17] sm:$0x1]
      %v1516 = vld [vmem:[%s246 + $0x27] sm:$0x1]
      %v1517 = vld [vmem:[%s246 + $0x37] sm:$0x1]
      %v1522 = vrot.slane %v1515, 7
      %v1523 = vsel %vm261, %v1522, %v1514
      %v1524 = vrot.slane %v1516, 6
      %v1525 = vsel %vm264, %v1524, %v1523
      %v1526 = vrot.slane %v1517, 5
      %v1527 = vsel %vm267, %v1526, %v1525
      %1528 = vrot.lane.b32.xlu0 %v1527, 47
      %v1529 = vpop.permute.xlu0 %1528
      %1531 = vst.msk [vmem:[#allocation2 + $0x20] sm:$0xf] %vm384, %v1529
      %v1532 = vld [vmem:[%s246 + $0x8] sm:$0x1]
      %v1533 = vld [vmem:[%s246 + $0x18] sm:$0x1]
      %v1534 = vld [vmem:[%s246 + $0x28] sm:$0x1]
      %v1535 = vld [vmem:[%s246 + $0x38] sm:$0x1]
      %v1540 = vrot.slane %v1533, 7
      %v1541 = vsel %vm261, %v1540, %v1532
      %v1542 = vrot.slane %v1534, 6
      %v1543 = vsel %vm264, %v1542, %v1541
      %v1544 = vrot.slane %v1535, 5
      %v1545 = vsel %vm267, %v1544, %v1543
      %1546 = vrot.lane.b32.xlu0 %v1545, 55
      %v1547 = vpop.permute.xlu0 %1546
      %1549 = vst.msk [vmem:[#allocation2 + $0x20] sm:$0xf] %vm403, %v1547
      %v1550 = vld [vmem:[%s1] sm:$0xf]
      %v1551 = vld [vmem:[#allocation2] sm:$0xff]
      %v1552 = vld [vmem:[#allocation2 + $0x8] sm:$0xff]
      %v1553 = vld [vmem:[#allocation2 + $0x10] sm:$0xff]
      %v1554 = vld [vmem:[#allocation2 + $0x18] sm:$0xff]
      %v1555 = vld [vmem:[#allocation2 + $0x20] sm:$0xf]
      %v1556 = vld [vmem:[%s2] sm:$0xf]
      %1558 = vset.pattern.permute.xlu0 0
      %1559 = vperm.xlu0 %1558, %v1556
      %v1560 = vpop.permute.xlu0 %1559
      %vm1562 = vcmask 293888
      %v1564 = vsel %vm1562, %v1550, 0
      %vm1566 = vcmask 1043456
      %v1568 = vsel %vm1566, %v1555, 0
      %1570 = vmatprep.subr.mxu0 0.0
      %1571 = vmatpush1.msra.mxu0 %v1551
      %1572 = vmatprep.subr.mxu0 0.0
      %1573 = vmatpush1.msra.mxu0 %v1552
      %1574 = vmatprep.subr.mxu0 0.0
      %1575 = vmatpush1.msra.mxu0 %v1553
      %1576 = vmatprep.subr.mxu0 0.0
      %1577 = vmatpush1.msra.mxu0 %v1554
      %1578 = vmatprep.subr.mxu0 0.0
      %1579 = vmatpush1.msra.mxu0 %v1568
      %1580 = vmatprep.subr.mxu0 0.0
      %1581 = vmatpush1.msra.mxu0 0.0
      %1582 = vmatprep.subr.mxu0 0.0
      %1583 = vmatpush1.msra.mxu0 0.0
      %1584 = vmatprep.subr.mxu0 0.0
      %1585 = vmatpush1.msra.mxu0 0.0
      %1586 = vmatprep.subr.mxu0 0.0
      %1587 = vmatpush1.msra.mxu0 0.0
      %1588 = vmatprep.subr.mxu0 0.0
      %1589 = vmatpush1.msra.mxu0 0.0
      %1590 = vmatprep.subr.mxu0 0.0
      %1591 = vmatpush1.msra.mxu0 0.0
      %1592 = vmatprep.subr.mxu0 0.0
      %1593 = vmatpush1.msra.mxu0 0.0
      %1594 = vmatprep.subr.mxu0 0.0
      %1595 = vmatpush1.msra.mxu0 0.0
      %1596 = vmatprep.subr.mxu0 0.0
      %1597 = vmatpush1.msra.mxu0 0.0
      %1598 = vmatprep.subr.mxu0 0.0
      %1599 = vmatpush1.msra.mxu0 0.0
      %1600 = vmatprep.subr.mxu0 0.0
      %1601 = vmatpush1.msra.mxu0 0.0
      %1602 = vmatprep.subr.mxu0 0.0
      %1603 = vmatpush1.msra.mxu0 0.0
      %1604 = vmatprep.subr.mxu0 0.0
      %1605 = vmatpush1.msra.mxu0 0.0
      %1606 = vmatprep.subr.mxu0 0.0
      %1607 = vmatpush1.msra.mxu0 0.0
      %1608 = vmatprep.subr.mxu0 0.0
      %1609 = vmatpush1.msra.mxu0 0.0
      %1610 = vmatprep.subr.mxu0 0.0
      %1611 = vmatpush1.msra.mxu0 0.0
      %1612 = vmatprep.subr.mxu0 0.0
      %1613 = vmatpush1.msra.mxu0 0.0
      %1614 = vmatprep.subr.mxu0 0.0
      %1615 = vmatpush1.msra.mxu0 0.0
      %1616 = vmatprep.subr.mxu0 0.0
      %1617 = vmatpush1.msra.mxu0 0.0
      %1618 = vmatprep.subr.mxu0 0.0
      %1619 = vmatpush1.msra.mxu0 0.0
      %1620 = vmatprep.subr.mxu0 0.0
      %1621 = vmatpush1.msra.mxu0 0.0
      %1622 = vmatprep.subr.mxu0 0.0
      %1623 = vmatpush1.msra.mxu0 0.0
      %1624 = vmatprep.subr.mxu0 0.0
      %1625 = vmatpush1.msra.mxu0 0.0
      %1626 = vmatprep.subr.mxu0 0.0
      %1627 = vmatpush1.msra.mxu0 0.0
      %1628 = vmatprep.subr.mxu0 0.0
      %1629 = vmatpush1.msra.mxu0 0.0
      %1630 = vmatprep.subr.mxu0 0.0
      %1631 = vmatpush1.msra.mxu0 0.0
      %1632 = vmatprep.subr.mxu0 0.0
      %1633 = vmatpush1.msra.mxu0 0.0
      %1634 = vmatprep.mubr.f32.mxu0 0.0
      %1635 = vmatmul.mubr.f32.gmra.mrb[0].mxu0 %v1564
      %v1636 = vpop.f32.mrb[0].mxu0
      %v1637 = vadd.f32 %v1560, %v1636
      %v1638 = vpop.f32.mrb[0].mxu0
      %1639 = vdwg.mxu0
      %v1640 = vmax.f32 %v1637, 0.0
      %vm1641 = vcmask 537600
      %1642 = vst.msk [vmem:[#allocation3] sm:$0x3f] %vm1641, 0.0
      %1644 = vrot.lane.b32.xlu0 %v1640, 1
      %v1645 = vpop.permute.xlu0 %1644
      %vm1647 = vcmask 527368
      %1648 = vst.msk [vmem:[#allocation3 + $0x1] sm:$0xf] %vm1647, %v1645
      %v1649 = vld [vmem:[#allocation3] sm:$0x3f]
      %v1650 = vmul.f32 %v1649, -1.0
      %v1651 = vadd.f32 %v1650, 0.0
      %v1652 = vmul.f32 %v1649, -2.0
      %v1654 = vrot.slane %v1652, 1
      %v1656 = vadd.f32 %v1651, %v1654
      %v1658 = vrot.slane %v1649, 2
      %v1660 = vadd.f32 %v1651, %v1658
      %v1662 = vrot.slane %v1650, 2
      %v1664 = vadd.f32 %v1656, %v1662
      %1665 = vrot.lane.b32.xlu0 %v1652, 127
      %v1666 = vpop.permute.xlu0 %1665
      %v1668 = vadd.f32 %v1660, %v1666
      %v1669 = vmul.f32 %v1649, 2.0
      %v1671 = vrot.slane %v1669, 2
      %1672 = vrot.lane.b32.xlu0 %v1671, 127
      %v1673 = vpop.permute.xlu0 %1672
      %v1675 = vadd.f32 %v1668, %v1673
      %1676 = vrot.lane.b32.xlu0 %v1650, 126
      %v1677 = vpop.permute.xlu0 %1676
      %v1679 = vadd.f32 %v1675, %v1677
      %1680 = vrot.lane.b32.xlu0 %v1649, 126
      %v1681 = vpop.permute.xlu0 %1680
      %v1683 = vadd.f32 %v1664, %v1681
      %v1684 = vrot.slane %v1669, 1
      %1685 = vrot.lane.b32.xlu0 %v1684, 126
      %v1686 = vpop.permute.xlu0 %1685
      %v1688 = vadd.f32 %v1683, %v1686
      %1689 = vrot.lane.b32.xlu0 %v1658, 126
      %v1690 = vpop.permute.xlu0 %1689
      %v1692 = vadd.f32 %v1679, %v1690
      %v1693 = vadd.f32 %v1688, %v1690
      %v1694 = vand.u32 2147483647, %v1692
      %v1695 = vand.u32 2147483647, %v1693
      %1696 = vxpose.xlu0.b32.start [1/16] %v1694, 128
      %1697 = vxpose.xlu0.b32.cont [2/16] 0.0, 128
      %1698 = vxpose.xlu0.b32.cont [3/16] 0.0, 128
      %1699 = vxpose.xlu0.b32.cont [4/16] 0.0, 128
      %1700 = vxpose.xlu0.b32.cont [5/16] 0.0, 128
      %1701 = vxpose.xlu0.b32.cont [6/16] 0.0, 128
      %1702 = vxpose.xlu0.b32.cont [7/16] 0.0, 128
      %1703 = vxpose.xlu0.b32.cont [8/16] 0.0, 128
      %1704 = vxpose.xlu0.b32.cont [9/16] 0.0, 128
      %1705 = vxpose.xlu0.b32.cont [10/16] 0.0, 128
      %1706 = vxpose.xlu0.b32.cont [11/16] 0.0, 128
      %1707 = vxpose.xlu0.b32.cont [12/16] 0.0, 128
      %1708 = vxpose.xlu0.b32.cont [13/16] 0.0, 128
      %1709 = vxpose.xlu0.b32.cont [14/16] 0.0, 128
      %1710 = vxpose.xlu0.b32.cont [15/16] 0.0, 128
      %1711 = vxpose.xlu0.b32.end [16/16] 0.0, 128
      %v1712 = vpop.trf.xlu0
      %v1713 = vpop.trf.xlu0
      %v1714 = vpop.trf.xlu0
      %v1715 = vpop.trf.xlu0
      %v1716 = vpop.trf.xlu0
      %v1717 = vpop.trf.xlu0
      %v1718 = vpop.trf.xlu0
      %v1719 = vpop.trf.xlu0
      %v1720 = vpop.trf.xlu0
      %v1721 = vpop.trf.xlu0
      %v1722 = vpop.trf.xlu0
      %v1723 = vpop.trf.xlu0
      %v1724 = vpop.trf.xlu0
      %v1725 = vpop.trf.xlu0
      %v1726 = vpop.trf.xlu0
      %v1727 = vpop.trf.xlu0
      %vm1728 = vcmask 31744
      %v1730 = vsel %vm1728, %v1712, 0
      %v1733 = vsel %vm1728, %v1713, 0
      %v1736 = vsel %vm1728, %v1714, 0
      %v1739 = vsel %vm1728, %v1715, 0
      %v1742 = vsel %vm1728, %v1716, 0
      %v1745 = vsel %vm1728, %v1717, 0
      %v1748 = vsel %vm1728, %v1718, 0
      %v1751 = vsel %vm1728, %v1719, 0
      %v1754 = vsel %vm1566, %v1695, 0
      %1756 = vmatprep.subr.mxu0 0.0
      %1757 = vmatpush1.msra.mxu0 %v1754
      %1758 = vmatprep.subr.mxu0 0.0
      %1759 = vmatpush1.msra.mxu0 0.0
      %1760 = vmatprep.subr.mxu0 0.0
      %1761 = vmatpush1.msra.mxu0 0.0
      %1762 = vmatprep.subr.mxu0 0.0
      %1763 = vmatpush1.msra.mxu0 0.0
      %1764 = vmatprep.subr.mxu0 0.0
      %1765 = vmatpush1.msra.mxu0 0.0
      %1766 = vmatprep.subr.mxu0 0.0
      %1767 = vmatpush1.msra.mxu0 0.0
      %1768 = vmatprep.subr.mxu0 0.0
      %1769 = vmatpush1.msra.mxu0 0.0
      %1770 = vmatprep.subr.mxu0 0.0
      %1771 = vmatpush1.msra.mxu0 0.0
      %1772 = vmatprep.subr.mxu0 0.0
      %1773 = vmatpush1.msra.mxu0 0.0
      %1774 = vmatprep.subr.mxu0 0.0
      %1775 = vmatpush1.msra.mxu0 0.0
      %1776 = vmatprep.subr.mxu0 0.0
      %1777 = vmatpush1.msra.mxu0 0.0
      %1778 = vmatprep.subr.mxu0 0.0
      %1779 = vmatpush1.msra.mxu0 0.0
      %1780 = vmatprep.subr.mxu0 0.0
      %1781 = vmatpush1.msra.mxu0 0.0
      %1782 = vmatprep.subr.mxu0 0.0
      %1783 = vmatpush1.msra.mxu0 0.0
      %1784 = vmatprep.subr.mxu0 0.0
      %1785 = vmatpush1.msra.mxu0 0.0
      %1786 = vmatprep.subr.mxu0 0.0
      %1787 = vmatpush1.msra.mxu0 0.0
      %1788 = vmatprep.subr.mxu0 0.0
      %1789 = vmatpush1.msra.mxu0 0.0
      %1790 = vmatprep.subr.mxu0 0.0
      %1791 = vmatpush1.msra.mxu0 0.0
      %1792 = vmatprep.subr.mxu0 0.0
      %1793 = vmatpush1.msra.mxu0 0.0
      %1794 = vmatprep.subr.mxu0 0.0
      %1795 = vmatpush1.msra.mxu0 0.0
      %1796 = vmatprep.subr.mxu0 0.0
      %1797 = vmatpush1.msra.mxu0 0.0
      %1798 = vmatprep.subr.mxu0 0.0
      %1799 = vmatpush1.msra.mxu0 0.0
      %1800 = vmatprep.subr.mxu0 0.0
      %1801 = vmatpush1.msra.mxu0 0.0
      %1802 = vmatprep.subr.mxu0 0.0
      %1803 = vmatpush1.msra.mxu0 0.0
      %1804 = vmatprep.subr.mxu0 0.0
      %1805 = vmatpush1.msra.mxu0 0.0
      %1806 = vmatprep.subr.mxu0 0.0
      %1807 = vmatpush1.msra.mxu0 0.0
      %1808 = vmatprep.subr.mxu0 0.0
      %1809 = vmatpush1.msra.mxu0 0.0
      %1810 = vmatprep.subr.mxu0 0.0
      %1811 = vmatpush1.msra.mxu0 0.0
      %1812 = vmatprep.subr.mxu0 0.0
      %1813 = vmatpush1.msra.mxu0 0.0
      %1814 = vmatprep.subr.mxu0 0.0
      %1815 = vmatpush1.msra.mxu0 0.0
      %1816 = vmatprep.subr.mxu0 0.0
      %1817 = vmatpush1.msra.mxu0 0.0
      %1818 = vmatprep.subr.mxu0 0.0
      %1819 = vmatpush1.msra.mxu0 0.0
      %1820 = vmatprep.mubr.f32.mxu0 0.0
      %1821 = vmatmul.mubr.f32.gmra.mrb[0].mxu0 %v1730
      %v1822 = vpop.f32.mrb[0].mxu0
      %v1823 = vadd.f32 0.0, %v1822
      %v1824 = vpop.f32.mrb[0].mxu0
      %1825 = vmatprep.mubr.f32.mxu0 0.0
      %1826 = vmatmul.mubr.f32.gmra.mrb[0].mxu0 %v1733
      %v1827 = vpop.f32.mrb[0].mxu0
      %v1828 = vadd.f32 0.0, %v1827
      %v1829 = vpop.f32.mrb[0].mxu0
      %1830 = vmatprep.mubr.f32.mxu0 0.0
      %1831 = vmatmul.mubr.f32.gmra.mrb[0].mxu0 %v1736
      %v1832 = vpop.f32.mrb[0].mxu0
      %v1833 = vadd.f32 0.0, %v1832
      %v1834 = vpop.f32.mrb[0].mxu0
      %1835 = vmatprep.mubr.f32.mxu0 0.0
      %1836 = vmatmul.mubr.f32.gmra.mrb[0].mxu0 %v1739
      %v1837 = vpop.f32.mrb[0].mxu0
      %v1838 = vadd.f32 0.0, %v1837
      %v1839 = vpop.f32.mrb[0].mxu0
      %1840 = vmatprep.mubr.f32.mxu0 0.0
      %1841 = vmatmul.mubr.f32.gmra.mrb[0].mxu0 %v1742
      %v1842 = vpop.f32.mrb[0].mxu0
      %v1843 = vadd.f32 0.0, %v1842
      %v1844 = vpop.f32.mrb[0].mxu0
      %1845 = vmatprep.mubr.f32.mxu0 0.0
      %1846 = vmatmul.mubr.f32.gmra.mrb[0].mxu0 %v1745
      %v1847 = vpop.f32.mrb[0].mxu0
      %v1848 = vadd.f32 0.0, %v1847
      %v1849 = vpop.f32.mrb[0].mxu0
      %1850 = vmatprep.mubr.f32.mxu0 0.0
      %1851 = vmatmul.mubr.f32.gmra.mrb[0].mxu0 %v1748
      %v1852 = vpop.f32.mrb[0].mxu0
      %v1853 = vadd.f32 0.0, %v1852
      %v1854 = vpop.f32.mrb[0].mxu0
      %1855 = vmatprep.mubr.f32.mxu0 0.0
      %1856 = vmatmul.mubr.f32.gmra.mrb[0].mxu0 %v1751
      %v1857 = vpop.f32.mrb[0].mxu0
      %v1858 = vadd.f32 0.0, %v1857
      %v1859 = vpop.f32.mrb[0].mxu0
      %1860 = vdwg.mxu0
      %vm1861 = vcmask 523264
      %v1862 = vsel %vm1861, %v1823, -inf
      %1863 = vmax.xlane.f32.xlu0 %v1862
      %v1864 = vpop.xlane.xlu0 %1863
      %v1865 = vsel %vm1861, %v1828, -inf
      %1866 = vmax.xlane.f32.xlu0 %v1865
      %v1867 = vpop.xlane.xlu0 %1866
      %v1868 = vsel %vm1861, %v1833, -inf
      %1869 = vmax.xlane.f32.xlu0 %v1868
      %v1870 = vpop.xlane.xlu0 %1869
      %v1871 = vsel %vm1861, %v1838, -inf
      %1872 = vmax.xlane.f32.xlu0 %v1871
      %v1873 = vpop.xlane.xlu0 %1872
      %v1874 = vsel %vm1861, %v1843, -inf
      %1875 = vmax.xlane.f32.xlu0 %v1874
      %v1876 = vpop.xlane.xlu0 %1875
      %v1877 = vsel %vm1861, %v1848, -inf
      %1878 = vmax.xlane.f32.xlu0 %v1877
      %v1879 = vpop.xlane.xlu0 %1878
      %v1880 = vsel %vm1861, %v1853, -inf
      %1881 = vmax.xlane.f32.xlu0 %v1880
      %v1882 = vpop.xlane.xlu0 %1881
      %v1883 = vsel %vm1861, %v1858, -inf
      %1884 = vmax.xlane.f32.xlu0 %v1883
      %v1885 = vpop.xlane.xlu0 %1884
      %v1886 = vsub.f32 %v1823, %v1864
      %v1887 = vsub.f32 %v1828, %v1867
      %v1888 = vsub.f32 %v1833, %v1870
      %v1889 = vsub.f32 %v1838, %v1873
      %v1890 = vsub.f32 %v1843, %v1876
      %v1891 = vsub.f32 %v1848, %v1879
      %v1892 = vsub.f32 %v1853, %v1882
      %v1893 = vsub.f32 %v1858, %v1885
      %v1894 = vmul.f32 %v1886, 1.442695
      %v1895 = vpow.pop %v1894
      %v1896 = vmul.f32 %v1887, 1.442695
      %v1897 = vpow.pop %v1896
      %v1898 = vmul.f32 %v1888, 1.442695
      %v1899 = vpow.pop %v1898
      %v1900 = vmul.f32 %v1889, 1.442695
      %v1901 = vpow.pop %v1900
      %v1902 = vmul.f32 %v1890, 1.442695
      %v1903 = vpow.pop %v1902
      %v1904 = vmul.f32 %v1891, 1.442695
      %v1905 = vpow.pop %v1904
      %v1906 = vmul.f32 %v1892, 1.442695
      %v1907 = vpow.pop %v1906
      %v1908 = vmul.f32 %v1893, 1.442695
      %v1909 = vpow.pop %v1908
      %v1910 = vsel %vm1861, %v1895, 0.0
      %1911 = vadd.xlane.f32.xlu0 %v1910
      %v1912 = vpop.xlane.xlu0 %1911
      %v1913 = vsel %vm1861, %v1897, 0.0
      %1914 = vadd.xlane.f32.xlu0 %v1913
      %v1915 = vpop.xlane.xlu0 %1914
      %v1916 = vsel %vm1861, %v1899, 0.0
      %1917 = vadd.xlane.f32.xlu0 %v1916
      %v1918 = vpop.xlane.xlu0 %1917
      %v1919 = vsel %vm1861, %v1901, 0.0
      %1920 = vadd.xlane.f32.xlu0 %v1919
      %v1921 = vpop.xlane.xlu0 %1920
      %v1922 = vsel %vm1861, %v1903, 0.0
      %1923 = vadd.xlane.f32.xlu0 %v1922
      %v1924 = vpop.xlane.xlu0 %1923
      %v1925 = vsel %vm1861, %v1905, 0.0
      %1926 = vadd.xlane.f32.xlu0 %v1925
      %v1927 = vpop.xlane.xlu0 %1926
      %v1928 = vsel %vm1861, %v1907, 0.0
      %1929 = vadd.xlane.f32.xlu0 %v1928
      %v1930 = vpop.xlane.xlu0 %1929
      %v1931 = vsel %vm1861, %v1909, 0.0
      %1932 = vadd.xlane.f32.xlu0 %v1931
      %v1933 = vpop.xlane.xlu0 %1932
      %v1934 = vrcp.pop %v1912
      %v1935 = vmul.f32 %v1895, %v1934
      %v1936 = vrcp.pop %v1915
      %v1937 = vmul.f32 %v1897, %v1936
      %v1938 = vrcp.pop %v1918
      %v1939 = vmul.f32 %v1899, %v1938
      %v1940 = vrcp.pop %v1921
      %v1941 = vmul.f32 %v1901, %v1940
      %v1942 = vrcp.pop %v1924
      %v1943 = vmul.f32 %v1903, %v1942
      %v1944 = vrcp.pop %v1927
      %v1945 = vmul.f32 %v1905, %v1944
      %v1946 = vrcp.pop %v1930
      %v1947 = vmul.f32 %v1907, %v1946
      %v1948 = vrcp.pop %v1933
      %v1949 = vmul.f32 %v1909, %v1948
      %v1950 = vld [vmem:[%s3] sm:$0xff]
      %v1951 = vld [vmem:[%s3 + $0x8] sm:$0xff]
      %v1952 = vld [vmem:[%s3 + $0x10] sm:$0xff]
      %v1953 = vld [vmem:[%s3 + $0x18] sm:$0xff]
      %v1954 = vld [vmem:[%s3 + $0x20] sm:$0xff]
      %v1955 = vld [vmem:[%s3 + $0x28] sm:$0xff]
      %v1956 = vld [vmem:[%s3 + $0x30] sm:$0xff]
      %v1957 = vld [vmem:[%s3 + $0x38] sm:$0xff]
      %v1958 = vadd.f32 %v1935, %v1950
      %v1959 = vadd.f32 %v1937, %v1951
      %v1960 = vadd.f32 %v1939, %v1952
      %v1961 = vadd.f32 %v1941, %v1953
      %v1962 = vadd.f32 %v1943, %v1954
      %v1963 = vadd.f32 %v1945, %v1955
      %v1964 = vadd.f32 %v1947, %v1956
      %v1965 = vadd.f32 %v1949, %v1957
      %v1966 = vsel %vm1861, %v1958, 0.0
      %1967 = vadd.xlane.f32.xlu0 %v1966
      %v1968 = vpop.xlane.xlu0 %1967
      %v1969 = vsel %vm1861, %v1959, 0.0
      %1970 = vadd.xlane.f32.xlu0 %v1969
      %v1971 = vpop.xlane.xlu0 %1970
      %v1972 = vsel %vm1861, %v1960, 0.0
      %1973 = vadd.xlane.f32.xlu0 %v1972
      %v1974 = vpop.xlane.xlu0 %1973
      %v1975 = vsel %vm1861, %v1961, 0.0
      %1976 = vadd.xlane.f32.xlu0 %v1975
      %v1977 = vpop.xlane.xlu0 %1976
      %v1978 = vsel %vm1861, %v1962, 0.0
      %1979 = vadd.xlane.f32.xlu0 %v1978
      %v1980 = vpop.xlane.xlu0 %1979
      %v1981 = vsel %vm1861, %v1963, 0.0
      %1982 = vadd.xlane.f32.xlu0 %v1981
      %v1983 = vpop.xlane.xlu0 %1982
      %v1984 = vsel %vm1861, %v1964, 0.0
      %1985 = vadd.xlane.f32.xlu0 %v1984
      %v1986 = vpop.xlane.xlu0 %1985
      %v1987 = vsel %vm1861, %v1965, 0.0
      %1988 = vadd.xlane.f32.xlu0 %v1987
      %v1989 = vpop.xlane.xlu0 %1988
      %v1991 = vsel %vm1861, 1.0, 0
      %v1994 = vsel %vm1861, %v1958, 0
      %v1997 = vsel %vm1861, %v1959, 0
      %v2000 = vsel %vm1861, %v1960, 0
      %v2003 = vsel %vm1861, %v1961, 0
      %v2006 = vsel %vm1861, %v1962, 0
      %v2009 = vsel %vm1861, %v1963, 0
      %v2012 = vsel %vm1861, %v1964, 0
      %v2015 = vsel %vm1861, %v1965, 0
      %2017 = vmatprep.subr.mxu0 0.0
      %2018 = vmatpush1.xpose.msra.mxu0 %v1994
      %2019 = vmatprep.subr.mxu0 0.0
      %2020 = vmatpush1.xpose.msra.mxu0 %v1997
      %2021 = vmatprep.subr.mxu0 0.0
      %2022 = vmatpush1.xpose.msra.mxu0 %v2000
      %2023 = vmatprep.subr.mxu0 0.0
      %2024 = vmatpush1.xpose.msra.mxu0 %v2003
      %2025 = vmatprep.subr.mxu0 0.0
      %2026 = vmatpush1.xpose.msra.mxu0 %v2006
      %2027 = vmatprep.subr.mxu0 0.0
      %2028 = vmatpush1.xpose.msra.mxu0 %v2009
      %2029 = vmatprep.subr.mxu0 0.0
      %2030 = vmatpush1.xpose.msra.mxu0 %v2012
      %2031 = vmatprep.subr.mxu0 0.0
      %2032 = vmatpush1.xpose.msra.mxu0 %v2015
      %2033 = vmatprep.subr.mxu0 0.0
      %2034 = vmatpush1.xpose.msra.mxu0 0.0
      %2035 = vmatprep.subr.mxu0 0.0
      %2036 = vmatpush1.xpose.msra.mxu0 0.0
      %2037 = vmatprep.subr.mxu0 0.0
      %2038 = vmatpush1.xpose.msra.mxu0 0.0
      %2039 = vmatprep.subr.mxu0 0.0
      %2040 = vmatpush1.xpose.msra.mxu0 0.0
      %2041 = vmatprep.subr.mxu0 0.0
      %2042 = vmatpush1.xpose.msra.mxu0 0.0
      %2043 = vmatprep.subr.mxu0 0.0
      %2044 = vmatpush1.xpose.msra.mxu0 0.0
      %2045 = vmatprep.subr.mxu0 0.0
      %2046 = vmatpush1.xpose.msra.mxu0 0.0
      %2047 = vmatprep.subr.mxu0 0.0
      %2048 = vmatpush1.xpose.msra.mxu0 0.0
      %2049 = vmatprep.subr.mxu0 0.0
      %2050 = vmatpush1.xpose.msra.mxu0 0.0
      %2051 = vmatprep.subr.mxu0 0.0
      %2052 = vmatpush1.xpose.msra.mxu0 0.0
      %2053 = vmatprep.subr.mxu0 0.0
      %2054 = vmatpush1.xpose.msra.mxu0 0.0
      %2055 = vmatprep.subr.mxu0 0.0
      %2056 = vmatpush1.xpose.msra.mxu0 0.0
      %2057 = vmatprep.subr.mxu0 0.0
      %2058 = vmatpush1.xpose.msra.mxu0 0.0
      %2059 = vmatprep.subr.mxu0 0.0
      %2060 = vmatpush1.xpose.msra.mxu0 0.0
      %2061 = vmatprep.subr.mxu0 0.0
      %2062 = vmatpush1.xpose.msra.mxu0 0.0
      %2063 = vmatprep.subr.mxu0 0.0
      %2064 = vmatpush1.xpose.msra.mxu0 0.0
      %2065 = vmatprep.subr.mxu0 0.0
      %2066 = vmatpush1.xpose.msra.mxu0 0.0
      %2067 = vmatprep.subr.mxu0 0.0
      %2068 = vmatpush1.xpose.msra.mxu0 0.0
      %2069 = vmatprep.subr.mxu0 0.0
      %2070 = vmatpush1.xpose.msra.mxu0 0.0
      %2071 = vmatprep.subr.mxu0 0.0
      %2072 = vmatpush1.xpose.msra.mxu0 0.0
      %2073 = vmatprep.subr.mxu0 0.0
      %2074 = vmatpush1.xpose.msra.mxu0 0.0
      %2075 = vmatprep.subr.mxu0 0.0
      %2076 = vmatpush1.xpose.msra.mxu0 0.0
      %2077 = vmatprep.subr.mxu0 0.0
      %2078 = vmatpush1.xpose.msra.mxu0 0.0
      %2079 = vmatprep.subr.mxu0 0.0
      %2080 = vmatpush1.xpose.msra.mxu0 0.0
      %2081 = vmatprep.mubr.f32.mxu0 0.0
      %2082 = vmatmul.mubr.f32.gmra.mrb[0].mxu0 %v1991
      %v2083 = vpop.f32.mrb[0].mxu0
      %v2084 = vadd.f32 0.0, %v2083
      %v2085 = vpop.f32.mrb[0].mxu0
      %2086 = vdwg.mxu0
      %v2087 = vrsqrt.pop %v1968
      %v2088 = vrsqrt.pop %v1971
      %v2089 = vrsqrt.pop %v1974
      %v2090 = vrsqrt.pop %v1977
      %v2091 = vrsqrt.pop %v1980
      %v2092 = vrsqrt.pop %v1983
      %v2093 = vrsqrt.pop %v1986
      %v2094 = vrsqrt.pop %v1989
      %v2095 = vmul.f32 %v2087, %v1958
      %v2096 = vmul.f32 %v2088, %v1959
      %v2097 = vmul.f32 %v2089, %v1960
      %v2098 = vmul.f32 %v2090, %v1961
      %v2099 = vmul.f32 %v2091, %v1962
      %v2100 = vmul.f32 %v2092, %v1963
      %v2101 = vmul.f32 %v2093, %v1964
      %v2102 = vmul.f32 %v2094, %v1965
      %v2103 = vrsqrt.pop %v2084
      %v2104 = vlaneseq
      %v2105 = vshrl.u32 %v2104, 7
      %v2106 = vsub.s32 0, %v2105
      %v2107 = vrot.slane %v2103, %v2106
      %v2108 = vmul.f32 %v2095, %v2107
      %v2109 = vmul.f32 %v2096, %v2107
      %v2110 = vmul.f32 %v2097, %v2107
      %v2111 = vmul.f32 %v2098, %v2107
      %v2112 = vmul.f32 %v2099, %v2107
      %v2113 = vmul.f32 %v2100, %v2107
      %v2114 = vmul.f32 %v2101, %v2107
      %v2115 = vmul.f32 %v2102, %v2107
      %v2116 = vsel %vm1861, %v1640, 0
      %v2119 = vsel %vm1861, %v2108, 0
      %v2122 = vsel %vm1861, %v2109, 0
      %v2125 = vsel %vm1861, %v2110, 0
      %v2128 = vsel %vm1861, %v2111, 0
      %v2131 = vsel %vm1861, %v2112, 0
      %v2134 = vsel %vm1861, %v2113, 0
      %v2137 = vsel %vm1861, %v2114, 0
      %v2140 = vsel %vm1861, %v2115, 0
      %2142 = vmatprep.subr.mxu0 0.0
      %2143 = vmatpush1.xpose.msra.mxu0 %v2119
      %2144 = vmatprep.subr.mxu0 0.0
      %2145 = vmatpush1.xpose.msra.mxu0 %v2122
      %2146 = vmatprep.subr.mxu0 0.0
      %2147 = vmatpush1.xpose.msra.mxu0 %v2125
      %2148 = vmatprep.subr.mxu0 0.0
      %2149 = vmatpush1.xpose.msra.mxu0 %v2128
      %2150 = vmatprep.subr.mxu0 0.0
      %2151 = vmatpush1.xpose.msra.mxu0 %v2131
      %2152 = vmatprep.subr.mxu0 0.0
      %2153 = vmatpush1.xpose.msra.mxu0 %v2134
      %2154 = vmatprep.subr.mxu0 0.0
      %2155 = vmatpush1.xpose.msra.mxu0 %v2137
      %2156 = vmatprep.subr.mxu0 0.0
      %2157 = vmatpush1.xpose.msra.mxu0 %v2140
      %2158 = vmatprep.subr.mxu0 0.0
      %2159 = vmatpush1.xpose.msra.mxu0 0.0
      %2160 = vmatprep.subr.mxu0 0.0
      %2161 = vmatpush1.xpose.msra.mxu0 0.0
      %2162 = vmatprep.subr.mxu0 0.0
      %2163 = vmatpush1.xpose.msra.mxu0 0.0
      %2164 = vmatprep.subr.mxu0 0.0
      %2165 = vmatpush1.xpose.msra.mxu0 0.0
      %2166 = vmatprep.subr.mxu0 0.0
      %2167 = vmatpush1.xpose.msra.mxu0 0.0
      %2168 = vmatprep.subr.mxu0 0.0
      %2169 = vmatpush1.xpose.msra.mxu0 0.0
      %2170 = vmatprep.subr.mxu0 0.0
      %2171 = vmatpush1.xpose.msra.mxu0 0.0
      %2172 = vmatprep.subr.mxu0 0.0
      %2173 = vmatpush1.xpose.msra.mxu0 0.0
      %2174 = vmatprep.subr.mxu0 0.0
      %2175 = vmatpush1.xpose.msra.mxu0 0.0
      %2176 = vmatprep.subr.mxu0 0.0
      %2177 = vmatpush1.xpose.msra.mxu0 0.0
      %2178 = vmatprep.subr.mxu0 0.0
      %2179 = vmatpush1.xpose.msra.mxu0 0.0
      %2180 = vmatprep.subr.mxu0 0.0
      %2181 = vmatpush1.xpose.msra.mxu0 0.0
      %2182 = vmatprep.subr.mxu0 0.0
      %2183 = vmatpush1.xpose.msra.mxu0 0.0
      %2184 = vmatprep.subr.mxu0 0.0
      %2185 = vmatpush1.xpose.msra.mxu0 0.0
      %2186 = vmatprep.subr.mxu0 0.0
      %2187 = vmatpush1.xpose.msra.mxu0 0.0
      %2188 = vmatprep.subr.mxu0 0.0
      %2189 = vmatpush1.xpose.msra.mxu0 0.0
      %2190 = vmatprep.subr.mxu0 0.0
      %2191 = vmatpush1.xpose.msra.mxu0 0.0
      %2192 = vmatprep.subr.mxu0 0.0
      %2193 = vmatpush1.xpose.msra.mxu0 0.0
      %2194 = vmatprep.subr.mxu0 0.0
      %2195 = vmatpush1.xpose.msra.mxu0 0.0
      %2196 = vmatprep.subr.mxu0 0.0
      %2197 = vmatpush1.xpose.msra.mxu0 0.0
      %2198 = vmatprep.subr.mxu0 0.0
      %2199 = vmatpush1.xpose.msra.mxu0 0.0
      %2200 = vmatprep.subr.mxu0 0.0
      %2201 = vmatpush1.xpose.msra.mxu0 0.0
      %2202 = vmatprep.subr.mxu0 0.0
      %2203 = vmatpush1.xpose.msra.mxu0 0.0
      %2204 = vmatprep.subr.mxu0 0.0
      %2205 = vmatpush1.xpose.msra.mxu0 0.0
      %2206 = vmatprep.mubr.f32.mxu0 0.0
      %2207 = vmatmul.mubr.f32.gmra.mrb[0].mxu0 %v2116
      %v2208 = vpop.f32.mrb[0].mxu0
      %v2209 = vadd.f32 0.0, %v2208
      %v2210 = vpop.f32.mrb[0].mxu0
      %2211 = vdwg.mxu0
      %v2212 = vld [vmem:[%s4] sm:$0xf]
      %v2214 = vsel %vm1728, %v2212, 0
      %v2217 = vsel %vm1566, %v2209, 0
      %2219 = vmatprep.subr.mxu0 0.0
      %2220 = vmatpush1.msra.mxu0 %v2217
      %2221 = vmatprep.subr.mxu0 0.0
      %2222 = vmatpush1.msra.mxu0 0.0
      %2223 = vmatprep.subr.mxu0 0.0
      %2224 = vmatpush1.msra.mxu0 0.0
      %2225 = vmatprep.subr.mxu0 0.0
      %2226 = vmatpush1.msra.mxu0 0.0
      %2227 = vmatprep.subr.mxu0 0.0
      %2228 = vmatpush1.msra.mxu0 0.0
      %2229 = vmatprep.subr.mxu0 0.0
      %2230 = vmatpush1.msra.mxu0 0.0
      %2231 = vmatprep.subr.mxu0 0.0
      %2232 = vmatpush1.msra.mxu0 0.0
      %2233 = vmatprep.subr.mxu0 0.0
      %2234 = vmatpush1.msra.mxu0 0.0
      %2235 = vmatprep.subr.mxu0 0.0
      %2236 = vmatpush1.msra.mxu0 0.0
      %2237 = vmatprep.subr.mxu0 0.0
      %2238 = vmatpush1.msra.mxu0 0.0
      %2239 = vmatprep.subr.mxu0 0.0
      %2240 = vmatpush1.msra.mxu0 0.0
      %2241 = vmatprep.subr.mxu0 0.0
      %2242 = vmatpush1.msra.mxu0 0.0
      %2243 = vmatprep.subr.mxu0 0.0
      %2244 = vmatpush1.msra.mxu0 0.0
      %2245 = vmatprep.subr.mxu0 0.0
      %2246 = vmatpush1.msra.mxu0 0.0
      %2247 = vmatprep.subr.mxu0 0.0
      %2248 = vmatpush1.msra.mxu0 0.0
      %2249 = vmatprep.subr.mxu0 0.0
      %2250 = vmatpush1.msra.mxu0 0.0
      %2251 = vmatprep.subr.mxu0 0.0
      %2252 = vmatpush1.msra.mxu0 0.0
      %2253 = vmatprep.subr.mxu0 0.0
      %2254 = vmatpush1.msra.mxu0 0.0
      %2255 = vmatprep.subr.mxu0 0.0
      %2256 = vmatpush1.msra.mxu0 0.0
      %2257 = vmatprep.subr.mxu0 0.0
      %2258 = vmatpush1.msra.mxu0 0.0
      %2259 = vmatprep.subr.mxu0 0.0
      %2260 = vmatpush1.msra.mxu0 0.0
      %2261 = vmatprep.subr.mxu0 0.0
      %2262 = vmatpush1.msra.mxu0 0.0
      %2263 = vmatprep.subr.mxu0 0.0
      %2264 = vmatpush1.msra.mxu0 0.0
      %2265 = vmatprep.subr.mxu0 0.0
      %2266 = vmatpush1.msra.mxu0 0.0
      %2267 = vmatprep.subr.mxu0 0.0
      %2268 = vmatpush1.msra.mxu0 0.0
      %2269 = vmatprep.subr.mxu0 0.0
      %2270 = vmatpush1.msra.mxu0 0.0
      %2271 = vmatprep.subr.mxu0 0.0
      %2272 = vmatpush1.msra.mxu0 0.0
      %2273 = vmatprep.subr.mxu0 0.0
      %2274 = vmatpush1.msra.mxu0 0.0
      %2275 = vmatprep.subr.mxu0 0.0
      %2276 = vmatpush1.msra.mxu0 0.0
      %2277 = vmatprep.subr.mxu0 0.0
      %2278 = vmatpush1.msra.mxu0 0.0
      %2279 = vmatprep.subr.mxu0 0.0
      %2280 = vmatpush1.msra.mxu0 0.0
      %2281 = vmatprep.subr.mxu0 0.0
      %2282 = vmatpush1.msra.mxu0 0.0
      %2283 = vmatprep.mubr.f32.mxu0 0.0
      %2284 = vmatmul.mubr.f32.gmra.mrb[0].mxu0 %v2214
      %v2285 = vpop.f32.mrb[0].mxu0
      %v2286 = vadd.f32 0.0, %v2285
      %v2287 = vpop.f32.mrb[0].mxu0
      %2288 = vdwg.mxu0
      %v2289 = vmax.f32 %v2286, 0.0
      %v2291 = vsel %vm1861, %v2289, 0
      %2293 = vmatprep.subr.mxu0 0.0
      %2294 = vmatpush1.xpose.msra.mxu0 %v2119
      %2295 = vmatprep.subr.mxu0 0.0
      %2296 = vmatpush1.xpose.msra.mxu0 %v2122
      %2297 = vmatprep.subr.mxu0 0.0
      %2298 = vmatpush1.xpose.msra.mxu0 %v2125
      %2299 = vmatprep.subr.mxu0 0.0
      %2300 = vmatpush1.xpose.msra.mxu0 %v2128
      %2301 = vmatprep.subr.mxu0 0.0
      %2302 = vmatpush1.xpose.msra.mxu0 %v2131
      %2303 = vmatprep.subr.mxu0 0.0
      %2304 = vmatpush1.xpose.msra.mxu0 %v2134
      %2305 = vmatprep.subr.mxu0 0.0
      %2306 = vmatpush1.xpose.msra.mxu0 %v2137
      %2307 = vmatprep.subr.mxu0 0.0
      %2308 = vmatpush1.xpose.msra.mxu0 %v2140
      %2309 = vmatprep.subr.mxu0 0.0
      %2310 = vmatpush1.xpose.msra.mxu0 0.0
      %2311 = vmatprep.subr.mxu0 0.0
      %2312 = vmatpush1.xpose.msra.mxu0 0.0
      %2313 = vmatprep.subr.mxu0 0.0
      %2314 = vmatpush1.xpose.msra.mxu0 0.0
      %2315 = vmatprep.subr.mxu0 0.0
      %2316 = vmatpush1.xpose.msra.mxu0 0.0
      %2317 = vmatprep.subr.mxu0 0.0
      %2318 = vmatpush1.xpose.msra.mxu0 0.0
      %2319 = vmatprep.subr.mxu0 0.0
      %2320 = vmatpush1.xpose.msra.mxu0 0.0
      %2321 = vmatprep.subr.mxu0 0.0
      %2322 = vmatpush1.xpose.msra.mxu0 0.0
      %2323 = vmatprep.subr.mxu0 0.0
      %2324 = vmatpush1.xpose.msra.mxu0 0.0
      %2325 = vmatprep.subr.mxu0 0.0
      %2326 = vmatpush1.xpose.msra.mxu0 0.0
      %2327 = vmatprep.subr.mxu0 0.0
      %2328 = vmatpush1.xpose.msra.mxu0 0.0
      %2329 = vmatprep.subr.mxu0 0.0
      %2330 = vmatpush1.xpose.msra.mxu0 0.0
      %2331 = vmatprep.subr.mxu0 0.0
      %2332 = vmatpush1.xpose.msra.mxu0 0.0
      %2333 = vmatprep.subr.mxu0 0.0
      %2334 = vmatpush1.xpose.msra.mxu0 0.0
      %2335 = vmatprep.subr.mxu0 0.0
      %2336 = vmatpush1.xpose.msra.mxu0 0.0
      %2337 = vmatprep.subr.mxu0 0.0
      %2338 = vmatpush1.xpose.msra.mxu0 0.0
      %2339 = vmatprep.subr.mxu0 0.0
      %2340 = vmatpush1.xpose.msra.mxu0 0.0
      %2341 = vmatprep.subr.mxu0 0.0
      %2342 = vmatpush1.xpose.msra.mxu0 0.0
      %2343 = vmatprep.subr.mxu0 0.0
      %2344 = vmatpush1.xpose.msra.mxu0 0.0
      %2345 = vmatprep.subr.mxu0 0.0
      %2346 = vmatpush1.xpose.msra.mxu0 0.0
      %2347 = vmatprep.subr.mxu0 0.0
      %2348 = vmatpush1.xpose.msra.mxu0 0.0
      %2349 = vmatprep.subr.mxu0 0.0
      %2350 = vmatpush1.xpose.msra.mxu0 0.0
      %2351 = vmatprep.subr.mxu0 0.0
      %2352 = vmatpush1.xpose.msra.mxu0 0.0
      %2353 = vmatprep.subr.mxu0 0.0
      %2354 = vmatpush1.xpose.msra.mxu0 0.0
      %2355 = vmatprep.subr.mxu0 0.0
      %2356 = vmatpush1.xpose.msra.mxu0 0.0
      %2357 = vmatprep.mubr.f32.mxu0 0.0
      %2358 = vmatmul.mubr.f32.gmra.mrb[0].mxu0 %v2291
      %v2359 = vpop.f32.mrb[0].mxu0
      %v2360 = vadd.f32 0.0, %v2359
      %v2361 = vpop.f32.mrb[0].mxu0
      %2362 = vdwg.mxu0
      %s2363 = scalar_lea.vmem %s4, 4
      %v2364 = vld [vmem:[%s2363] sm:$0xf]
      %v2366 = vsel %vm1728, %v2364, 0
      %v2369 = vsel %vm1566, %v2360, 0
      %2371 = vmatprep.subr.mxu0 0.0
      %2372 = vmatpush1.msra.mxu0 %v2369
      %2373 = vmatprep.subr.mxu0 0.0
      %2374 = vmatpush1.msra.mxu0 0.0
      %2375 = vmatprep.subr.mxu0 0.0
      %2376 = vmatpush1.msra.mxu0 0.0
      %2377 = vmatprep.subr.mxu0 0.0
      %2378 = vmatpush1.msra.mxu0 0.0
      %2379 = vmatprep.subr.mxu0 0.0
      %2380 = vmatpush1.msra.mxu0 0.0
      %2381 = vmatprep.subr.mxu0 0.0
      %2382 = vmatpush1.msra.mxu0 0.0
      %2383 = vmatprep.subr.mxu0 0.0
      %2384 = vmatpush1.msra.mxu0 0.0
      %2385 = vmatprep.subr.mxu0 0.0
      %2386 = vmatpush1.msra.mxu0 0.0
      %2387 = vmatprep.subr.mxu0 0.0
      %2388 = vmatpush1.msra.mxu0 0.0
      %2389 = vmatprep.subr.mxu0 0.0
      %2390 = vmatpush1.msra.mxu0 0.0
      %2391 = vmatprep.subr.mxu0 0.0
      %2392 = vmatpush1.msra.mxu0 0.0
      %2393 = vmatprep.subr.mxu0 0.0
      %2394 = vmatpush1.msra.mxu0 0.0
      %2395 = vmatprep.subr.mxu0 0.0
      %2396 = vmatpush1.msra.mxu0 0.0
      %2397 = vmatprep.subr.mxu0 0.0
      %2398 = vmatpush1.msra.mxu0 0.0
      %2399 = vmatprep.subr.mxu0 0.0
      %2400 = vmatpush1.msra.mxu0 0.0
      %2401 = vmatprep.subr.mxu0 0.0
      %2402 = vmatpush1.msra.mxu0 0.0
      %2403 = vmatprep.subr.mxu0 0.0
      %2404 = vmatpush1.msra.mxu0 0.0
      %2405 = vmatprep.subr.mxu0 0.0
      %2406 = vmatpush1.msra.mxu0 0.0
      %2407 = vmatprep.subr.mxu0 0.0
      %2408 = vmatpush1.msra.mxu0 0.0
      %2409 = vmatprep.subr.mxu0 0.0
      %2410 = vmatpush1.msra.mxu0 0.0
      %2411 = vmatprep.subr.mxu0 0.0
      %2412 = vmatpush1.msra.mxu0 0.0
      %2413 = vmatprep.subr.mxu0 0.0
      %2414 = vmatpush1.msra.mxu0 0.0
      %2415 = vmatprep.subr.mxu0 0.0
      %2416 = vmatpush1.msra.mxu0 0.0
      %2417 = vmatprep.subr.mxu0 0.0
      %2418 = vmatpush1.msra.mxu0 0.0
      %2419 = vmatprep.subr.mxu0 0.0
      %2420 = vmatpush1.msra.mxu0 0.0
      %2421 = vmatprep.subr.mxu0 0.0
      %2422 = vmatpush1.msra.mxu0 0.0
      %2423 = vmatprep.subr.mxu0 0.0
      %2424 = vmatpush1.msra.mxu0 0.0
      %2425 = vmatprep.subr.mxu0 0.0
      %2426 = vmatpush1.msra.mxu0 0.0
      %2427 = vmatprep.subr.mxu0 0.0
      %2428 = vmatpush1.msra.mxu0 0.0
      %2429 = vmatprep.subr.mxu0 0.0
      %2430 = vmatpush1.msra.mxu0 0.0
      %2431 = vmatprep.subr.mxu0 0.0
      %2432 = vmatpush1.msra.mxu0 0.0
      %2433 = vmatprep.subr.mxu0 0.0
      %2434 = vmatpush1.msra.mxu0 0.0
      %2435 = vmatprep.mubr.f32.mxu0 0.0
      %2436 = vmatmul.mubr.f32.gmra.mrb[0].mxu0 %v2366
      %v2437 = vpop.f32.mrb[0].mxu0
      %v2438 = vadd.f32 0.0, %v2437
      %v2439 = vpop.f32.mrb[0].mxu0
      %2440 = vdwg.mxu0
      %v2441 = vmax.f32 %v2438, 0.0
      %v2443 = vsel %vm1861, %v2441, 0
      %2445 = vmatprep.subr.mxu0 0.0
      %2446 = vmatpush1.xpose.msra.mxu0 %v2119
      %2447 = vmatprep.subr.mxu0 0.0
      %2448 = vmatpush1.xpose.msra.mxu0 %v2122
      %2449 = vmatprep.subr.mxu0 0.0
      %2450 = vmatpush1.xpose.msra.mxu0 %v2125
      %2451 = vmatprep.subr.mxu0 0.0
      %2452 = vmatpush1.xpose.msra.mxu0 %v2128
      %2453 = vmatprep.subr.mxu0 0.0
      %2454 = vmatpush1.xpose.msra.mxu0 %v2131
      %2455 = vmatprep.subr.mxu0 0.0
      %2456 = vmatpush1.xpose.msra.mxu0 %v2134
      %2457 = vmatprep.subr.mxu0 0.0
      %2458 = vmatpush1.xpose.msra.mxu0 %v2137
      %2459 = vmatprep.subr.mxu0 0.0
      %2460 = vmatpush1.xpose.msra.mxu0 %v2140
      %2461 = vmatprep.subr.mxu0 0.0
      %2462 = vmatpush1.xpose.msra.mxu0 0.0
      %2463 = vmatprep.subr.mxu0 0.0
      %2464 = vmatpush1.xpose.msra.mxu0 0.0
      %2465 = vmatprep.subr.mxu0 0.0
      %2466 = vmatpush1.xpose.msra.mxu0 0.0
      %2467 = vmatprep.subr.mxu0 0.0
      %2468 = vmatpush1.xpose.msra.mxu0 0.0
      %2469 = vmatprep.subr.mxu0 0.0
      %2470 = vmatpush1.xpose.msra.mxu0 0.0
      %2471 = vmatprep.subr.mxu0 0.0
      %2472 = vmatpush1.xpose.msra.mxu0 0.0
      %2473 = vmatprep.subr.mxu0 0.0
      %2474 = vmatpush1.xpose.msra.mxu0 0.0
      %2475 = vmatprep.subr.mxu0 0.0
      %2476 = vmatpush1.xpose.msra.mxu0 0.0
      %2477 = vmatprep.subr.mxu0 0.0
      %2478 = vmatpush1.xpose.msra.mxu0 0.0
      %2479 = vmatprep.subr.mxu0 0.0
      %2480 = vmatpush1.xpose.msra.mxu0 0.0
      %2481 = vmatprep.subr.mxu0 0.0
      %2482 = vmatpush1.xpose.msra.mxu0 0.0
      %2483 = vmatprep.subr.mxu0 0.0
      %2484 = vmatpush1.xpose.msra.mxu0 0.0
      %2485 = vmatprep.subr.mxu0 0.0
      %2486 = vmatpush1.xpose.msra.mxu0 0.0
      %2487 = vmatprep.subr.mxu0 0.0
      %2488 = vmatpush1.xpose.msra.mxu0 0.0
      %2489 = vmatprep.subr.mxu0 0.0
      %2490 = vmatpush1.xpose.msra.mxu0 0.0
      %2491 = vmatprep.subr.mxu0 0.0
      %2492 = vmatpush1.xpose.msra.mxu0 0.0
      %2493 = vmatprep.subr.mxu0 0.0
      %2494 = vmatpush1.xpose.msra.mxu0 0.0
      %2495 = vmatprep.subr.mxu0 0.0
      %2496 = vmatpush1.xpose.msra.mxu0 0.0
      %2497 = vmatprep.subr.mxu0 0.0
      %2498 = vmatpush1.xpose.msra.mxu0 0.0
      %2499 = vmatprep.subr.mxu0 0.0
      %2500 = vmatpush1.xpose.msra.mxu0 0.0
      %2501 = vmatprep.subr.mxu0 0.0
      %2502 = vmatpush1.xpose.msra.mxu0 0.0
      %2503 = vmatprep.subr.mxu0 0.0
      %2504 = vmatpush1.xpose.msra.mxu0 0.0
      %2505 = vmatprep.subr.mxu0 0.0
      %2506 = vmatpush1.xpose.msra.mxu0 0.0
      %2507 = vmatprep.subr.mxu0 0.0
      %2508 = vmatpush1.xpose.msra.mxu0 0.0
      %2509 = vmatprep.mubr.f32.mxu0 0.0
      %2510 = vmatmul.mubr.f32.gmra.mrb[0].mxu0 %v2443
      %v2511 = vpop.f32.mrb[0].mxu0
      %v2512 = vadd.f32 0.0, %v2511
      %v2513 = vpop.f32.mrb[0].mxu0
      %2514 = vdwg.mxu0
      %s2515 = scalar_lea.vmem %s4, 8
      %v2516 = vld [vmem:[%s2515] sm:$0xf]
      %v2518 = vsel %vm1728, %v2516, 0
      %v2521 = vsel %vm1566, %v2512, 0
      %2523 = vmatprep.subr.mxu0 0.0
      %2524 = vmatpush1.msra.mxu0 %v2521
      %2525 = vmatprep.subr.mxu0 0.0
      %2526 = vmatpush1.msra.mxu0 0.0
      %2527 = vmatprep.subr.mxu0 0.0
      %2528 = vmatpush1.msra.mxu0 0.0
      %2529 = vmatprep.subr.mxu0 0.0
      %2530 = vmatpush1.msra.mxu0 0.0
      %2531 = vmatprep.subr.mxu0 0.0
      %2532 = vmatpush1.msra.mxu0 0.0
      %2533 = vmatprep.subr.mxu0 0.0
      %2534 = vmatpush1.msra.mxu0 0.0
      %2535 = vmatprep.subr.mxu0 0.0
      %2536 = vmatpush1.msra.mxu0 0.0
      %2537 = vmatprep.subr.mxu0 0.0
      %2538 = vmatpush1.msra.mxu0 0.0
      %2539 = vmatprep.subr.mxu0 0.0
      %2540 = vmatpush1.msra.mxu0 0.0
      %2541 = vmatprep.subr.mxu0 0.0
      %2542 = vmatpush1.msra.mxu0 0.0
      %2543 = vmatprep.subr.mxu0 0.0
      %2544 = vmatpush1.msra.mxu0 0.0
      %2545 = vmatprep.subr.mxu0 0.0
      %2546 = vmatpush1.msra.mxu0 0.0
      %2547 = vmatprep.subr.mxu0 0.0
      %2548 = vmatpush1.msra.mxu0 0.0
      %2549 = vmatprep.subr.mxu0 0.0
      %2550 = vmatpush1.msra.mxu0 0.0
      %2551 = vmatprep.subr.mxu0 0.0
      %2552 = vmatpush1.msra.mxu0 0.0
      %2553 = vmatprep.subr.mxu0 0.0
      %2554 = vmatpush1.msra.mxu0 0.0
      %2555 = vmatprep.subr.mxu0 0.0
      %2556 = vmatpush1.msra.mxu0 0.0
      %2557 = vmatprep.subr.mxu0 0.0
      %2558 = vmatpush1.msra.mxu0 0.0
      %2559 = vmatprep.subr.mxu0 0.0
      %2560 = vmatpush1.msra.mxu0 0.0
      %2561 = vmatprep.subr.mxu0 0.0
      %2562 = vmatpush1.msra.mxu0 0.0
      %2563 = vmatprep.subr.mxu0 0.0
      %2564 = vmatpush1.msra.mxu0 0.0
      %2565 = vmatprep.subr.mxu0 0.0
      %2566 = vmatpush1.msra.mxu0 0.0
      %2567 = vmatprep.subr.mxu0 0.0
      %2568 = vmatpush1.msra.mxu0 0.0
      %2569 = vmatprep.subr.mxu0 0.0
      %2570 = vmatpush1.msra.mxu0 0.0
      %2571 = vmatprep.subr.mxu0 0.0
      %2572 = vmatpush1.msra.mxu0 0.0
      %2573 = vmatprep.subr.mxu0 0.0
      %2574 = vmatpush1.msra.mxu0 0.0
      %2575 = vmatprep.subr.mxu0 0.0
      %2576 = vmatpush1.msra.mxu0 0.0
      %2577 = vmatprep.subr.mxu0 0.0
      %2578 = vmatpush1.msra.mxu0 0.0
      %2579 = vmatprep.subr.mxu0 0.0
      %2580 = vmatpush1.msra.mxu0 0.0
      %2581 = vmatprep.subr.mxu0 0.0
      %2582 = vmatpush1.msra.mxu0 0.0
      %2583 = vmatprep.subr.mxu0 0.0
      %2584 = vmatpush1.msra.mxu0 0.0
      %2585 = vmatprep.subr.mxu0 0.0
      %2586 = vmatpush1.msra.mxu0 0.0
      %2587 = vmatprep.mubr.f32.mxu0 0.0
      %2588 = vmatmul.mubr.f32.gmra.mrb[0].mxu0 %v2518
      %v2589 = vpop.f32.mrb[0].mxu0
      %v2590 = vadd.f32 0.0, %v2589
      %v2591 = vpop.f32.mrb[0].mxu0
      %2592 = vdwg.mxu0
      %v2593 = vld [vmem:[%s5] sm:$0xff]
      %v2594 = vld [vmem:[%s5 + $0x8] sm:$0xff]
      %v2595 = vld [vmem:[%s5 + $0x10] sm:$0xff]
      %v2596 = vld [vmem:[%s5 + $0x18] sm:$0xff]
      %v2597 = vld [vmem:[%s5 + $0x20] sm:$0xff]
      %v2598 = vld [vmem:[%s5 + $0x28] sm:$0xff]
      %v2599 = vld [vmem:[%s5 + $0x30] sm:$0xff]
      %v2600 = vld [vmem:[%s5 + $0x38] sm:$0xff]
      %v2601 = vld [vmem:[%s5 + $0x40] sm:$0xff]
      %v2602 = vld [vmem:[%s5 + $0x48] sm:$0xff]
      %v2603 = vld [vmem:[%s5 + $0x50] sm:$0xff]
      %v2604 = vld [vmem:[%s5 + $0x58] sm:$0xff]
      %v2605 = vld [vmem:[%s5 + $0x60] sm:$0xff]
      %v2606 = vld [vmem:[%s5 + $0x68] sm:$0xff]
      %v2607 = vld [vmem:[%s5 + $0x70] sm:$0xff]
      %v2608 = vld [vmem:[%s5 + $0x78] sm:$0xff]
      %v2610 = vsel %vm1861, %v2590, 0
      %2612 = vmatprep.subr.mxu0 %v2594
      %2613 = vmatpush1.msra.mxu0 %v2593
      %2614 = vmatprep.subr.mxu0 %v2596
      %2615 = vmatpush1.msra.mxu0 %v2595
      %2616 = vmatprep.subr.mxu0 %v2598
      %2617 = vmatpush1.msra.mxu0 %v2597
      %2618 = vmatprep.subr.mxu0 %v2600
      %2619 = vmatpush1.msra.mxu0 %v2599
      %2620 = vmatprep.subr.mxu0 %v2602
      %2621 = vmatpush1.msra.mxu0 %v2601
      %2622 = vmatprep.subr.mxu0 %v2604
      %2623 = vmatpush1.msra.mxu0 %v2603
      %2624 = vmatprep.subr.mxu0 %v2606
      %2625 = vmatpush1.msra.mxu0 %v2605
      %2626 = vmatprep.subr.mxu0 %v2608
      %2627 = vmatpush1.msra.mxu0 %v2607
      %2628 = vmatprep.subr.mxu0 0.0
      %2629 = vmatpush1.msra.mxu0 0.0
      %2630 = vmatprep.subr.mxu0 0.0
      %2631 = vmatpush1.msra.mxu0 0.0
      %2632 = vmatprep.subr.mxu0 0.0
      %2633 = vmatpush1.msra.mxu0 0.0
      %2634 = vmatprep.subr.mxu0 0.0
      %2635 = vmatpush1.msra.mxu0 0.0
      %2636 = vmatprep.subr.mxu0 0.0
      %2637 = vmatpush1.msra.mxu0 0.0
      %2638 = vmatprep.subr.mxu0 0.0
      %2639 = vmatpush1.msra.mxu0 0.0
      %2640 = vmatprep.subr.mxu0 0.0
      %2641 = vmatpush1.msra.mxu0 0.0
      %2642 = vmatprep.subr.mxu0 0.0
      %2643 = vmatpush1.msra.mxu0 0.0
      %2644 = vmatprep.subr.mxu0 0.0
      %2645 = vmatpush1.msra.mxu0 0.0
      %2646 = vmatprep.subr.mxu0 0.0
      %2647 = vmatpush1.msra.mxu0 0.0
      %2648 = vmatprep.subr.mxu0 0.0
      %2649 = vmatpush1.msra.mxu0 0.0
      %2650 = vmatprep.subr.mxu0 0.0
      %2651 = vmatpush1.msra.mxu0 0.0
      %2652 = vmatprep.subr.mxu0 0.0
      %2653 = vmatpush1.msra.mxu0 0.0
      %2654 = vmatprep.subr.mxu0 0.0
      %2655 = vmatpush1.msra.mxu0 0.0
      %2656 = vmatprep.subr.mxu0 0.0
      %2657 = vmatpush1.msra.mxu0 0.0
      %2658 = vmatprep.subr.mxu0 0.0
      %2659 = vmatpush1.msra.mxu0 0.0
      %2660 = vmatprep.subr.mxu0 0.0
      %2661 = vmatpush1.msra.mxu0 0.0
      %2662 = vmatprep.subr.mxu0 0.0
      %2663 = vmatpush1.msra.mxu0 0.0
      %2664 = vmatprep.subr.mxu0 0.0
      %2665 = vmatpush1.msra.mxu0 0.0
      %2666 = vmatprep.subr.mxu0 0.0
      %2667 = vmatpush1.msra.mxu0 0.0
      %2668 = vmatprep.subr.mxu0 0.0
      %2669 = vmatpush1.msra.mxu0 0.0
      %2670 = vmatprep.subr.mxu0 0.0
      %2671 = vmatpush1.msra.mxu0 0.0
      %2672 = vmatprep.subr.mxu0 0.0
      %2673 = vmatpush1.msra.mxu0 0.0
      %2674 = vmatprep.subr.mxu0 0.0
      %2675 = vmatpush1.msra.mxu0 0.0
      %2676 = vmatprep.mubr.f32.mxu0 0.0
      %2677 = vmatmul.mubr.f32.gmra.mrb[0].mxu0 %v2610
      %v2678 = vpop.f32.mrb[0].mxu0
      %v2679 = vadd.f32 0.0, %v2678
      %v2680 = vpop.f32.mrb[0].mxu0
      %v2681 = vadd.f32 0.0, %v2680
      %2682 = vdwg.mxu0
      %v2685 = vcombine.low %v2679, %v2681
      %2687 = vst [vmem:[%s251] sm:$0xff] %v2685
      %p2688 = scmp.lt.s32.totalorder %s17, 1
      %s2689 = scalar_select %p2688, %s17, 1
      %s2690 = smul.addr %s2689, 2
      %s2691 = smul.addr %s2690, 4
      %s2692 = scalar_lea.vmem %s6, %s2691
      // Predicated region
      $region45: #{gcn_channel_forward.1} parent=43 // pred_check
        %p2693 = pneg %p166
      $region46: #{gcn_channel_forward.1} parent=43 // pred_check_branch
        %2695 = sbr.rel (%p2693) target = $region48
      $region47: #{gcn_channel_forward.1} parent=43 // pred_region
        _
      $region48: #{gcn_channel_forward.1} parent=43 // pred_fallthru
        _
    $region44: #{gcn_channel_forward.1} parent=5 // pred_fallthru
      _
    %p2696 = scmp.le.s32.totalorder 2, %s12
    // Predicated region
    $region49: #{gcn_channel_forward.1} parent=5 // pred_check
      %p2697 = pneg %p2696
    $region50: #{gcn_channel_forward.1} parent=5 // pred_check_branch
      %2699 = sbr.rel (%p2697) target = $region52
    $region51: #{gcn_channel_forward.1} parent=5 // pred_region
      %s2700 = ssub.s32 %s12, 2
      // Predicated region
      $region53: #{gcn_channel_forward.1} parent=51 // pred_check
        %p2701 = pneg %p172
      $region54: #{gcn_channel_forward.1} parent=51 // pred_check_branch
        %2703 = sbr.rel (%p2701) target = $region56
      $region55: #{gcn_channel_forward.1} parent=51 // pred_region
        %p2704 = scmp.lt.s32.totalorder %s18, 1
        %s2705 = scalar_select %p2704, %s18, 1
        %s2706 = smul.addr %s2705, 2
        %s2707 = smul.addr %s2706, 4
        %s2708 = scalar_lea.vmem %s6, %s2707
      $region56: #{gcn_channel_forward.1} parent=51 // pred_fallthru
        _
    $region52: #{gcn_channel_forward.1} parent=5 // pred_fallthru
      _
  $region6: #{gcn_channel_forward.1} parent=0 // loop_footer
    %s16 = sadd.s32 1, %s12
  $region7: #{gcn_channel_forward.1} parent=0 // loop_footer_branch
    %11 = sbr.rel target = $region3
  $region8: #{gcn_channel_forward.1} parent=0 // loop_exit
    _

</llo_original>
